<compile_context>
chip_gen: v7x
topology: tpu7x:2x2x1
jax: 0.10.0
libtpu: 0.0.40
codegen_flags: <defaults>
</compile_context>

<pallas_src>
import functools
import math

import jax
import jax.numpy as jnp
from jax.experimental import pallas as pl
from jax.experimental.pallas import tpu as pltpu


def _round_up(x, m):
    return ((x + m - 1) // m) * m


def _num_tensorcores():
    """2 on megacore parts (v7x has 2 TensorCores/chip), else 1."""
    try:
        kind = jax.devices()[0].device_kind.lower()
    except Exception:
        return 1
    return 2 if "v7" in kind else 1


def _sequential_mlp_kernel(x_ref, w1_ref, b1_ref, w2_ref, b2_ref, o_ref, *,
                           lane_chunk, h_chunk):
    """Fused forward for one batch tile (batch on the lane axis), all f32.

    x_ref  : [D_in, TB] f32      w1_ref : [H, D_in] f32
    b1_ref : [H, 1]     f32      w2_ref : [H, 1]    f32
    b2_ref : [1, 1]     f32 (SMEM scalar)
    o_ref  : [1, TB]    f32
    Computes o = tanh(w2^T @ relu(W1 @ x + b1) + b2) as a VPU rank-d_in
    update fused with the layer-2 reduction (no [H, TB] intermediate).
    """
    d_in, tb = x_ref.shape
    H = w1_ref.shape[0]
    b2 = b2_ref[0, 0]

    # Lane-chunk loop keeps the live vreg set small and independent of TB.
    for lo in range(0, tb, lane_chunk):
        # Hoisted x slices for this lane chunk: [1, LC] each.
        xs = [x_ref[d:d + 1, lo:lo + lane_chunk] for d in range(d_in)]
        acc = jnp.zeros((h_chunk, lane_chunk), jnp.float32)
        # H in 8-sublane chunks: relu(W1c @ x + b1c) * w2c accumulated on VPU.
        for ho in range(0, H, h_chunk):
            pre = b1_ref[ho:ho + h_chunk, :]                       # [hc, 1]
            for d in range(d_in):
                pre = pre + w1_ref[ho:ho + h_chunk, d:d + 1] * xs[d]
            acc = acc + jnp.maximum(pre, 0.0) * w2_ref[ho:ho + h_chunk, :]
        # One cross-sublane (XLU) reduction, scalar bias from SMEM, tanh (EUP).
        y = jnp.sum(acc, axis=0, keepdims=True) + b2               # [1, LC]
        o_ref[:, lo:lo + lane_chunk] = jnp.tanh(y).astype(o_ref.dtype)


def _forward_from_xt(x_t, w1, b1, w2, b2, *, max_block_b=32768):
    """Core: x_t is already [D_in, B] (batch on lanes). Returns [B, 1] f32."""
    d_in, B = x_t.shape
    H, d_in_w = w1.shape
    assert d_in_w == d_in
    d_out = w2.shape[0]
    assert d_out == 1, "kernel is specialized to the Linear(128, 1) head"

    h_chunk = 8 if H % 8 == 0 else H

    # Tile count: 1 on single-TC chips, 2 on v7x (one tile per TensorCore).
    num_tiles = _num_tensorcores()
    num_tiles = min(num_tiles, max(1, -(-B // 128)))
    Bp = _round_up(B, 128 * num_tiles)
    tb = Bp // num_tiles
    if tb > max_block_b:                      # sanity cap for very large B
        tb = _round_up(max_block_b, 128)
        Bp = _round_up(B, tb)
        num_tiles = Bp // tb

    x_t = x_t.astype(jnp.float32)
    if Bp != B:
        # Pad batch so every tile is lane-aligned and stores stay unmasked.
        x_t = jnp.pad(x_t, ((0, 0), (0, Bp - B)))

    # In-kernel lane chunk: biggest power-of-two <= 512 dividing tb.
    lane_chunk = 512
    while tb % lane_chunk != 0:
        lane_chunk //= 2

    w1_f = w1.astype(jnp.float32)                      # [H, D_in]
    b1_col = b1.reshape(H, 1).astype(jnp.float32)      # per-sublane bias column
    w2_col = w2.reshape(H, 1).astype(jnp.float32)      # layer-2 weight column
    b2_s = b2.reshape(1, 1).astype(jnp.float32)        # scalar -> SMEM

    cost = pl.CostEstimate(
        flops=2 * Bp * H * (d_in + 1),
        transcendentals=Bp,                            # tanh per output
        bytes_accessed=4 * (Bp * d_in + H * d_in + 2 * H + 1 + Bp),
    )

    kernel = functools.partial(_sequential_mlp_kernel,
                               lane_chunk=lane_chunk, h_chunk=h_chunk)

    out_1b = pl.pallas_call(
        kernel,
        out_shape=jax.ShapeDtypeStruct((1, Bp), jnp.float32),
        grid=(num_tiles,),
        in_specs=[
            # x^T: tiled over batch (lane axis), double-buffered by Pallas.
            pl.BlockSpec((d_in, tb), lambda i: (0, i)),
            # Weights/biases: constant block index -> resident across steps.
            pl.BlockSpec((H, d_in), lambda i: (0, 0)),
            pl.BlockSpec((H, 1), lambda i: (0, 0)),
            pl.BlockSpec((H, 1), lambda i: (0, 0)),
            # Scalar bias in SMEM (no padded VMEM tile for one value).
            pl.BlockSpec((1, 1), lambda i: (0, 0),
                         memory_space=pltpu.MemorySpace.SMEM),
        ],
        out_specs=pl.BlockSpec((1, tb), lambda i: (0, i)),
        compiler_params=pltpu.CompilerParams(
            # Independent batch tiles: shards across v7x's 2 TensorCores;
            # grid is a single step on single-TC parts.
            dimension_semantics=("parallel",),
        ),
        cost_estimate=cost,
    )(x_t, w1_f, b1_col, w2_col, b2_s)

    # (1, B) and (B, 1) share the same row-major layout -> cheap reshape.
    return out_1b[:, :B].reshape(B, d_out)


@jax.jit
def sequential_forward_t(x_t, w1, b1, w2, b2):
    """Forward pass taking x already in [D_in, B] layout (no wrapper transpose)."""
    return _forward_from_xt(x_t, w1, b1, w2, b2)


@jax.jit
def sequential_forward(x, w1, b1, w2, b2):
    """tanh(relu(x @ W1^T + b1) @ W2^T + b2), module-facing layout.

    x  : [B, D_in]            (like the torch Sequential input)
    w1 : [H, D_in], b1 : [H]  (PyTorch Linear layout: weight = [out, in])
    w2 : [1, H],    b2 : [1]
    returns [B, 1] float32

    The f32 transpose to [D_in, B] is the only wrapper-side data-movement op
    (16 KB here); callers that already hold x^T should use sequential_forward_t.
    """
    return _forward_from_xt(x.T, w1, b1, w2, b2)


def _init_linear_params(key, fan_in, fan_out):
    """PyTorch-style Linear init: U(-1/sqrt(fan_in), 1/sqrt(fan_in))."""
    kw, kb = jax.random.split(key)
    bound = 1.0 / math.sqrt(fan_in)
    w = jax.random.uniform(kw, (fan_out, fan_in), jnp.float32, -bound, bound)
    b = jax.random.uniform(kb, (fan_out,), jnp.float32, -bound, bound)
    return w, b


def _reference_forward(x, w1, b1, w2, b2):
    """Pure-JAX f32 reference of the Sequential chain."""
    h = jnp.maximum(x @ w1.T + b1[None, :], 0.0)
    return jnp.tanh(h @ w2.T + b2[None, :])


if __name__ == "__main__":
    # Sequential(Linear(2, 128), ReLU(), Linear(128, 1), Tanh())
    B, D_IN, H, D_OUT = 2048, 2, 128, 1

    root = jax.random.PRNGKey(0)
    k_x, k_x2, k_l1, k_l2 = jax.random.split(root, 4)

    x = jax.random.normal(k_x, (B, D_IN), jnp.float32)
    w1, b1 = _init_linear_params(k_l1, D_IN, H)
    w2, b2 = _init_linear_params(k_l2, H, D_OUT)

    out = jax.block_until_ready(sequential_forward(x, w1, b1, w2, b2))
    assert out.shape == (B, D_OUT)

    # All-f32 kernel -> tight tolerance against the f32 reference.
    ref = _reference_forward(x, w1, b1, w2, b2)
    assert jnp.allclose(out, ref, atol=1e-4, rtol=1e-4), \
        "mismatch vs f32 JAX reference"

    # Non-lane-aligned batch exercises the wrapper padding path.
    B2 = 200
    x2 = jax.random.normal(k_x2, (B2, D_IN), jnp.float32)
    out2 = jax.block_until_ready(sequential_forward(x2, w1, b1, w2, b2))
    assert out2.shape == (B2, D_OUT)
    ref2 = _reference_forward(x2, w1, b1, w2, b2)
    assert jnp.allclose(out2, ref2, atol=1e-4, rtol=1e-4), \
        "mismatch vs f32 JAX reference (padded batch)"

    print("KERNEL_OK")
</pallas_src>

<mosaic_0001>
module attributes {stable_mosaic.version = 11 : i64} {
  func.func @_sequential_mlp_kernel(%arg0: i32, %arg1: memref<2x2048xf32, #tpu.memory_space<vmem>>, %arg2: memref<128x2xf32, #tpu.memory_space<vmem>>, %arg3: memref<128x1xf32, #tpu.memory_space<vmem>>, %arg4: memref<128x1xf32, #tpu.memory_space<vmem>>, %arg5: memref<1x1xf32, #tpu.memory_space<smem>>, %arg6: memref<1x2048xf32, #tpu.memory_space<vmem>>) attributes {dimension_semantics = [#tpu.dimension_semantics<parallel>], iteration_bounds = array<i64: 1>, scalar_prefetch = 0 : i64, scratch_operands = 0 : i64, tpu.core_type = #tpu.core_type<tc>, window_params = [{transform_indices = @transform_0, window_bounds = array<i64: 2, 2048>}, {pipeline_mode = #tpu.pipeline_mode<synchronous>, transform_indices = @transform_1, window_bounds = array<i64: 128, 2>}, {pipeline_mode = #tpu.pipeline_mode<synchronous>, transform_indices = @transform_2, window_bounds = array<i64: 128, 1>}, {pipeline_mode = #tpu.pipeline_mode<synchronous>, transform_indices = @transform_3, window_bounds = array<i64: 128, 1>}, {transform_indices = @transform_4, window_bounds = array<i64: 1, 1>}, {transform_indices = @transform_5, window_bounds = array<i64: 1, 2048>}]} {
    %c0 = arith.constant 0 : index
    %c0_0 = arith.constant 0 : index
    %0 = memref.load %arg5[%c0, %c0_0] : memref<1x1xf32, #tpu.memory_space<smem>>
    %c0_1 = arith.constant 0 : index
    %c0_2 = arith.constant 0 : index
    %1 = vector.load %arg1[%c0_1, %c0_2] : memref<2x2048xf32, #tpu.memory_space<vmem>>, vector<1x512xf32>
    %c1 = arith.constant 1 : index
    %c0_3 = arith.constant 0 : index
    %2 = vector.load %arg1[%c1, %c0_3] : memref<2x2048xf32, #tpu.memory_space<vmem>>, vector<1x512xf32>
    %cst = arith.constant 0.000000e+00 : f32
    %3 = vector.broadcast %cst : f32 to vector<8x512xf32>
    %c0_4 = arith.constant 0 : index
    %c0_5 = arith.constant 0 : index
    %4 = vector.load %arg3[%c0_4, %c0_5] : memref<128x1xf32, #tpu.memory_space<vmem>>, vector<8x1xf32>
    %c0_6 = arith.constant 0 : index
    %c0_7 = arith.constant 0 : index
    %5 = vector.load %arg2[%c0_6, %c0_7] : memref<128x2xf32, #tpu.memory_space<vmem>>, vector<8x1xf32>
    %6 = vector.broadcast %5 : vector<8x1xf32> to vector<8x512xf32>
    %7 = vector.broadcast %1 : vector<1x512xf32> to vector<8x512xf32>
    %8 = arith.mulf %6, %7 : vector<8x512xf32>
    %9 = vector.broadcast %4 : vector<8x1xf32> to vector<8x512xf32>
    %10 = arith.addf %9, %8 : vector<8x512xf32>
    %c0_8 = arith.constant 0 : index
    %c1_9 = arith.constant 1 : index
    %11 = vector.load %arg2[%c0_8, %c1_9] : memref<128x2xf32, #tpu.memory_space<vmem>>, vector<8x1xf32>
    %12 = vector.broadcast %11 : vector<8x1xf32> to vector<8x512xf32>
    %13 = vector.broadcast %2 : vector<1x512xf32> to vector<8x512xf32>
    %14 = arith.mulf %12, %13 : vector<8x512xf32>
    %15 = arith.addf %10, %14 : vector<8x512xf32>
    %cst_10 = arith.constant 0.000000e+00 : f32
    %16 = vector.broadcast %cst_10 : f32 to vector<8x512xf32>
    %17 = arith.maximumf %15, %16 : vector<8x512xf32>
    %c0_11 = arith.constant 0 : index
    %c0_12 = arith.constant 0 : index
    %18 = vector.load %arg4[%c0_11, %c0_12] : memref<128x1xf32, #tpu.memory_space<vmem>>, vector<8x1xf32>
    %19 = vector.broadcast %18 : vector<8x1xf32> to vector<8x512xf32>
    %20 = arith.mulf %17, %19 : vector<8x512xf32>
    %21 = arith.addf %3, %20 : vector<8x512xf32>
    %c8 = arith.constant 8 : index
    %c0_13 = arith.constant 0 : index
    %22 = vector.load %arg3[%c8, %c0_13] : memref<128x1xf32, #tpu.memory_space<vmem>>, vector<8x1xf32>
    %c8_14 = arith.constant 8 : index
    %c0_15 = arith.constant 0 : index
    %23 = vector.load %arg2[%c8_14, %c0_15] : memref<128x2xf32, #tpu.memory_space<vmem>>, vector<8x1xf32>
    %24 = vector.broadcast %23 : vector<8x1xf32> to vector<8x512xf32>
    %25 = vector.broadcast %1 : vector<1x512xf32> to vector<8x512xf32>
    %26 = arith.mulf %24, %25 : vector<8x512xf32>
    %27 = vector.broadcast %22 : vector<8x1xf32> to vector<8x512xf32>
    %28 = arith.addf %27, %26 : vector<8x512xf32>
    %c8_16 = arith.constant 8 : index
    %c1_17 = arith.constant 1 : index
    %29 = vector.load %arg2[%c8_16, %c1_17] : memref<128x2xf32, #tpu.memory_space<vmem>>, vector<8x1xf32>
    %30 = vector.broadcast %29 : vector<8x1xf32> to vector<8x512xf32>
    %31 = vector.broadcast %2 : vector<1x512xf32> to vector<8x512xf32>
    %32 = arith.mulf %30, %31 : vector<8x512xf32>
    %33 = arith.addf %28, %32 : vector<8x512xf32>
    %cst_18 = arith.constant 0.000000e+00 : f32
    %34 = vector.broadcast %cst_18 : f32 to vector<8x512xf32>
    %35 = arith.maximumf %33, %34 : vector<8x512xf32>
    %c8_19 = arith.constant 8 : index
    %c0_20 = arith.constant 0 : index
    %36 = vector.load %arg4[%c8_19, %c0_20] : memref<128x1xf32, #tpu.memory_space<vmem>>, vector<8x1xf32>
    %37 = vector.broadcast %36 : vector<8x1xf32> to vector<8x512xf32>
    %38 = arith.mulf %35, %37 : vector<8x512xf32>
    %39 = arith.addf %21, %38 : vector<8x512xf32>
    %c16 = arith.constant 16 : index
    %c0_21 = arith.constant 0 : index
    %40 = vector.load %arg3[%c16, %c0_21] : memref<128x1xf32, #tpu.memory_space<vmem>>, vector<8x1xf32>
    %c16_22 = arith.constant 16 : index
    %c0_23 = arith.constant 0 : index
    %41 = vector.load %arg2[%c16_22, %c0_23] : memref<128x2xf32, #tpu.memory_space<vmem>>, vector<8x1xf32>
    %42 = vector.broadcast %41 : vector<8x1xf32> to vector<8x512xf32>
    %43 = vector.broadcast %1 : vector<1x512xf32> to vector<8x512xf32>
    %44 = arith.mulf %42, %43 : vector<8x512xf32>
    %45 = vector.broadcast %40 : vector<8x1xf32> to vector<8x512xf32>
    %46 = arith.addf %45, %44 : vector<8x512xf32>
    %c16_24 = arith.constant 16 : index
    %c1_25 = arith.constant 1 : index
    %47 = vector.load %arg2[%c16_24, %c1_25] : memref<128x2xf32, #tpu.memory_space<vmem>>, vector<8x1xf32>
    %48 = vector.broadcast %47 : vector<8x1xf32> to vector<8x512xf32>
    %49 = vector.broadcast %2 : vector<1x512xf32> to vector<8x512xf32>
    %50 = arith.mulf %48, %49 : vector<8x512xf32>
    %51 = arith.addf %46, %50 : vector<8x512xf32>
    %cst_26 = arith.constant 0.000000e+00 : f32
    %52 = vector.broadcast %cst_26 : f32 to vector<8x512xf32>
    %53 = arith.maximumf %51, %52 : vector<8x512xf32>
    %c16_27 = arith.constant 16 : index
    %c0_28 = arith.constant 0 : index
    %54 = vector.load %arg4[%c16_27, %c0_28] : memref<128x1xf32, #tpu.memory_space<vmem>>, vector<8x1xf32>
    %55 = vector.broadcast %54 : vector<8x1xf32> to vector<8x512xf32>
    %56 = arith.mulf %53, %55 : vector<8x512xf32>
    %57 = arith.addf %39, %56 : vector<8x512xf32>
    %c24 = arith.constant 24 : index
    %c0_29 = arith.constant 0 : index
    %58 = vector.load %arg3[%c24, %c0_29] : memref<128x1xf32, #tpu.memory_space<vmem>>, vector<8x1xf32>
    %c24_30 = arith.constant 24 : index
    %c0_31 = arith.constant 0 : index
    %59 = vector.load %arg2[%c24_30, %c0_31] : memref<128x2xf32, #tpu.memory_space<vmem>>, vector<8x1xf32>
    %60 = vector.broadcast %59 : vector<8x1xf32> to vector<8x512xf32>
    %61 = vector.broadcast %1 : vector<1x512xf32> to vector<8x512xf32>
    %62 = arith.mulf %60, %61 : vector<8x512xf32>
    %63 = vector.broadcast %58 : vector<8x1xf32> to vector<8x512xf32>
    %64 = arith.addf %63, %62 : vector<8x512xf32>
    %c24_32 = arith.constant 24 : index
    %c1_33 = arith.constant 1 : index
    %65 = vector.load %arg2[%c24_32, %c1_33] : memref<128x2xf32, #tpu.memory_space<vmem>>, vector<8x1xf32>
    %66 = vector.broadcast %65 : vector<8x1xf32> to vector<8x512xf32>
    %67 = vector.broadcast %2 : vector<1x512xf32> to vector<8x512xf32>
    %68 = arith.mulf %66, %67 : vector<8x512xf32>
    %69 = arith.addf %64, %68 : vector<8x512xf32>
    %cst_34 = arith.constant 0.000000e+00 : f32
    %70 = vector.broadcast %cst_34 : f32 to vector<8x512xf32>
    %71 = arith.maximumf %69, %70 : vector<8x512xf32>
    %c24_35 = arith.constant 24 : index
    %c0_36 = arith.constant 0 : index
    %72 = vector.load %arg4[%c24_35, %c0_36] : memref<128x1xf32, #tpu.memory_space<vmem>>, vector<8x1xf32>
    %73 = vector.broadcast %72 : vector<8x1xf32> to vector<8x512xf32>
    %74 = arith.mulf %71, %73 : vector<8x512xf32>
    %75 = arith.addf %57, %74 : vector<8x512xf32>
    %c32 = arith.constant 32 : index
    %c0_37 = arith.constant 0 : index
    %76 = vector.load %arg3[%c32, %c0_37] : memref<128x1xf32, #tpu.memory_space<vmem>>, vector<8x1xf32>
    %c32_38 = arith.constant 32 : index
    %c0_39 = arith.constant 0 : index
    %77 = vector.load %arg2[%c32_38, %c0_39] : memref<128x2xf32, #tpu.memory_space<vmem>>, vector<8x1xf32>
    %78 = vector.broadcast %77 : vector<8x1xf32> to vector<8x512xf32>
    %79 = vector.broadcast %1 : vector<1x512xf32> to vector<8x512xf32>
    %80 = arith.mulf %78, %79 : vector<8x512xf32>
    %81 = vector.broadcast %76 : vector<8x1xf32> to vector<8x512xf32>
    %82 = arith.addf %81, %80 : vector<8x512xf32>
    %c32_40 = arith.constant 32 : index
    %c1_41 = arith.constant 1 : index
    %83 = vector.load %arg2[%c32_40, %c1_41] : memref<128x2xf32, #tpu.memory_space<vmem>>, vector<8x1xf32>
    %84 = vector.broadcast %83 : vector<8x1xf32> to vector<8x512xf32>
    %85 = vector.broadcast %2 : vector<1x512xf32> to vector<8x512xf32>
    %86 = arith.mulf %84, %85 : vector<8x512xf32>
    %87 = arith.addf %82, %86 : vector<8x512xf32>
    %cst_42 = arith.constant 0.000000e+00 : f32
    %88 = vector.broadcast %cst_42 : f32 to vector<8x512xf32>
    %89 = arith.maximumf %87, %88 : vector<8x512xf32>
    %c32_43 = arith.constant 32 : index
    %c0_44 = arith.constant 0 : index
    %90 = vector.load %arg4[%c32_43, %c0_44] : memref<128x1xf32, #tpu.memory_space<vmem>>, vector<8x1xf32>
    %91 = vector.broadcast %90 : vector<8x1xf32> to vector<8x512xf32>
    %92 = arith.mulf %89, %91 : vector<8x512xf32>
    %93 = arith.addf %75, %92 : vector<8x512xf32>
    %c40 = arith.constant 40 : index
    %c0_45 = arith.constant 0 : index
    %94 = vector.load %arg3[%c40, %c0_45] : memref<128x1xf32, #tpu.memory_space<vmem>>, vector<8x1xf32>
    %c40_46 = arith.constant 40 : index
    %c0_47 = arith.constant 0 : index
    %95 = vector.load %arg2[%c40_46, %c0_47] : memref<128x2xf32, #tpu.memory_space<vmem>>, vector<8x1xf32>
    %96 = vector.broadcast %95 : vector<8x1xf32> to vector<8x512xf32>
    %97 = vector.broadcast %1 : vector<1x512xf32> to vector<8x512xf32>
    %98 = arith.mulf %96, %97 : vector<8x512xf32>
    %99 = vector.broadcast %94 : vector<8x1xf32> to vector<8x512xf32>
    %100 = arith.addf %99, %98 : vector<8x512xf32>
    %c40_48 = arith.constant 40 : index
    %c1_49 = arith.constant 1 : index
    %101 = vector.load %arg2[%c40_48, %c1_49] : memref<128x2xf32, #tpu.memory_space<vmem>>, vector<8x1xf32>
    %102 = vector.broadcast %101 : vector<8x1xf32> to vector<8x512xf32>
    %103 = vector.broadcast %2 : vector<1x512xf32> to vector<8x512xf32>
    %104 = arith.mulf %102, %103 : vector<8x512xf32>
    %105 = arith.addf %100, %104 : vector<8x512xf32>
    %cst_50 = arith.constant 0.000000e+00 : f32
    %106 = vector.broadcast %cst_50 : f32 to vector<8x512xf32>
    %107 = arith.maximumf %105, %106 : vector<8x512xf32>
    %c40_51 = arith.constant 40 : index
    %c0_52 = arith.constant 0 : index
    %108 = vector.load %arg4[%c40_51, %c0_52] : memref<128x1xf32, #tpu.memory_space<vmem>>, vector<8x1xf32>
    %109 = vector.broadcast %108 : vector<8x1xf32> to vector<8x512xf32>
    %110 = arith.mulf %107, %109 : vector<8x512xf32>
    %111 = arith.addf %93, %110 : vector<8x512xf32>
    %c48 = arith.constant 48 : index
    %c0_53 = arith.constant 0 : index
    %112 = vector.load %arg3[%c48, %c0_53] : memref<128x1xf32, #tpu.memory_space<vmem>>, vector<8x1xf32>
    %c48_54 = arith.constant 48 : index
    %c0_55 = arith.constant 0 : index
    %113 = vector.load %arg2[%c48_54, %c0_55] : memref<128x2xf32, #tpu.memory_space<vmem>>, vector<8x1xf32>
    %114 = vector.broadcast %113 : vector<8x1xf32> to vector<8x512xf32>
    %115 = vector.broadcast %1 : vector<1x512xf32> to vector<8x512xf32>
    %116 = arith.mulf %114, %115 : vector<8x512xf32>
    %117 = vector.broadcast %112 : vector<8x1xf32> to vector<8x512xf32>
    %118 = arith.addf %117, %116 : vector<8x512xf32>
    %c48_56 = arith.constant 48 : index
    %c1_57 = arith.constant 1 : index
    %119 = vector.load %arg2[%c48_56, %c1_57] : memref<128x2xf32, #tpu.memory_space<vmem>>, vector<8x1xf32>
    %120 = vector.broadcast %119 : vector<8x1xf32> to vector<8x512xf32>
    %121 = vector.broadcast %2 : vector<1x512xf32> to vector<8x512xf32>
    %122 = arith.mulf %120, %121 : vector<8x512xf32>
    %123 = arith.addf %118, %122 : vector<8x512xf32>
    %cst_58 = arith.constant 0.000000e+00 : f32
    %124 = vector.broadcast %cst_58 : f32 to vector<8x512xf32>
    %125 = arith.maximumf %123, %124 : vector<8x512xf32>
    %c48_59 = arith.constant 48 : index
    %c0_60 = arith.constant 0 : index
    %126 = vector.load %arg4[%c48_59, %c0_60] : memref<128x1xf32, #tpu.memory_space<vmem>>, vector<8x1xf32>
    %127 = vector.broadcast %126 : vector<8x1xf32> to vector<8x512xf32>
    %128 = arith.mulf %125, %127 : vector<8x512xf32>
    %129 = arith.addf %111, %128 : vector<8x512xf32>
    %c56 = arith.constant 56 : index
    %c0_61 = arith.constant 0 : index
    %130 = vector.load %arg3[%c56, %c0_61] : memref<128x1xf32, #tpu.memory_space<vmem>>, vector<8x1xf32>
    %c56_62 = arith.constant 56 : index
    %c0_63 = arith.constant 0 : index
    %131 = vector.load %arg2[%c56_62, %c0_63] : memref<128x2xf32, #tpu.memory_space<vmem>>, vector<8x1xf32>
    %132 = vector.broadcast %131 : vector<8x1xf32> to vector<8x512xf32>
    %133 = vector.broadcast %1 : vector<1x512xf32> to vector<8x512xf32>
    %134 = arith.mulf %132, %133 : vector<8x512xf32>
    %135 = vector.broadcast %130 : vector<8x1xf32> to vector<8x512xf32>
    %136 = arith.addf %135, %134 : vector<8x512xf32>
    %c56_64 = arith.constant 56 : index
    %c1_65 = arith.constant 1 : index
    %137 = vector.load %arg2[%c56_64, %c1_65] : memref<128x2xf32, #tpu.memory_space<vmem>>, vector<8x1xf32>
    %138 = vector.broadcast %137 : vector<8x1xf32> to vector<8x512xf32>
    %139 = vector.broadcast %2 : vector<1x512xf32> to vector<8x512xf32>
    %140 = arith.mulf %138, %139 : vector<8x512xf32>
    %141 = arith.addf %136, %140 : vector<8x512xf32>
    %cst_66 = arith.constant 0.000000e+00 : f32
    %142 = vector.broadcast %cst_66 : f32 to vector<8x512xf32>
    %143 = arith.maximumf %141, %142 : vector<8x512xf32>
    %c56_67 = arith.constant 56 : index
    %c0_68 = arith.constant 0 : index
    %144 = vector.load %arg4[%c56_67, %c0_68] : memref<128x1xf32, #tpu.memory_space<vmem>>, vector<8x1xf32>
    %145 = vector.broadcast %144 : vector<8x1xf32> to vector<8x512xf32>
    %146 = arith.mulf %143, %145 : vector<8x512xf32>
    %147 = arith.addf %129, %146 : vector<8x512xf32>
    %c64 = arith.constant 64 : index
    %c0_69 = arith.constant 0 : index
    %148 = vector.load %arg3[%c64, %c0_69] : memref<128x1xf32, #tpu.memory_space<vmem>>, vector<8x1xf32>
    %c64_70 = arith.constant 64 : index
    %c0_71 = arith.constant 0 : index
    %149 = vector.load %arg2[%c64_70, %c0_71] : memref<128x2xf32, #tpu.memory_space<vmem>>, vector<8x1xf32>
    %150 = vector.broadcast %149 : vector<8x1xf32> to vector<8x512xf32>
    %151 = vector.broadcast %1 : vector<1x512xf32> to vector<8x512xf32>
    %152 = arith.mulf %150, %151 : vector<8x512xf32>
    %153 = vector.broadcast %148 : vector<8x1xf32> to vector<8x512xf32>
    %154 = arith.addf %153, %152 : vector<8x512xf32>
    %c64_72 = arith.constant 64 : index
    %c1_73 = arith.constant 1 : index
    %155 = vector.load %arg2[%c64_72, %c1_73] : memref<128x2xf32, #tpu.memory_space<vmem>>, vector<8x1xf32>
    %156 = vector.broadcast %155 : vector<8x1xf32> to vector<8x512xf32>
    %157 = vector.broadcast %2 : vector<1x512xf32> to vector<8x512xf32>
    %158 = arith.mulf %156, %157 : vector<8x512xf32>
    %159 = arith.addf %154, %158 : vector<8x512xf32>
    %cst_74 = arith.constant 0.000000e+00 : f32
    %160 = vector.broadcast %cst_74 : f32 to vector<8x512xf32>
    %161 = arith.maximumf %159, %160 : vector<8x512xf32>
    %c64_75 = arith.constant 64 : index
    %c0_76 = arith.constant 0 : index
    %162 = vector.load %arg4[%c64_75, %c0_76] : memref<128x1xf32, #tpu.memory_space<vmem>>, vector<8x1xf32>
    %163 = vector.broadcast %162 : vector<8x1xf32> to vector<8x512xf32>
    %164 = arith.mulf %161, %163 : vector<8x512xf32>
    %165 = arith.addf %147, %164 : vector<8x512xf32>
    %c72 = arith.constant 72 : index
    %c0_77 = arith.constant 0 : index
    %166 = vector.load %arg3[%c72, %c0_77] : memref<128x1xf32, #tpu.memory_space<vmem>>, vector<8x1xf32>
    %c72_78 = arith.constant 72 : index
    %c0_79 = arith.constant 0 : index
    %167 = vector.load %arg2[%c72_78, %c0_79] : memref<128x2xf32, #tpu.memory_space<vmem>>, vector<8x1xf32>
    %168 = vector.broadcast %167 : vector<8x1xf32> to vector<8x512xf32>
    %169 = vector.broadcast %1 : vector<1x512xf32> to vector<8x512xf32>
    %170 = arith.mulf %168, %169 : vector<8x512xf32>
    %171 = vector.broadcast %166 : vector<8x1xf32> to vector<8x512xf32>
    %172 = arith.addf %171, %170 : vector<8x512xf32>
    %c72_80 = arith.constant 72 : index
    %c1_81 = arith.constant 1 : index
    %173 = vector.load %arg2[%c72_80, %c1_81] : memref<128x2xf32, #tpu.memory_space<vmem>>, vector<8x1xf32>
    %174 = vector.broadcast %173 : vector<8x1xf32> to vector<8x512xf32>
    %175 = vector.broadcast %2 : vector<1x512xf32> to vector<8x512xf32>
    %176 = arith.mulf %174, %175 : vector<8x512xf32>
    %177 = arith.addf %172, %176 : vector<8x512xf32>
    %cst_82 = arith.constant 0.000000e+00 : f32
    %178 = vector.broadcast %cst_82 : f32 to vector<8x512xf32>
    %179 = arith.maximumf %177, %178 : vector<8x512xf32>
    %c72_83 = arith.constant 72 : index
    %c0_84 = arith.constant 0 : index
    %180 = vector.load %arg4[%c72_83, %c0_84] : memref<128x1xf32, #tpu.memory_space<vmem>>, vector<8x1xf32>
    %181 = vector.broadcast %180 : vector<8x1xf32> to vector<8x512xf32>
    %182 = arith.mulf %179, %181 : vector<8x512xf32>
    %183 = arith.addf %165, %182 : vector<8x512xf32>
    %c80 = arith.constant 80 : index
    %c0_85 = arith.constant 0 : index
    %184 = vector.load %arg3[%c80, %c0_85] : memref<128x1xf32, #tpu.memory_space<vmem>>, vector<8x1xf32>
    %c80_86 = arith.constant 80 : index
    %c0_87 = arith.constant 0 : index
    %185 = vector.load %arg2[%c80_86, %c0_87] : memref<128x2xf32, #tpu.memory_space<vmem>>, vector<8x1xf32>
    %186 = vector.broadcast %185 : vector<8x1xf32> to vector<8x512xf32>
    %187 = vector.broadcast %1 : vector<1x512xf32> to vector<8x512xf32>
    %188 = arith.mulf %186, %187 : vector<8x512xf32>
    %189 = vector.broadcast %184 : vector<8x1xf32> to vector<8x512xf32>
    %190 = arith.addf %189, %188 : vector<8x512xf32>
    %c80_88 = arith.constant 80 : index
    %c1_89 = arith.constant 1 : index
    %191 = vector.load %arg2[%c80_88, %c1_89] : memref<128x2xf32, #tpu.memory_space<vmem>>, vector<8x1xf32>
    %192 = vector.broadcast %191 : vector<8x1xf32> to vector<8x512xf32>
    %193 = vector.broadcast %2 : vector<1x512xf32> to vector<8x512xf32>
    %194 = arith.mulf %192, %193 : vector<8x512xf32>
    %195 = arith.addf %190, %194 : vector<8x512xf32>
    %cst_90 = arith.constant 0.000000e+00 : f32
    %196 = vector.broadcast %cst_90 : f32 to vector<8x512xf32>
    %197 = arith.maximumf %195, %196 : vector<8x512xf32>
    %c80_91 = arith.constant 80 : index
    %c0_92 = arith.constant 0 : index
    %198 = vector.load %arg4[%c80_91, %c0_92] : memref<128x1xf32, #tpu.memory_space<vmem>>, vector<8x1xf32>
    %199 = vector.broadcast %198 : vector<8x1xf32> to vector<8x512xf32>
    %200 = arith.mulf %197, %199 : vector<8x512xf32>
    %201 = arith.addf %183, %200 : vector<8x512xf32>
    %c88 = arith.constant 88 : index
    %c0_93 = arith.constant 0 : index
    %202 = vector.load %arg3[%c88, %c0_93] : memref<128x1xf32, #tpu.memory_space<vmem>>, vector<8x1xf32>
    %c88_94 = arith.constant 88 : index
    %c0_95 = arith.constant 0 : index
    %203 = vector.load %arg2[%c88_94, %c0_95] : memref<128x2xf32, #tpu.memory_space<vmem>>, vector<8x1xf32>
    %204 = vector.broadcast %203 : vector<8x1xf32> to vector<8x512xf32>
    %205 = vector.broadcast %1 : vector<1x512xf32> to vector<8x512xf32>
    %206 = arith.mulf %204, %205 : vector<8x512xf32>
    %207 = vector.broadcast %202 : vector<8x1xf32> to vector<8x512xf32>
    %208 = arith.addf %207, %206 : vector<8x512xf32>
    %c88_96 = arith.constant 88 : index
    %c1_97 = arith.constant 1 : index
    %209 = vector.load %arg2[%c88_96, %c1_97] : memref<128x2xf32, #tpu.memory_space<vmem>>, vector<8x1xf32>
    %210 = vector.broadcast %209 : vector<8x1xf32> to vector<8x512xf32>
    %211 = vector.broadcast %2 : vector<1x512xf32> to vector<8x512xf32>
    %212 = arith.mulf %210, %211 : vector<8x512xf32>
    %213 = arith.addf %208, %212 : vector<8x512xf32>
    %cst_98 = arith.constant 0.000000e+00 : f32
    %214 = vector.broadcast %cst_98 : f32 to vector<8x512xf32>
    %215 = arith.maximumf %213, %214 : vector<8x512xf32>
    %c88_99 = arith.constant 88 : index
    %c0_100 = arith.constant 0 : index
    %216 = vector.load %arg4[%c88_99, %c0_100] : memref<128x1xf32, #tpu.memory_space<vmem>>, vector<8x1xf32>
    %217 = vector.broadcast %216 : vector<8x1xf32> to vector<8x512xf32>
    %218 = arith.mulf %215, %217 : vector<8x512xf32>
    %219 = arith.addf %201, %218 : vector<8x512xf32>
    %c96 = arith.constant 96 : index
    %c0_101 = arith.constant 0 : index
    %220 = vector.load %arg3[%c96, %c0_101] : memref<128x1xf32, #tpu.memory_space<vmem>>, vector<8x1xf32>
    %c96_102 = arith.constant 96 : index
    %c0_103 = arith.constant 0 : index
    %221 = vector.load %arg2[%c96_102, %c0_103] : memref<128x2xf32, #tpu.memory_space<vmem>>, vector<8x1xf32>
    %222 = vector.broadcast %221 : vector<8x1xf32> to vector<8x512xf32>
    %223 = vector.broadcast %1 : vector<1x512xf32> to vector<8x512xf32>
    %224 = arith.mulf %222, %223 : vector<8x512xf32>
    %225 = vector.broadcast %220 : vector<8x1xf32> to vector<8x512xf32>
    %226 = arith.addf %225, %224 : vector<8x512xf32>
    %c96_104 = arith.constant 96 : index
    %c1_105 = arith.constant 1 : index
    %227 = vector.load %arg2[%c96_104, %c1_105] : memref<128x2xf32, #tpu.memory_space<vmem>>, vector<8x1xf32>
    %228 = vector.broadcast %227 : vector<8x1xf32> to vector<8x512xf32>
    %229 = vector.broadcast %2 : vector<1x512xf32> to vector<8x512xf32>
    %230 = arith.mulf %228, %229 : vector<8x512xf32>
    %231 = arith.addf %226, %230 : vector<8x512xf32>
    %cst_106 = arith.constant 0.000000e+00 : f32
    %232 = vector.broadcast %cst_106 : f32 to vector<8x512xf32>
    %233 = arith.maximumf %231, %232 : vector<8x512xf32>
    %c96_107 = arith.constant 96 : index
    %c0_108 = arith.constant 0 : index
    %234 = vector.load %arg4[%c96_107, %c0_108] : memref<128x1xf32, #tpu.memory_space<vmem>>, vector<8x1xf32>
    %235 = vector.broadcast %234 : vector<8x1xf32> to vector<8x512xf32>
    %236 = arith.mulf %233, %235 : vector<8x512xf32>
    %237 = arith.addf %219, %236 : vector<8x512xf32>
    %c104 = arith.constant 104 : index
    %c0_109 = arith.constant 0 : index
    %238 = vector.load %arg3[%c104, %c0_109] : memref<128x1xf32, #tpu.memory_space<vmem>>, vector<8x1xf32>
    %c104_110 = arith.constant 104 : index
    %c0_111 = arith.constant 0 : index
    %239 = vector.load %arg2[%c104_110, %c0_111] : memref<128x2xf32, #tpu.memory_space<vmem>>, vector<8x1xf32>
    %240 = vector.broadcast %239 : vector<8x1xf32> to vector<8x512xf32>
    %241 = vector.broadcast %1 : vector<1x512xf32> to vector<8x512xf32>
    %242 = arith.mulf %240, %241 : vector<8x512xf32>
    %243 = vector.broadcast %238 : vector<8x1xf32> to vector<8x512xf32>
    %244 = arith.addf %243, %242 : vector<8x512xf32>
    %c104_112 = arith.constant 104 : index
    %c1_113 = arith.constant 1 : index
    %245 = vector.load %arg2[%c104_112, %c1_113] : memref<128x2xf32, #tpu.memory_space<vmem>>, vector<8x1xf32>
    %246 = vector.broadcast %245 : vector<8x1xf32> to vector<8x512xf32>
    %247 = vector.broadcast %2 : vector<1x512xf32> to vector<8x512xf32>
    %248 = arith.mulf %246, %247 : vector<8x512xf32>
    %249 = arith.addf %244, %248 : vector<8x512xf32>
    %cst_114 = arith.constant 0.000000e+00 : f32
    %250 = vector.broadcast %cst_114 : f32 to vector<8x512xf32>
    %251 = arith.maximumf %249, %250 : vector<8x512xf32>
    %c104_115 = arith.constant 104 : index
    %c0_116 = arith.constant 0 : index
    %252 = vector.load %arg4[%c104_115, %c0_116] : memref<128x1xf32, #tpu.memory_space<vmem>>, vector<8x1xf32>
    %253 = vector.broadcast %252 : vector<8x1xf32> to vector<8x512xf32>
    %254 = arith.mulf %251, %253 : vector<8x512xf32>
    %255 = arith.addf %237, %254 : vector<8x512xf32>
    %c112 = arith.constant 112 : index
    %c0_117 = arith.constant 0 : index
    %256 = vector.load %arg3[%c112, %c0_117] : memref<128x1xf32, #tpu.memory_space<vmem>>, vector<8x1xf32>
    %c112_118 = arith.constant 112 : index
    %c0_119 = arith.constant 0 : index
    %257 = vector.load %arg2[%c112_118, %c0_119] : memref<128x2xf32, #tpu.memory_space<vmem>>, vector<8x1xf32>
    %258 = vector.broadcast %257 : vector<8x1xf32> to vector<8x512xf32>
    %259 = vector.broadcast %1 : vector<1x512xf32> to vector<8x512xf32>
    %260 = arith.mulf %258, %259 : vector<8x512xf32>
    %261 = vector.broadcast %256 : vector<8x1xf32> to vector<8x512xf32>
    %262 = arith.addf %261, %260 : vector<8x512xf32>
    %c112_120 = arith.constant 112 : index
    %c1_121 = arith.constant 1 : index
    %263 = vector.load %arg2[%c112_120, %c1_121] : memref<128x2xf32, #tpu.memory_space<vmem>>, vector<8x1xf32>
    %264 = vector.broadcast %263 : vector<8x1xf32> to vector<8x512xf32>
    %265 = vector.broadcast %2 : vector<1x512xf32> to vector<8x512xf32>
    %266 = arith.mulf %264, %265 : vector<8x512xf32>
    %267 = arith.addf %262, %266 : vector<8x512xf32>
    %cst_122 = arith.constant 0.000000e+00 : f32
    %268 = vector.broadcast %cst_122 : f32 to vector<8x512xf32>
    %269 = arith.maximumf %267, %268 : vector<8x512xf32>
    %c112_123 = arith.constant 112 : index
    %c0_124 = arith.constant 0 : index
    %270 = vector.load %arg4[%c112_123, %c0_124] : memref<128x1xf32, #tpu.memory_space<vmem>>, vector<8x1xf32>
    %271 = vector.broadcast %270 : vector<8x1xf32> to vector<8x512xf32>
    %272 = arith.mulf %269, %271 : vector<8x512xf32>
    %273 = arith.addf %255, %272 : vector<8x512xf32>
    %c120 = arith.constant 120 : index
    %c0_125 = arith.constant 0 : index
    %274 = vector.load %arg3[%c120, %c0_125] : memref<128x1xf32, #tpu.memory_space<vmem>>, vector<8x1xf32>
    %c120_126 = arith.constant 120 : index
    %c0_127 = arith.constant 0 : index
    %275 = vector.load %arg2[%c120_126, %c0_127] : memref<128x2xf32, #tpu.memory_space<vmem>>, vector<8x1xf32>
    %276 = vector.broadcast %275 : vector<8x1xf32> to vector<8x512xf32>
    %277 = vector.broadcast %1 : vector<1x512xf32> to vector<8x512xf32>
    %278 = arith.mulf %276, %277 : vector<8x512xf32>
    %279 = vector.broadcast %274 : vector<8x1xf32> to vector<8x512xf32>
    %280 = arith.addf %279, %278 : vector<8x512xf32>
    %c120_128 = arith.constant 120 : index
    %c1_129 = arith.constant 1 : index
    %281 = vector.load %arg2[%c120_128, %c1_129] : memref<128x2xf32, #tpu.memory_space<vmem>>, vector<8x1xf32>
    %282 = vector.broadcast %281 : vector<8x1xf32> to vector<8x512xf32>
    %283 = vector.broadcast %2 : vector<1x512xf32> to vector<8x512xf32>
    %284 = arith.mulf %282, %283 : vector<8x512xf32>
    %285 = arith.addf %280, %284 : vector<8x512xf32>
    %cst_130 = arith.constant 0.000000e+00 : f32
    %286 = vector.broadcast %cst_130 : f32 to vector<8x512xf32>
    %287 = arith.maximumf %285, %286 : vector<8x512xf32>
    %c120_131 = arith.constant 120 : index
    %c0_132 = arith.constant 0 : index
    %288 = vector.load %arg4[%c120_131, %c0_132] : memref<128x1xf32, #tpu.memory_space<vmem>>, vector<8x1xf32>
    %289 = vector.broadcast %288 : vector<8x1xf32> to vector<8x512xf32>
    %290 = arith.mulf %287, %289 : vector<8x512xf32>
    %291 = arith.addf %273, %290 : vector<8x512xf32>
    %cst_133 = arith.constant dense<0.000000e+00> : vector<512xf32>
    %292 = vector.multi_reduction <add>, %291, %cst_133 [0] : vector<8x512xf32> to vector<512xf32>
    %293 = vector.shape_cast %292 : vector<512xf32> to vector<1x512xf32>
    %294 = vector.broadcast %0 : f32 to vector<1x512xf32>
    %295 = arith.addf %293, %294 : vector<1x512xf32>
    %296 = math.tanh %295 : vector<1x512xf32>
    %c0_134 = arith.constant 0 : index
    %c0_135 = arith.constant 0 : index
    %297 = vector.load %arg6[%c0_134, %c0_135] : memref<1x2048xf32, #tpu.memory_space<vmem>>, vector<1x512xf32>
    tpu.vector_store %arg6[%c0_134, %c0_135], %296 {strides = array<i32>} : memref<1x2048xf32, #tpu.memory_space<vmem>>, vector<1x512xf32>,
    %c0_136 = arith.constant 0 : index
    %c512 = arith.constant 512 : index
    %298 = vector.load %arg1[%c0_136, %c512] : memref<2x2048xf32, #tpu.memory_space<vmem>>, vector<1x512xf32>
    %c1_137 = arith.constant 1 : index
    %c512_138 = arith.constant 512 : index
    %299 = vector.load %arg1[%c1_137, %c512_138] : memref<2x2048xf32, #tpu.memory_space<vmem>>, vector<1x512xf32>
    %cst_139 = arith.constant 0.000000e+00 : f32
    %300 = vector.broadcast %cst_139 : f32 to vector<8x512xf32>
    %c0_140 = arith.constant 0 : index
    %c0_141 = arith.constant 0 : index
    %301 = vector.load %arg3[%c0_140, %c0_141] : memref<128x1xf32, #tpu.memory_space<vmem>>, vector<8x1xf32>
    %c0_142 = arith.constant 0 : index
    %c0_143 = arith.constant 0 : index
    %302 = vector.load %arg2[%c0_142, %c0_143] : memref<128x2xf32, #tpu.memory_space<vmem>>, vector<8x1xf32>
    %303 = vector.broadcast %302 : vector<8x1xf32> to vector<8x512xf32>
    %304 = vector.broadcast %298 : vector<1x512xf32> to vector<8x512xf32>
    %305 = arith.mulf %303, %304 : vector<8x512xf32>
    %306 = vector.broadcast %301 : vector<8x1xf32> to vector<8x512xf32>
    %307 = arith.addf %306, %305 : vector<8x512xf32>
    %c0_144 = arith.constant 0 : index
    %c1_145 = arith.constant 1 : index
    %308 = vector.load %arg2[%c0_144, %c1_145] : memref<128x2xf32, #tpu.memory_space<vmem>>, vector<8x1xf32>
    %309 = vector.broadcast %308 : vector<8x1xf32> to vector<8x512xf32>
    %310 = vector.broadcast %299 : vector<1x512xf32> to vector<8x512xf32>
    %311 = arith.mulf %309, %310 : vector<8x512xf32>
    %312 = arith.addf %307, %311 : vector<8x512xf32>
    %cst_146 = arith.constant 0.000000e+00 : f32
    %313 = vector.broadcast %cst_146 : f32 to vector<8x512xf32>
    %314 = arith.maximumf %312, %313 : vector<8x512xf32>
    %c0_147 = arith.constant 0 : index
    %c0_148 = arith.constant 0 : index
    %315 = vector.load %arg4[%c0_147, %c0_148] : memref<128x1xf32, #tpu.memory_space<vmem>>, vector<8x1xf32>
    %316 = vector.broadcast %315 : vector<8x1xf32> to vector<8x512xf32>
    %317 = arith.mulf %314, %316 : vector<8x512xf32>
    %318 = arith.addf %300, %317 : vector<8x512xf32>
    %c8_149 = arith.constant 8 : index
    %c0_150 = arith.constant 0 : index
    %319 = vector.load %arg3[%c8_149, %c0_150] : memref<128x1xf32, #tpu.memory_space<vmem>>, vector<8x1xf32>
    %c8_151 = arith.constant 8 : index
    %c0_152 = arith.constant 0 : index
    %320 = vector.load %arg2[%c8_151, %c0_152] : memref<128x2xf32, #tpu.memory_space<vmem>>, vector<8x1xf32>
    %321 = vector.broadcast %320 : vector<8x1xf32> to vector<8x512xf32>
    %322 = vector.broadcast %298 : vector<1x512xf32> to vector<8x512xf32>
    %323 = arith.mulf %321, %322 : vector<8x512xf32>
    %324 = vector.broadcast %319 : vector<8x1xf32> to vector<8x512xf32>
    %325 = arith.addf %324, %323 : vector<8x512xf32>
    %c8_153 = arith.constant 8 : index
    %c1_154 = arith.constant 1 : index
    %326 = vector.load %arg2[%c8_153, %c1_154] : memref<128x2xf32, #tpu.memory_space<vmem>>, vector<8x1xf32>
    %327 = vector.broadcast %326 : vector<8x1xf32> to vector<8x512xf32>
    %328 = vector.broadcast %299 : vector<1x512xf32> to vector<8x512xf32>
    %329 = arith.mulf %327, %328 : vector<8x512xf32>
    %330 = arith.addf %325, %329 : vector<8x512xf32>
    %cst_155 = arith.constant 0.000000e+00 : f32
    %331 = vector.broadcast %cst_155 : f32 to vector<8x512xf32>
    %332 = arith.maximumf %330, %331 : vector<8x512xf32>
    %c8_156 = arith.constant 8 : index
    %c0_157 = arith.constant 0 : index
    %333 = vector.load %arg4[%c8_156, %c0_157] : memref<128x1xf32, #tpu.memory_space<vmem>>, vector<8x1xf32>
    %334 = vector.broadcast %333 : vector<8x1xf32> to vector<8x512xf32>
    %335 = arith.mulf %332, %334 : vector<8x512xf32>
    %336 = arith.addf %318, %335 : vector<8x512xf32>
    %c16_158 = arith.constant 16 : index
    %c0_159 = arith.constant 0 : index
    %337 = vector.load %arg3[%c16_158, %c0_159] : memref<128x1xf32, #tpu.memory_space<vmem>>, vector<8x1xf32>
    %c16_160 = arith.constant 16 : index
    %c0_161 = arith.constant 0 : index
    %338 = vector.load %arg2[%c16_160, %c0_161] : memref<128x2xf32, #tpu.memory_space<vmem>>, vector<8x1xf32>
    %339 = vector.broadcast %338 : vector<8x1xf32> to vector<8x512xf32>
    %340 = vector.broadcast %298 : vector<1x512xf32> to vector<8x512xf32>
    %341 = arith.mulf %339, %340 : vector<8x512xf32>
    %342 = vector.broadcast %337 : vector<8x1xf32> to vector<8x512xf32>
    %343 = arith.addf %342, %341 : vector<8x512xf32>
    %c16_162 = arith.constant 16 : index
    %c1_163 = arith.constant 1 : index
    %344 = vector.load %arg2[%c16_162, %c1_163] : memref<128x2xf32, #tpu.memory_space<vmem>>, vector<8x1xf32>
    %345 = vector.broadcast %344 : vector<8x1xf32> to vector<8x512xf32>
    %346 = vector.broadcast %299 : vector<1x512xf32> to vector<8x512xf32>
    %347 = arith.mulf %345, %346 : vector<8x512xf32>
    %348 = arith.addf %343, %347 : vector<8x512xf32>
    %cst_164 = arith.constant 0.000000e+00 : f32
    %349 = vector.broadcast %cst_164 : f32 to vector<8x512xf32>
    %350 = arith.maximumf %348, %349 : vector<8x512xf32>
    %c16_165 = arith.constant 16 : index
    %c0_166 = arith.constant 0 : index
    %351 = vector.load %arg4[%c16_165, %c0_166] : memref<128x1xf32, #tpu.memory_space<vmem>>, vector<8x1xf32>
    %352 = vector.broadcast %351 : vector<8x1xf32> to vector<8x512xf32>
    %353 = arith.mulf %350, %352 : vector<8x512xf32>
    %354 = arith.addf %336, %353 : vector<8x512xf32>
    %c24_167 = arith.constant 24 : index
    %c0_168 = arith.constant 0 : index
    %355 = vector.load %arg3[%c24_167, %c0_168] : memref<128x1xf32, #tpu.memory_space<vmem>>, vector<8x1xf32>
    %c24_169 = arith.constant 24 : index
    %c0_170 = arith.constant 0 : index
    %356 = vector.load %arg2[%c24_169, %c0_170] : memref<128x2xf32, #tpu.memory_space<vmem>>, vector<8x1xf32>
    %357 = vector.broadcast %356 : vector<8x1xf32> to vector<8x512xf32>
    %358 = vector.broadcast %298 : vector<1x512xf32> to vector<8x512xf32>
    %359 = arith.mulf %357, %358 : vector<8x512xf32>
    %360 = vector.broadcast %355 : vector<8x1xf32> to vector<8x512xf32>
    %361 = arith.addf %360, %359 : vector<8x512xf32>
    %c24_171 = arith.constant 24 : index
    %c1_172 = arith.constant 1 : index
    %362 = vector.load %arg2[%c24_171, %c1_172] : memref<128x2xf32, #tpu.memory_space<vmem>>, vector<8x1xf32>
    %363 = vector.broadcast %362 : vector<8x1xf32> to vector<8x512xf32>
    %364 = vector.broadcast %299 : vector<1x512xf32> to vector<8x512xf32>
    %365 = arith.mulf %363, %364 : vector<8x512xf32>
    %366 = arith.addf %361, %365 : vector<8x512xf32>
    %cst_173 = arith.constant 0.000000e+00 : f32
    %367 = vector.broadcast %cst_173 : f32 to vector<8x512xf32>
    %368 = arith.maximumf %366, %367 : vector<8x512xf32>
    %c24_174 = arith.constant 24 : index
    %c0_175 = arith.constant 0 : index
    %369 = vector.load %arg4[%c24_174, %c0_175] : memref<128x1xf32, #tpu.memory_space<vmem>>, vector<8x1xf32>
    %370 = vector.broadcast %369 : vector<8x1xf32> to vector<8x512xf32>
    %371 = arith.mulf %368, %370 : vector<8x512xf32>
    %372 = arith.addf %354, %371 : vector<8x512xf32>
    %c32_176 = arith.constant 32 : index
    %c0_177 = arith.constant 0 : index
    %373 = vector.load %arg3[%c32_176, %c0_177] : memref<128x1xf32, #tpu.memory_space<vmem>>, vector<8x1xf32>
    %c32_178 = arith.constant 32 : index
    %c0_179 = arith.constant 0 : index
    %374 = vector.load %arg2[%c32_178, %c0_179] : memref<128x2xf32, #tpu.memory_space<vmem>>, vector<8x1xf32>
    %375 = vector.broadcast %374 : vector<8x1xf32> to vector<8x512xf32>
    %376 = vector.broadcast %298 : vector<1x512xf32> to vector<8x512xf32>
    %377 = arith.mulf %375, %376 : vector<8x512xf32>
    %378 = vector.broadcast %373 : vector<8x1xf32> to vector<8x512xf32>
    %379 = arith.addf %378, %377 : vector<8x512xf32>
    %c32_180 = arith.constant 32 : index
    %c1_181 = arith.constant 1 : index
    %380 = vector.load %arg2[%c32_180, %c1_181] : memref<128x2xf32, #tpu.memory_space<vmem>>, vector<8x1xf32>
    %381 = vector.broadcast %380 : vector<8x1xf32> to vector<8x512xf32>
    %382 = vector.broadcast %299 : vector<1x512xf32> to vector<8x512xf32>
    %383 = arith.mulf %381, %382 : vector<8x512xf32>
    %384 = arith.addf %379, %383 : vector<8x512xf32>
    %cst_182 = arith.constant 0.000000e+00 : f32
    %385 = vector.broadcast %cst_182 : f32 to vector<8x512xf32>
    %386 = arith.maximumf %384, %385 : vector<8x512xf32>
    %c32_183 = arith.constant 32 : index
    %c0_184 = arith.constant 0 : index
    %387 = vector.load %arg4[%c32_183, %c0_184] : memref<128x1xf32, #tpu.memory_space<vmem>>, vector<8x1xf32>
    %388 = vector.broadcast %387 : vector<8x1xf32> to vector<8x512xf32>
    %389 = arith.mulf %386, %388 : vector<8x512xf32>
    %390 = arith.addf %372, %389 : vector<8x512xf32>
    %c40_185 = arith.constant 40 : index
    %c0_186 = arith.constant 0 : index
    %391 = vector.load %arg3[%c40_185, %c0_186] : memref<128x1xf32, #tpu.memory_space<vmem>>, vector<8x1xf32>
    %c40_187 = arith.constant 40 : index
    %c0_188 = arith.constant 0 : index
    %392 = vector.load %arg2[%c40_187, %c0_188] : memref<128x2xf32, #tpu.memory_space<vmem>>, vector<8x1xf32>
    %393 = vector.broadcast %392 : vector<8x1xf32> to vector<8x512xf32>
    %394 = vector.broadcast %298 : vector<1x512xf32> to vector<8x512xf32>
    %395 = arith.mulf %393, %394 : vector<8x512xf32>
    %396 = vector.broadcast %391 : vector<8x1xf32> to vector<8x512xf32>
    %397 = arith.addf %396, %395 : vector<8x512xf32>
    %c40_189 = arith.constant 40 : index
    %c1_190 = arith.constant 1 : index
    %398 = vector.load %arg2[%c40_189, %c1_190] : memref<128x2xf32, #tpu.memory_space<vmem>>, vector<8x1xf32>
    %399 = vector.broadcast %398 : vector<8x1xf32> to vector<8x512xf32>
    %400 = vector.broadcast %299 : vector<1x512xf32> to vector<8x512xf32>
    %401 = arith.mulf %399, %400 : vector<8x512xf32>
    %402 = arith.addf %397, %401 : vector<8x512xf32>
    %cst_191 = arith.constant 0.000000e+00 : f32
    %403 = vector.broadcast %cst_191 : f32 to vector<8x512xf32>
    %404 = arith.maximumf %402, %403 : vector<8x512xf32>
    %c40_192 = arith.constant 40 : index
    %c0_193 = arith.constant 0 : index
    %405 = vector.load %arg4[%c40_192, %c0_193] : memref<128x1xf32, #tpu.memory_space<vmem>>, vector<8x1xf32>
    %406 = vector.broadcast %405 : vector<8x1xf32> to vector<8x512xf32>
    %407 = arith.mulf %404, %406 : vector<8x512xf32>
    %408 = arith.addf %390, %407 : vector<8x512xf32>
    %c48_194 = arith.constant 48 : index
    %c0_195 = arith.constant 0 : index
    %409 = vector.load %arg3[%c48_194, %c0_195] : memref<128x1xf32, #tpu.memory_space<vmem>>, vector<8x1xf32>
    %c48_196 = arith.constant 48 : index
    %c0_197 = arith.constant 0 : index
    %410 = vector.load %arg2[%c48_196, %c0_197] : memref<128x2xf32, #tpu.memory_space<vmem>>, vector<8x1xf32>
    %411 = vector.broadcast %410 : vector<8x1xf32> to vector<8x512xf32>
    %412 = vector.broadcast %298 : vector<1x512xf32> to vector<8x512xf32>
    %413 = arith.mulf %411, %412 : vector<8x512xf32>
    %414 = vector.broadcast %409 : vector<8x1xf32> to vector<8x512xf32>
    %415 = arith.addf %414, %413 : vector<8x512xf32>
    %c48_198 = arith.constant 48 : index
    %c1_199 = arith.constant 1 : index
    %416 = vector.load %arg2[%c48_198, %c1_199] : memref<128x2xf32, #tpu.memory_space<vmem>>, vector<8x1xf32>
    %417 = vector.broadcast %416 : vector<8x1xf32> to vector<8x512xf32>
    %418 = vector.broadcast %299 : vector<1x512xf32> to vector<8x512xf32>
    %419 = arith.mulf %417, %418 : vector<8x512xf32>
    %420 = arith.addf %415, %419 : vector<8x512xf32>
    %cst_200 = arith.constant 0.000000e+00 : f32
    %421 = vector.broadcast %cst_200 : f32 to vector<8x512xf32>
    %422 = arith.maximumf %420, %421 : vector<8x512xf32>
    %c48_201 = arith.constant 48 : index
    %c0_202 = arith.constant 0 : index
    %423 = vector.load %arg4[%c48_201, %c0_202] : memref<128x1xf32, #tpu.memory_space<vmem>>, vector<8x1xf32>
    %424 = vector.broadcast %423 : vector<8x1xf32> to vector<8x512xf32>
    %425 = arith.mulf %422, %424 : vector<8x512xf32>
    %426 = arith.addf %408, %425 : vector<8x512xf32>
    %c56_203 = arith.constant 56 : index
    %c0_204 = arith.constant 0 : index
    %427 = vector.load %arg3[%c56_203, %c0_204] : memref<128x1xf32, #tpu.memory_space<vmem>>, vector<8x1xf32>
    %c56_205 = arith.constant 56 : index
    %c0_206 = arith.constant 0 : index
    %428 = vector.load %arg2[%c56_205, %c0_206] : memref<128x2xf32, #tpu.memory_space<vmem>>, vector<8x1xf32>
    %429 = vector.broadcast %428 : vector<8x1xf32> to vector<8x512xf32>
    %430 = vector.broadcast %298 : vector<1x512xf32> to vector<8x512xf32>
    %431 = arith.mulf %429, %430 : vector<8x512xf32>
    %432 = vector.broadcast %427 : vector<8x1xf32> to vector<8x512xf32>
    %433 = arith.addf %432, %431 : vector<8x512xf32>
    %c56_207 = arith.constant 56 : index
    %c1_208 = arith.constant 1 : index
    %434 = vector.load %arg2[%c56_207, %c1_208] : memref<128x2xf32, #tpu.memory_space<vmem>>, vector<8x1xf32>
    %435 = vector.broadcast %434 : vector<8x1xf32> to vector<8x512xf32>
    %436 = vector.broadcast %299 : vector<1x512xf32> to vector<8x512xf32>
    %437 = arith.mulf %435, %436 : vector<8x512xf32>
    %438 = arith.addf %433, %437 : vector<8x512xf32>
    %cst_209 = arith.constant 0.000000e+00 : f32
    %439 = vector.broadcast %cst_209 : f32 to vector<8x512xf32>
    %440 = arith.maximumf %438, %439 : vector<8x512xf32>
    %c56_210 = arith.constant 56 : index
    %c0_211 = arith.constant 0 : index
    %441 = vector.load %arg4[%c56_210, %c0_211] : memref<128x1xf32, #tpu.memory_space<vmem>>, vector<8x1xf32>
    %442 = vector.broadcast %441 : vector<8x1xf32> to vector<8x512xf32>
    %443 = arith.mulf %440, %442 : vector<8x512xf32>
    %444 = arith.addf %426, %443 : vector<8x512xf32>
    %c64_212 = arith.constant 64 : index
    %c0_213 = arith.constant 0 : index
    %445 = vector.load %arg3[%c64_212, %c0_213] : memref<128x1xf32, #tpu.memory_space<vmem>>, vector<8x1xf32>
    %c64_214 = arith.constant 64 : index
    %c0_215 = arith.constant 0 : index
    %446 = vector.load %arg2[%c64_214, %c0_215] : memref<128x2xf32, #tpu.memory_space<vmem>>, vector<8x1xf32>
    %447 = vector.broadcast %446 : vector<8x1xf32> to vector<8x512xf32>
    %448 = vector.broadcast %298 : vector<1x512xf32> to vector<8x512xf32>
    %449 = arith.mulf %447, %448 : vector<8x512xf32>
    %450 = vector.broadcast %445 : vector<8x1xf32> to vector<8x512xf32>
    %451 = arith.addf %450, %449 : vector<8x512xf32>
    %c64_216 = arith.constant 64 : index
    %c1_217 = arith.constant 1 : index
    %452 = vector.load %arg2[%c64_216, %c1_217] : memref<128x2xf32, #tpu.memory_space<vmem>>, vector<8x1xf32>
    %453 = vector.broadcast %452 : vector<8x1xf32> to vector<8x512xf32>
    %454 = vector.broadcast %299 : vector<1x512xf32> to vector<8x512xf32>
    %455 = arith.mulf %453, %454 : vector<8x512xf32>
    %456 = arith.addf %451, %455 : vector<8x512xf32>
    %cst_218 = arith.constant 0.000000e+00 : f32
    %457 = vector.broadcast %cst_218 : f32 to vector<8x512xf32>
    %458 = arith.maximumf %456, %457 : vector<8x512xf32>
    %c64_219 = arith.constant 64 : index
    %c0_220 = arith.constant 0 : index
    %459 = vector.load %arg4[%c64_219, %c0_220] : memref<128x1xf32, #tpu.memory_space<vmem>>, vector<8x1xf32>
    %460 = vector.broadcast %459 : vector<8x1xf32> to vector<8x512xf32>
    %461 = arith.mulf %458, %460 : vector<8x512xf32>
    %462 = arith.addf %444, %461 : vector<8x512xf32>
    %c72_221 = arith.constant 72 : index
    %c0_222 = arith.constant 0 : index
    %463 = vector.load %arg3[%c72_221, %c0_222] : memref<128x1xf32, #tpu.memory_space<vmem>>, vector<8x1xf32>
    %c72_223 = arith.constant 72 : index
    %c0_224 = arith.constant 0 : index
    %464 = vector.load %arg2[%c72_223, %c0_224] : memref<128x2xf32, #tpu.memory_space<vmem>>, vector<8x1xf32>
    %465 = vector.broadcast %464 : vector<8x1xf32> to vector<8x512xf32>
    %466 = vector.broadcast %298 : vector<1x512xf32> to vector<8x512xf32>
    %467 = arith.mulf %465, %466 : vector<8x512xf32>
    %468 = vector.broadcast %463 : vector<8x1xf32> to vector<8x512xf32>
    %469 = arith.addf %468, %467 : vector<8x512xf32>
    %c72_225 = arith.constant 72 : index
    %c1_226 = arith.constant 1 : index
    %470 = vector.load %arg2[%c72_225, %c1_226] : memref<128x2xf32, #tpu.memory_space<vmem>>, vector<8x1xf32>
    %471 = vector.broadcast %470 : vector<8x1xf32> to vector<8x512xf32>
    %472 = vector.broadcast %299 : vector<1x512xf32> to vector<8x512xf32>
    %473 = arith.mulf %471, %472 : vector<8x512xf32>
    %474 = arith.addf %469, %473 : vector<8x512xf32>
    %cst_227 = arith.constant 0.000000e+00 : f32
    %475 = vector.broadcast %cst_227 : f32 to vector<8x512xf32>
    %476 = arith.maximumf %474, %475 : vector<8x512xf32>
    %c72_228 = arith.constant 72 : index
    %c0_229 = arith.constant 0 : index
    %477 = vector.load %arg4[%c72_228, %c0_229] : memref<128x1xf32, #tpu.memory_space<vmem>>, vector<8x1xf32>
    %478 = vector.broadcast %477 : vector<8x1xf32> to vector<8x512xf32>
    %479 = arith.mulf %476, %478 : vector<8x512xf32>
    %480 = arith.addf %462, %479 : vector<8x512xf32>
    %c80_230 = arith.constant 80 : index
    %c0_231 = arith.constant 0 : index
    %481 = vector.load %arg3[%c80_230, %c0_231] : memref<128x1xf32, #tpu.memory_space<vmem>>, vector<8x1xf32>
    %c80_232 = arith.constant 80 : index
    %c0_233 = arith.constant 0 : index
    %482 = vector.load %arg2[%c80_232, %c0_233] : memref<128x2xf32, #tpu.memory_space<vmem>>, vector<8x1xf32>
    %483 = vector.broadcast %482 : vector<8x1xf32> to vector<8x512xf32>
    %484 = vector.broadcast %298 : vector<1x512xf32> to vector<8x512xf32>
    %485 = arith.mulf %483, %484 : vector<8x512xf32>
    %486 = vector.broadcast %481 : vector<8x1xf32> to vector<8x512xf32>
    %487 = arith.addf %486, %485 : vector<8x512xf32>
    %c80_234 = arith.constant 80 : index
    %c1_235 = arith.constant 1 : index
    %488 = vector.load %arg2[%c80_234, %c1_235] : memref<128x2xf32, #tpu.memory_space<vmem>>, vector<8x1xf32>
    %489 = vector.broadcast %488 : vector<8x1xf32> to vector<8x512xf32>
    %490 = vector.broadcast %299 : vector<1x512xf32> to vector<8x512xf32>
    %491 = arith.mulf %489, %490 : vector<8x512xf32>
    %492 = arith.addf %487, %491 : vector<8x512xf32>
    %cst_236 = arith.constant 0.000000e+00 : f32
    %493 = vector.broadcast %cst_236 : f32 to vector<8x512xf32>
    %494 = arith.maximumf %492, %493 : vector<8x512xf32>
    %c80_237 = arith.constant 80 : index
    %c0_238 = arith.constant 0 : index
    %495 = vector.load %arg4[%c80_237, %c0_238] : memref<128x1xf32, #tpu.memory_space<vmem>>, vector<8x1xf32>
    %496 = vector.broadcast %495 : vector<8x1xf32> to vector<8x512xf32>
    %497 = arith.mulf %494, %496 : vector<8x512xf32>
    %498 = arith.addf %480, %497 : vector<8x512xf32>
    %c88_239 = arith.constant 88 : index
    %c0_240 = arith.constant 0 : index
    %499 = vector.load %arg3[%c88_239, %c0_240] : memref<128x1xf32, #tpu.memory_space<vmem>>, vector<8x1xf32>
    %c88_241 = arith.constant 88 : index
    %c0_242 = arith.constant 0 : index
    %500 = vector.load %arg2[%c88_241, %c0_242] : memref<128x2xf32, #tpu.memory_space<vmem>>, vector<8x1xf32>
    %501 = vector.broadcast %500 : vector<8x1xf32> to vector<8x512xf32>
    %502 = vector.broadcast %298 : vector<1x512xf32> to vector<8x512xf32>
    %503 = arith.mulf %501, %502 : vector<8x512xf32>
    %504 = vector.broadcast %499 : vector<8x1xf32> to vector<8x512xf32>
    %505 = arith.addf %504, %503 : vector<8x512xf32>
    %c88_243 = arith.constant 88 : index
    %c1_244 = arith.constant 1 : index
    %506 = vector.load %arg2[%c88_243, %c1_244] : memref<128x2xf32, #tpu.memory_space<vmem>>, vector<8x1xf32>
    %507 = vector.broadcast %506 : vector<8x1xf32> to vector<8x512xf32>
    %508 = vector.broadcast %299 : vector<1x512xf32> to vector<8x512xf32>
    %509 = arith.mulf %507, %508 : vector<8x512xf32>
    %510 = arith.addf %505, %509 : vector<8x512xf32>
    %cst_245 = arith.constant 0.000000e+00 : f32
    %511 = vector.broadcast %cst_245 : f32 to vector<8x512xf32>
    %512 = arith.maximumf %510, %511 : vector<8x512xf32>
    %c88_246 = arith.constant 88 : index
    %c0_247 = arith.constant 0 : index
    %513 = vector.load %arg4[%c88_246, %c0_247] : memref<128x1xf32, #tpu.memory_space<vmem>>, vector<8x1xf32>
    %514 = vector.broadcast %513 : vector<8x1xf32> to vector<8x512xf32>
    %515 = arith.mulf %512, %514 : vector<8x512xf32>
    %516 = arith.addf %498, %515 : vector<8x512xf32>
    %c96_248 = arith.constant 96 : index
    %c0_249 = arith.constant 0 : index
    %517 = vector.load %arg3[%c96_248, %c0_249] : memref<128x1xf32, #tpu.memory_space<vmem>>, vector<8x1xf32>
    %c96_250 = arith.constant 96 : index
    %c0_251 = arith.constant 0 : index
    %518 = vector.load %arg2[%c96_250, %c0_251] : memref<128x2xf32, #tpu.memory_space<vmem>>, vector<8x1xf32>
    %519 = vector.broadcast %518 : vector<8x1xf32> to vector<8x512xf32>
    %520 = vector.broadcast %298 : vector<1x512xf32> to vector<8x512xf32>
    %521 = arith.mulf %519, %520 : vector<8x512xf32>
    %522 = vector.broadcast %517 : vector<8x1xf32> to vector<8x512xf32>
    %523 = arith.addf %522, %521 : vector<8x512xf32>
    %c96_252 = arith.constant 96 : index
    %c1_253 = arith.constant 1 : index
    %524 = vector.load %arg2[%c96_252, %c1_253] : memref<128x2xf32, #tpu.memory_space<vmem>>, vector<8x1xf32>
    %525 = vector.broadcast %524 : vector<8x1xf32> to vector<8x512xf32>
    %526 = vector.broadcast %299 : vector<1x512xf32> to vector<8x512xf32>
    %527 = arith.mulf %525, %526 : vector<8x512xf32>
    %528 = arith.addf %523, %527 : vector<8x512xf32>
    %cst_254 = arith.constant 0.000000e+00 : f32
    %529 = vector.broadcast %cst_254 : f32 to vector<8x512xf32>
    %530 = arith.maximumf %528, %529 : vector<8x512xf32>
    %c96_255 = arith.constant 96 : index
    %c0_256 = arith.constant 0 : index
    %531 = vector.load %arg4[%c96_255, %c0_256] : memref<128x1xf32, #tpu.memory_space<vmem>>, vector<8x1xf32>
    %532 = vector.broadcast %531 : vector<8x1xf32> to vector<8x512xf32>
    %533 = arith.mulf %530, %532 : vector<8x512xf32>
    %534 = arith.addf %516, %533 : vector<8x512xf32>
    %c104_257 = arith.constant 104 : index
    %c0_258 = arith.constant 0 : index
    %535 = vector.load %arg3[%c104_257, %c0_258] : memref<128x1xf32, #tpu.memory_space<vmem>>, vector<8x1xf32>
    %c104_259 = arith.constant 104 : index
    %c0_260 = arith.constant 0 : index
    %536 = vector.load %arg2[%c104_259, %c0_260] : memref<128x2xf32, #tpu.memory_space<vmem>>, vector<8x1xf32>
    %537 = vector.broadcast %536 : vector<8x1xf32> to vector<8x512xf32>
    %538 = vector.broadcast %298 : vector<1x512xf32> to vector<8x512xf32>
    %539 = arith.mulf %537, %538 : vector<8x512xf32>
    %540 = vector.broadcast %535 : vector<8x1xf32> to vector<8x512xf32>
    %541 = arith.addf %540, %539 : vector<8x512xf32>
    %c104_261 = arith.constant 104 : index
    %c1_262 = arith.constant 1 : index
    %542 = vector.load %arg2[%c104_261, %c1_262] : memref<128x2xf32, #tpu.memory_space<vmem>>, vector<8x1xf32>
    %543 = vector.broadcast %542 : vector<8x1xf32> to vector<8x512xf32>
    %544 = vector.broadcast %299 : vector<1x512xf32> to vector<8x512xf32>
    %545 = arith.mulf %543, %544 : vector<8x512xf32>
    %546 = arith.addf %541, %545 : vector<8x512xf32>
    %cst_263 = arith.constant 0.000000e+00 : f32
    %547 = vector.broadcast %cst_263 : f32 to vector<8x512xf32>
    %548 = arith.maximumf %546, %547 : vector<8x512xf32>
    %c104_264 = arith.constant 104 : index
    %c0_265 = arith.constant 0 : index
    %549 = vector.load %arg4[%c104_264, %c0_265] : memref<128x1xf32, #tpu.memory_space<vmem>>, vector<8x1xf32>
    %550 = vector.broadcast %549 : vector<8x1xf32> to vector<8x512xf32>
    %551 = arith.mulf %548, %550 : vector<8x512xf32>
    %552 = arith.addf %534, %551 : vector<8x512xf32>
    %c112_266 = arith.constant 112 : index
    %c0_267 = arith.constant 0 : index
    %553 = vector.load %arg3[%c112_266, %c0_267] : memref<128x1xf32, #tpu.memory_space<vmem>>, vector<8x1xf32>
    %c112_268 = arith.constant 112 : index
    %c0_269 = arith.constant 0 : index
    %554 = vector.load %arg2[%c112_268, %c0_269] : memref<128x2xf32, #tpu.memory_space<vmem>>, vector<8x1xf32>
    %555 = vector.broadcast %554 : vector<8x1xf32> to vector<8x512xf32>
    %556 = vector.broadcast %298 : vector<1x512xf32> to vector<8x512xf32>
    %557 = arith.mulf %555, %556 : vector<8x512xf32>
    %558 = vector.broadcast %553 : vector<8x1xf32> to vector<8x512xf32>
    %559 = arith.addf %558, %557 : vector<8x512xf32>
    %c112_270 = arith.constant 112 : index
    %c1_271 = arith.constant 1 : index
    %560 = vector.load %arg2[%c112_270, %c1_271] : memref<128x2xf32, #tpu.memory_space<vmem>>, vector<8x1xf32>
    %561 = vector.broadcast %560 : vector<8x1xf32> to vector<8x512xf32>
    %562 = vector.broadcast %299 : vector<1x512xf32> to vector<8x512xf32>
    %563 = arith.mulf %561, %562 : vector<8x512xf32>
    %564 = arith.addf %559, %563 : vector<8x512xf32>
    %cst_272 = arith.constant 0.000000e+00 : f32
    %565 = vector.broadcast %cst_272 : f32 to vector<8x512xf32>
    %566 = arith.maximumf %564, %565 : vector<8x512xf32>
    %c112_273 = arith.constant 112 : index
    %c0_274 = arith.constant 0 : index
    %567 = vector.load %arg4[%c112_273, %c0_274] : memref<128x1xf32, #tpu.memory_space<vmem>>, vector<8x1xf32>
    %568 = vector.broadcast %567 : vector<8x1xf32> to vector<8x512xf32>
    %569 = arith.mulf %566, %568 : vector<8x512xf32>
    %570 = arith.addf %552, %569 : vector<8x512xf32>
    %c120_275 = arith.constant 120 : index
    %c0_276 = arith.constant 0 : index
    %571 = vector.load %arg3[%c120_275, %c0_276] : memref<128x1xf32, #tpu.memory_space<vmem>>, vector<8x1xf32>
    %c120_277 = arith.constant 120 : index
    %c0_278 = arith.constant 0 : index
    %572 = vector.load %arg2[%c120_277, %c0_278] : memref<128x2xf32, #tpu.memory_space<vmem>>, vector<8x1xf32>
    %573 = vector.broadcast %572 : vector<8x1xf32> to vector<8x512xf32>
    %574 = vector.broadcast %298 : vector<1x512xf32> to vector<8x512xf32>
    %575 = arith.mulf %573, %574 : vector<8x512xf32>
    %576 = vector.broadcast %571 : vector<8x1xf32> to vector<8x512xf32>
    %577 = arith.addf %576, %575 : vector<8x512xf32>
    %c120_279 = arith.constant 120 : index
    %c1_280 = arith.constant 1 : index
    %578 = vector.load %arg2[%c120_279, %c1_280] : memref<128x2xf32, #tpu.memory_space<vmem>>, vector<8x1xf32>
    %579 = vector.broadcast %578 : vector<8x1xf32> to vector<8x512xf32>
    %580 = vector.broadcast %299 : vector<1x512xf32> to vector<8x512xf32>
    %581 = arith.mulf %579, %580 : vector<8x512xf32>
    %582 = arith.addf %577, %581 : vector<8x512xf32>
    %cst_281 = arith.constant 0.000000e+00 : f32
    %583 = vector.broadcast %cst_281 : f32 to vector<8x512xf32>
    %584 = arith.maximumf %582, %583 : vector<8x512xf32>
    %c120_282 = arith.constant 120 : index
    %c0_283 = arith.constant 0 : index
    %585 = vector.load %arg4[%c120_282, %c0_283] : memref<128x1xf32, #tpu.memory_space<vmem>>, vector<8x1xf32>
    %586 = vector.broadcast %585 : vector<8x1xf32> to vector<8x512xf32>
    %587 = arith.mulf %584, %586 : vector<8x512xf32>
    %588 = arith.addf %570, %587 : vector<8x512xf32>
    %cst_284 = arith.constant dense<0.000000e+00> : vector<512xf32>
    %589 = vector.multi_reduction <add>, %588, %cst_284 [0] : vector<8x512xf32> to vector<512xf32>
    %590 = vector.shape_cast %589 : vector<512xf32> to vector<1x512xf32>
    %591 = vector.broadcast %0 : f32 to vector<1x512xf32>
    %592 = arith.addf %590, %591 : vector<1x512xf32>
    %593 = math.tanh %592 : vector<1x512xf32>
    %c0_285 = arith.constant 0 : index
    %c512_286 = arith.constant 512 : index
    %594 = vector.load %arg6[%c0_285, %c512_286] : memref<1x2048xf32, #tpu.memory_space<vmem>>, vector<1x512xf32>
    tpu.vector_store %arg6[%c0_285, %c512_286], %593 {strides = array<i32>} : memref<1x2048xf32, #tpu.memory_space<vmem>>, vector<1x512xf32>,
    %c0_287 = arith.constant 0 : index
    %c1024 = arith.constant 1024 : index
    %595 = vector.load %arg1[%c0_287, %c1024] : memref<2x2048xf32, #tpu.memory_space<vmem>>, vector<1x512xf32>
    %c1_288 = arith.constant 1 : index
    %c1024_289 = arith.constant 1024 : index
    %596 = vector.load %arg1[%c1_288, %c1024_289] : memref<2x2048xf32, #tpu.memory_space<vmem>>, vector<1x512xf32>
    %cst_290 = arith.constant 0.000000e+00 : f32
    %597 = vector.broadcast %cst_290 : f32 to vector<8x512xf32>
    %c0_291 = arith.constant 0 : index
    %c0_292 = arith.constant 0 : index
    %598 = vector.load %arg3[%c0_291, %c0_292] : memref<128x1xf32, #tpu.memory_space<vmem>>, vector<8x1xf32>
    %c0_293 = arith.constant 0 : index
    %c0_294 = arith.constant 0 : index
    %599 = vector.load %arg2[%c0_293, %c0_294] : memref<128x2xf32, #tpu.memory_space<vmem>>, vector<8x1xf32>
    %600 = vector.broadcast %599 : vector<8x1xf32> to vector<8x512xf32>
    %601 = vector.broadcast %595 : vector<1x512xf32> to vector<8x512xf32>
    %602 = arith.mulf %600, %601 : vector<8x512xf32>
    %603 = vector.broadcast %598 : vector<8x1xf32> to vector<8x512xf32>
    %604 = arith.addf %603, %602 : vector<8x512xf32>
    %c0_295 = arith.constant 0 : index
    %c1_296 = arith.constant 1 : index
    %605 = vector.load %arg2[%c0_295, %c1_296] : memref<128x2xf32, #tpu.memory_space<vmem>>, vector<8x1xf32>
    %606 = vector.broadcast %605 : vector<8x1xf32> to vector<8x512xf32>
    %607 = vector.broadcast %596 : vector<1x512xf32> to vector<8x512xf32>
    %608 = arith.mulf %606, %607 : vector<8x512xf32>
    %609 = arith.addf %604, %608 : vector<8x512xf32>
    %cst_297 = arith.constant 0.000000e+00 : f32
    %610 = vector.broadcast %cst_297 : f32 to vector<8x512xf32>
    %611 = arith.maximumf %609, %610 : vector<8x512xf32>
    %c0_298 = arith.constant 0 : index
    %c0_299 = arith.constant 0 : index
    %612 = vector.load %arg4[%c0_298, %c0_299] : memref<128x1xf32, #tpu.memory_space<vmem>>, vector<8x1xf32>
    %613 = vector.broadcast %612 : vector<8x1xf32> to vector<8x512xf32>
    %614 = arith.mulf %611, %613 : vector<8x512xf32>
    %615 = arith.addf %597, %614 : vector<8x512xf32>
    %c8_300 = arith.constant 8 : index
    %c0_301 = arith.constant 0 : index
    %616 = vector.load %arg3[%c8_300, %c0_301] : memref<128x1xf32, #tpu.memory_space<vmem>>, vector<8x1xf32>
    %c8_302 = arith.constant 8 : index
    %c0_303 = arith.constant 0 : index
    %617 = vector.load %arg2[%c8_302, %c0_303] : memref<128x2xf32, #tpu.memory_space<vmem>>, vector<8x1xf32>
    %618 = vector.broadcast %617 : vector<8x1xf32> to vector<8x512xf32>
    %619 = vector.broadcast %595 : vector<1x512xf32> to vector<8x512xf32>
    %620 = arith.mulf %618, %619 : vector<8x512xf32>
    %621 = vector.broadcast %616 : vector<8x1xf32> to vector<8x512xf32>
    %622 = arith.addf %621, %620 : vector<8x512xf32>
    %c8_304 = arith.constant 8 : index
    %c1_305 = arith.constant 1 : index
    %623 = vector.load %arg2[%c8_304, %c1_305] : memref<128x2xf32, #tpu.memory_space<vmem>>, vector<8x1xf32>
    %624 = vector.broadcast %623 : vector<8x1xf32> to vector<8x512xf32>
    %625 = vector.broadcast %596 : vector<1x512xf32> to vector<8x512xf32>
    %626 = arith.mulf %624, %625 : vector<8x512xf32>
    %627 = arith.addf %622, %626 : vector<8x512xf32>
    %cst_306 = arith.constant 0.000000e+00 : f32
    %628 = vector.broadcast %cst_306 : f32 to vector<8x512xf32>
    %629 = arith.maximumf %627, %628 : vector<8x512xf32>
    %c8_307 = arith.constant 8 : index
    %c0_308 = arith.constant 0 : index
    %630 = vector.load %arg4[%c8_307, %c0_308] : memref<128x1xf32, #tpu.memory_space<vmem>>, vector<8x1xf32>
    %631 = vector.broadcast %630 : vector<8x1xf32> to vector<8x512xf32>
    %632 = arith.mulf %629, %631 : vector<8x512xf32>
    %633 = arith.addf %615, %632 : vector<8x512xf32>
    %c16_309 = arith.constant 16 : index
    %c0_310 = arith.constant 0 : index
    %634 = vector.load %arg3[%c16_309, %c0_310] : memref<128x1xf32, #tpu.memory_space<vmem>>, vector<8x1xf32>
    %c16_311 = arith.constant 16 : index
    %c0_312 = arith.constant 0 : index
    %635 = vector.load %arg2[%c16_311, %c0_312] : memref<128x2xf32, #tpu.memory_space<vmem>>, vector<8x1xf32>
    %636 = vector.broadcast %635 : vector<8x1xf32> to vector<8x512xf32>
    %637 = vector.broadcast %595 : vector<1x512xf32> to vector<8x512xf32>
    %638 = arith.mulf %636, %637 : vector<8x512xf32>
    %639 = vector.broadcast %634 : vector<8x1xf32> to vector<8x512xf32>
    %640 = arith.addf %639, %638 : vector<8x512xf32>
    %c16_313 = arith.constant 16 : index
    %c1_314 = arith.constant 1 : index
    %641 = vector.load %arg2[%c16_313, %c1_314] : memref<128x2xf32, #tpu.memory_space<vmem>>, vector<8x1xf32>
    %642 = vector.broadcast %641 : vector<8x1xf32> to vector<8x512xf32>
    %643 = vector.broadcast %596 : vector<1x512xf32> to vector<8x512xf32>
    %644 = arith.mulf %642, %643 : vector<8x512xf32>
    %645 = arith.addf %640, %644 : vector<8x512xf32>
    %cst_315 = arith.constant 0.000000e+00 : f32
    %646 = vector.broadcast %cst_315 : f32 to vector<8x512xf32>
    %647 = arith.maximumf %645, %646 : vector<8x512xf32>
    %c16_316 = arith.constant 16 : index
    %c0_317 = arith.constant 0 : index
    %648 = vector.load %arg4[%c16_316, %c0_317] : memref<128x1xf32, #tpu.memory_space<vmem>>, vector<8x1xf32>
    %649 = vector.broadcast %648 : vector<8x1xf32> to vector<8x512xf32>
    %650 = arith.mulf %647, %649 : vector<8x512xf32>
    %651 = arith.addf %633, %650 : vector<8x512xf32>
    %c24_318 = arith.constant 24 : index
    %c0_319 = arith.constant 0 : index
    %652 = vector.load %arg3[%c24_318, %c0_319] : memref<128x1xf32, #tpu.memory_space<vmem>>, vector<8x1xf32>
    %c24_320 = arith.constant 24 : index
    %c0_321 = arith.constant 0 : index
    %653 = vector.load %arg2[%c24_320, %c0_321] : memref<128x2xf32, #tpu.memory_space<vmem>>, vector<8x1xf32>
    %654 = vector.broadcast %653 : vector<8x1xf32> to vector<8x512xf32>
    %655 = vector.broadcast %595 : vector<1x512xf32> to vector<8x512xf32>
    %656 = arith.mulf %654, %655 : vector<8x512xf32>
    %657 = vector.broadcast %652 : vector<8x1xf32> to vector<8x512xf32>
    %658 = arith.addf %657, %656 : vector<8x512xf32>
    %c24_322 = arith.constant 24 : index
    %c1_323 = arith.constant 1 : index
    %659 = vector.load %arg2[%c24_322, %c1_323] : memref<128x2xf32, #tpu.memory_space<vmem>>, vector<8x1xf32>
    %660 = vector.broadcast %659 : vector<8x1xf32> to vector<8x512xf32>
    %661 = vector.broadcast %596 : vector<1x512xf32> to vector<8x512xf32>
    %662 = arith.mulf %660, %661 : vector<8x512xf32>
    %663 = arith.addf %658, %662 : vector<8x512xf32>
    %cst_324 = arith.constant 0.000000e+00 : f32
    %664 = vector.broadcast %cst_324 : f32 to vector<8x512xf32>
    %665 = arith.maximumf %663, %664 : vector<8x512xf32>
    %c24_325 = arith.constant 24 : index
    %c0_326 = arith.constant 0 : index
    %666 = vector.load %arg4[%c24_325, %c0_326] : memref<128x1xf32, #tpu.memory_space<vmem>>, vector<8x1xf32>
    %667 = vector.broadcast %666 : vector<8x1xf32> to vector<8x512xf32>
    %668 = arith.mulf %665, %667 : vector<8x512xf32>
    %669 = arith.addf %651, %668 : vector<8x512xf32>
    %c32_327 = arith.constant 32 : index
    %c0_328 = arith.constant 0 : index
    %670 = vector.load %arg3[%c32_327, %c0_328] : memref<128x1xf32, #tpu.memory_space<vmem>>, vector<8x1xf32>
    %c32_329 = arith.constant 32 : index
    %c0_330 = arith.constant 0 : index
    %671 = vector.load %arg2[%c32_329, %c0_330] : memref<128x2xf32, #tpu.memory_space<vmem>>, vector<8x1xf32>
    %672 = vector.broadcast %671 : vector<8x1xf32> to vector<8x512xf32>
    %673 = vector.broadcast %595 : vector<1x512xf32> to vector<8x512xf32>
    %674 = arith.mulf %672, %673 : vector<8x512xf32>
    %675 = vector.broadcast %670 : vector<8x1xf32> to vector<8x512xf32>
    %676 = arith.addf %675, %674 : vector<8x512xf32>
    %c32_331 = arith.constant 32 : index
    %c1_332 = arith.constant 1 : index
    %677 = vector.load %arg2[%c32_331, %c1_332] : memref<128x2xf32, #tpu.memory_space<vmem>>, vector<8x1xf32>
    %678 = vector.broadcast %677 : vector<8x1xf32> to vector<8x512xf32>
    %679 = vector.broadcast %596 : vector<1x512xf32> to vector<8x512xf32>
    %680 = arith.mulf %678, %679 : vector<8x512xf32>
    %681 = arith.addf %676, %680 : vector<8x512xf32>
    %cst_333 = arith.constant 0.000000e+00 : f32
    %682 = vector.broadcast %cst_333 : f32 to vector<8x512xf32>
    %683 = arith.maximumf %681, %682 : vector<8x512xf32>
    %c32_334 = arith.constant 32 : index
    %c0_335 = arith.constant 0 : index
    %684 = vector.load %arg4[%c32_334, %c0_335] : memref<128x1xf32, #tpu.memory_space<vmem>>, vector<8x1xf32>
    %685 = vector.broadcast %684 : vector<8x1xf32> to vector<8x512xf32>
    %686 = arith.mulf %683, %685 : vector<8x512xf32>
    %687 = arith.addf %669, %686 : vector<8x512xf32>
    %c40_336 = arith.constant 40 : index
    %c0_337 = arith.constant 0 : index
    %688 = vector.load %arg3[%c40_336, %c0_337] : memref<128x1xf32, #tpu.memory_space<vmem>>, vector<8x1xf32>
    %c40_338 = arith.constant 40 : index
    %c0_339 = arith.constant 0 : index
    %689 = vector.load %arg2[%c40_338, %c0_339] : memref<128x2xf32, #tpu.memory_space<vmem>>, vector<8x1xf32>
    %690 = vector.broadcast %689 : vector<8x1xf32> to vector<8x512xf32>
    %691 = vector.broadcast %595 : vector<1x512xf32> to vector<8x512xf32>
    %692 = arith.mulf %690, %691 : vector<8x512xf32>
    %693 = vector.broadcast %688 : vector<8x1xf32> to vector<8x512xf32>
    %694 = arith.addf %693, %692 : vector<8x512xf32>
    %c40_340 = arith.constant 40 : index
    %c1_341 = arith.constant 1 : index
    %695 = vector.load %arg2[%c40_340, %c1_341] : memref<128x2xf32, #tpu.memory_space<vmem>>, vector<8x1xf32>
    %696 = vector.broadcast %695 : vector<8x1xf32> to vector<8x512xf32>
    %697 = vector.broadcast %596 : vector<1x512xf32> to vector<8x512xf32>
    %698 = arith.mulf %696, %697 : vector<8x512xf32>
    %699 = arith.addf %694, %698 : vector<8x512xf32>
    %cst_342 = arith.constant 0.000000e+00 : f32
    %700 = vector.broadcast %cst_342 : f32 to vector<8x512xf32>
    %701 = arith.maximumf %699, %700 : vector<8x512xf32>
    %c40_343 = arith.constant 40 : index
    %c0_344 = arith.constant 0 : index
    %702 = vector.load %arg4[%c40_343, %c0_344] : memref<128x1xf32, #tpu.memory_space<vmem>>, vector<8x1xf32>
    %703 = vector.broadcast %702 : vector<8x1xf32> to vector<8x512xf32>
    %704 = arith.mulf %701, %703 : vector<8x512xf32>
    %705 = arith.addf %687, %704 : vector<8x512xf32>
    %c48_345 = arith.constant 48 : index
    %c0_346 = arith.constant 0 : index
    %706 = vector.load %arg3[%c48_345, %c0_346] : memref<128x1xf32, #tpu.memory_space<vmem>>, vector<8x1xf32>
    %c48_347 = arith.constant 48 : index
    %c0_348 = arith.constant 0 : index
    %707 = vector.load %arg2[%c48_347, %c0_348] : memref<128x2xf32, #tpu.memory_space<vmem>>, vector<8x1xf32>
    %708 = vector.broadcast %707 : vector<8x1xf32> to vector<8x512xf32>
    %709 = vector.broadcast %595 : vector<1x512xf32> to vector<8x512xf32>
    %710 = arith.mulf %708, %709 : vector<8x512xf32>
    %711 = vector.broadcast %706 : vector<8x1xf32> to vector<8x512xf32>
    %712 = arith.addf %711, %710 : vector<8x512xf32>
    %c48_349 = arith.constant 48 : index
    %c1_350 = arith.constant 1 : index
    %713 = vector.load %arg2[%c48_349, %c1_350] : memref<128x2xf32, #tpu.memory_space<vmem>>, vector<8x1xf32>
    %714 = vector.broadcast %713 : vector<8x1xf32> to vector<8x512xf32>
    %715 = vector.broadcast %596 : vector<1x512xf32> to vector<8x512xf32>
    %716 = arith.mulf %714, %715 : vector<8x512xf32>
    %717 = arith.addf %712, %716 : vector<8x512xf32>
    %cst_351 = arith.constant 0.000000e+00 : f32
    %718 = vector.broadcast %cst_351 : f32 to vector<8x512xf32>
    %719 = arith.maximumf %717, %718 : vector<8x512xf32>
    %c48_352 = arith.constant 48 : index
    %c0_353 = arith.constant 0 : index
    %720 = vector.load %arg4[%c48_352, %c0_353] : memref<128x1xf32, #tpu.memory_space<vmem>>, vector<8x1xf32>
    %721 = vector.broadcast %720 : vector<8x1xf32> to vector<8x512xf32>
    %722 = arith.mulf %719, %721 : vector<8x512xf32>
    %723 = arith.addf %705, %722 : vector<8x512xf32>
    %c56_354 = arith.constant 56 : index
    %c0_355 = arith.constant 0 : index
    %724 = vector.load %arg3[%c56_354, %c0_355] : memref<128x1xf32, #tpu.memory_space<vmem>>, vector<8x1xf32>
    %c56_356 = arith.constant 56 : index
    %c0_357 = arith.constant 0 : index
    %725 = vector.load %arg2[%c56_356, %c0_357] : memref<128x2xf32, #tpu.memory_space<vmem>>, vector<8x1xf32>
    %726 = vector.broadcast %725 : vector<8x1xf32> to vector<8x512xf32>
    %727 = vector.broadcast %595 : vector<1x512xf32> to vector<8x512xf32>
    %728 = arith.mulf %726, %727 : vector<8x512xf32>
    %729 = vector.broadcast %724 : vector<8x1xf32> to vector<8x512xf32>
    %730 = arith.addf %729, %728 : vector<8x512xf32>
    %c56_358 = arith.constant 56 : index
    %c1_359 = arith.constant 1 : index
    %731 = vector.load %arg2[%c56_358, %c1_359] : memref<128x2xf32, #tpu.memory_space<vmem>>, vector<8x1xf32>
    %732 = vector.broadcast %731 : vector<8x1xf32> to vector<8x512xf32>
    %733 = vector.broadcast %596 : vector<1x512xf32> to vector<8x512xf32>
    %734 = arith.mulf %732, %733 : vector<8x512xf32>
    %735 = arith.addf %730, %734 : vector<8x512xf32>
    %cst_360 = arith.constant 0.000000e+00 : f32
    %736 = vector.broadcast %cst_360 : f32 to vector<8x512xf32>
    %737 = arith.maximumf %735, %736 : vector<8x512xf32>
    %c56_361 = arith.constant 56 : index
    %c0_362 = arith.constant 0 : index
    %738 = vector.load %arg4[%c56_361, %c0_362] : memref<128x1xf32, #tpu.memory_space<vmem>>, vector<8x1xf32>
    %739 = vector.broadcast %738 : vector<8x1xf32> to vector<8x512xf32>
    %740 = arith.mulf %737, %739 : vector<8x512xf32>
    %741 = arith.addf %723, %740 : vector<8x512xf32>
    %c64_363 = arith.constant 64 : index
    %c0_364 = arith.constant 0 : index
    %742 = vector.load %arg3[%c64_363, %c0_364] : memref<128x1xf32, #tpu.memory_space<vmem>>, vector<8x1xf32>
    %c64_365 = arith.constant 64 : index
    %c0_366 = arith.constant 0 : index
    %743 = vector.load %arg2[%c64_365, %c0_366] : memref<128x2xf32, #tpu.memory_space<vmem>>, vector<8x1xf32>
    %744 = vector.broadcast %743 : vector<8x1xf32> to vector<8x512xf32>
    %745 = vector.broadcast %595 : vector<1x512xf32> to vector<8x512xf32>
    %746 = arith.mulf %744, %745 : vector<8x512xf32>
    %747 = vector.broadcast %742 : vector<8x1xf32> to vector<8x512xf32>
    %748 = arith.addf %747, %746 : vector<8x512xf32>
    %c64_367 = arith.constant 64 : index
    %c1_368 = arith.constant 1 : index
    %749 = vector.load %arg2[%c64_367, %c1_368] : memref<128x2xf32, #tpu.memory_space<vmem>>, vector<8x1xf32>
    %750 = vector.broadcast %749 : vector<8x1xf32> to vector<8x512xf32>
    %751 = vector.broadcast %596 : vector<1x512xf32> to vector<8x512xf32>
    %752 = arith.mulf %750, %751 : vector<8x512xf32>
    %753 = arith.addf %748, %752 : vector<8x512xf32>
    %cst_369 = arith.constant 0.000000e+00 : f32
    %754 = vector.broadcast %cst_369 : f32 to vector<8x512xf32>
    %755 = arith.maximumf %753, %754 : vector<8x512xf32>
    %c64_370 = arith.constant 64 : index
    %c0_371 = arith.constant 0 : index
    %756 = vector.load %arg4[%c64_370, %c0_371] : memref<128x1xf32, #tpu.memory_space<vmem>>, vector<8x1xf32>
    %757 = vector.broadcast %756 : vector<8x1xf32> to vector<8x512xf32>
    %758 = arith.mulf %755, %757 : vector<8x512xf32>
    %759 = arith.addf %741, %758 : vector<8x512xf32>
    %c72_372 = arith.constant 72 : index
    %c0_373 = arith.constant 0 : index
    %760 = vector.load %arg3[%c72_372, %c0_373] : memref<128x1xf32, #tpu.memory_space<vmem>>, vector<8x1xf32>
    %c72_374 = arith.constant 72 : index
    %c0_375 = arith.constant 0 : index
    %761 = vector.load %arg2[%c72_374, %c0_375] : memref<128x2xf32, #tpu.memory_space<vmem>>, vector<8x1xf32>
    %762 = vector.broadcast %761 : vector<8x1xf32> to vector<8x512xf32>
    %763 = vector.broadcast %595 : vector<1x512xf32> to vector<8x512xf32>
    %764 = arith.mulf %762, %763 : vector<8x512xf32>
    %765 = vector.broadcast %760 : vector<8x1xf32> to vector<8x512xf32>
    %766 = arith.addf %765, %764 : vector<8x512xf32>
    %c72_376 = arith.constant 72 : index
    %c1_377 = arith.constant 1 : index
    %767 = vector.load %arg2[%c72_376, %c1_377] : memref<128x2xf32, #tpu.memory_space<vmem>>, vector<8x1xf32>
    %768 = vector.broadcast %767 : vector<8x1xf32> to vector<8x512xf32>
    %769 = vector.broadcast %596 : vector<1x512xf32> to vector<8x512xf32>
    %770 = arith.mulf %768, %769 : vector<8x512xf32>
    %771 = arith.addf %766, %770 : vector<8x512xf32>
    %cst_378 = arith.constant 0.000000e+00 : f32
    %772 = vector.broadcast %cst_378 : f32 to vector<8x512xf32>
    %773 = arith.maximumf %771, %772 : vector<8x512xf32>
    %c72_379 = arith.constant 72 : index
    %c0_380 = arith.constant 0 : index
    %774 = vector.load %arg4[%c72_379, %c0_380] : memref<128x1xf32, #tpu.memory_space<vmem>>, vector<8x1xf32>
    %775 = vector.broadcast %774 : vector<8x1xf32> to vector<8x512xf32>
    %776 = arith.mulf %773, %775 : vector<8x512xf32>
    %777 = arith.addf %759, %776 : vector<8x512xf32>
    %c80_381 = arith.constant 80 : index
    %c0_382 = arith.constant 0 : index
    %778 = vector.load %arg3[%c80_381, %c0_382] : memref<128x1xf32, #tpu.memory_space<vmem>>, vector<8x1xf32>
    %c80_383 = arith.constant 80 : index
    %c0_384 = arith.constant 0 : index
    %779 = vector.load %arg2[%c80_383, %c0_384] : memref<128x2xf32, #tpu.memory_space<vmem>>, vector<8x1xf32>
    %780 = vector.broadcast %779 : vector<8x1xf32> to vector<8x512xf32>
    %781 = vector.broadcast %595 : vector<1x512xf32> to vector<8x512xf32>
    %782 = arith.mulf %780, %781 : vector<8x512xf32>
    %783 = vector.broadcast %778 : vector<8x1xf32> to vector<8x512xf32>
    %784 = arith.addf %783, %782 : vector<8x512xf32>
    %c80_385 = arith.constant 80 : index
    %c1_386 = arith.constant 1 : index
    %785 = vector.load %arg2[%c80_385, %c1_386] : memref<128x2xf32, #tpu.memory_space<vmem>>, vector<8x1xf32>
    %786 = vector.broadcast %785 : vector<8x1xf32> to vector<8x512xf32>
    %787 = vector.broadcast %596 : vector<1x512xf32> to vector<8x512xf32>
    %788 = arith.mulf %786, %787 : vector<8x512xf32>
    %789 = arith.addf %784, %788 : vector<8x512xf32>
    %cst_387 = arith.constant 0.000000e+00 : f32
    %790 = vector.broadcast %cst_387 : f32 to vector<8x512xf32>
    %791 = arith.maximumf %789, %790 : vector<8x512xf32>
    %c80_388 = arith.constant 80 : index
    %c0_389 = arith.constant 0 : index
    %792 = vector.load %arg4[%c80_388, %c0_389] : memref<128x1xf32, #tpu.memory_space<vmem>>, vector<8x1xf32>
    %793 = vector.broadcast %792 : vector<8x1xf32> to vector<8x512xf32>
    %794 = arith.mulf %791, %793 : vector<8x512xf32>
    %795 = arith.addf %777, %794 : vector<8x512xf32>
    %c88_390 = arith.constant 88 : index
    %c0_391 = arith.constant 0 : index
    %796 = vector.load %arg3[%c88_390, %c0_391] : memref<128x1xf32, #tpu.memory_space<vmem>>, vector<8x1xf32>
    %c88_392 = arith.constant 88 : index
    %c0_393 = arith.constant 0 : index
    %797 = vector.load %arg2[%c88_392, %c0_393] : memref<128x2xf32, #tpu.memory_space<vmem>>, vector<8x1xf32>
    %798 = vector.broadcast %797 : vector<8x1xf32> to vector<8x512xf32>
    %799 = vector.broadcast %595 : vector<1x512xf32> to vector<8x512xf32>
    %800 = arith.mulf %798, %799 : vector<8x512xf32>
    %801 = vector.broadcast %796 : vector<8x1xf32> to vector<8x512xf32>
    %802 = arith.addf %801, %800 : vector<8x512xf32>
    %c88_394 = arith.constant 88 : index
    %c1_395 = arith.constant 1 : index
    %803 = vector.load %arg2[%c88_394, %c1_395] : memref<128x2xf32, #tpu.memory_space<vmem>>, vector<8x1xf32>
    %804 = vector.broadcast %803 : vector<8x1xf32> to vector<8x512xf32>
    %805 = vector.broadcast %596 : vector<1x512xf32> to vector<8x512xf32>
    %806 = arith.mulf %804, %805 : vector<8x512xf32>
    %807 = arith.addf %802, %806 : vector<8x512xf32>
    %cst_396 = arith.constant 0.000000e+00 : f32
    %808 = vector.broadcast %cst_396 : f32 to vector<8x512xf32>
    %809 = arith.maximumf %807, %808 : vector<8x512xf32>
    %c88_397 = arith.constant 88 : index
    %c0_398 = arith.constant 0 : index
    %810 = vector.load %arg4[%c88_397, %c0_398] : memref<128x1xf32, #tpu.memory_space<vmem>>, vector<8x1xf32>
    %811 = vector.broadcast %810 : vector<8x1xf32> to vector<8x512xf32>
    %812 = arith.mulf %809, %811 : vector<8x512xf32>
    %813 = arith.addf %795, %812 : vector<8x512xf32>
    %c96_399 = arith.constant 96 : index
    %c0_400 = arith.constant 0 : index
    %814 = vector.load %arg3[%c96_399, %c0_400] : memref<128x1xf32, #tpu.memory_space<vmem>>, vector<8x1xf32>
    %c96_401 = arith.constant 96 : index
    %c0_402 = arith.constant 0 : index
    %815 = vector.load %arg2[%c96_401, %c0_402] : memref<128x2xf32, #tpu.memory_space<vmem>>, vector<8x1xf32>
    %816 = vector.broadcast %815 : vector<8x1xf32> to vector<8x512xf32>
    %817 = vector.broadcast %595 : vector<1x512xf32> to vector<8x512xf32>
    %818 = arith.mulf %816, %817 : vector<8x512xf32>
    %819 = vector.broadcast %814 : vector<8x1xf32> to vector<8x512xf32>
    %820 = arith.addf %819, %818 : vector<8x512xf32>
    %c96_403 = arith.constant 96 : index
    %c1_404 = arith.constant 1 : index
    %821 = vector.load %arg2[%c96_403, %c1_404] : memref<128x2xf32, #tpu.memory_space<vmem>>, vector<8x1xf32>
    %822 = vector.broadcast %821 : vector<8x1xf32> to vector<8x512xf32>
    %823 = vector.broadcast %596 : vector<1x512xf32> to vector<8x512xf32>
    %824 = arith.mulf %822, %823 : vector<8x512xf32>
    %825 = arith.addf %820, %824 : vector<8x512xf32>
    %cst_405 = arith.constant 0.000000e+00 : f32
    %826 = vector.broadcast %cst_405 : f32 to vector<8x512xf32>
    %827 = arith.maximumf %825, %826 : vector<8x512xf32>
    %c96_406 = arith.constant 96 : index
    %c0_407 = arith.constant 0 : index
    %828 = vector.load %arg4[%c96_406, %c0_407] : memref<128x1xf32, #tpu.memory_space<vmem>>, vector<8x1xf32>
    %829 = vector.broadcast %828 : vector<8x1xf32> to vector<8x512xf32>
    %830 = arith.mulf %827, %829 : vector<8x512xf32>
    %831 = arith.addf %813, %830 : vector<8x512xf32>
    %c104_408 = arith.constant 104 : index
    %c0_409 = arith.constant 0 : index
    %832 = vector.load %arg3[%c104_408, %c0_409] : memref<128x1xf32, #tpu.memory_space<vmem>>, vector<8x1xf32>
    %c104_410 = arith.constant 104 : index
    %c0_411 = arith.constant 0 : index
    %833 = vector.load %arg2[%c104_410, %c0_411] : memref<128x2xf32, #tpu.memory_space<vmem>>, vector<8x1xf32>
    %834 = vector.broadcast %833 : vector<8x1xf32> to vector<8x512xf32>
    %835 = vector.broadcast %595 : vector<1x512xf32> to vector<8x512xf32>
    %836 = arith.mulf %834, %835 : vector<8x512xf32>
    %837 = vector.broadcast %832 : vector<8x1xf32> to vector<8x512xf32>
    %838 = arith.addf %837, %836 : vector<8x512xf32>
    %c104_412 = arith.constant 104 : index
    %c1_413 = arith.constant 1 : index
    %839 = vector.load %arg2[%c104_412, %c1_413] : memref<128x2xf32, #tpu.memory_space<vmem>>, vector<8x1xf32>
    %840 = vector.broadcast %839 : vector<8x1xf32> to vector<8x512xf32>
    %841 = vector.broadcast %596 : vector<1x512xf32> to vector<8x512xf32>
    %842 = arith.mulf %840, %841 : vector<8x512xf32>
    %843 = arith.addf %838, %842 : vector<8x512xf32>
    %cst_414 = arith.constant 0.000000e+00 : f32
    %844 = vector.broadcast %cst_414 : f32 to vector<8x512xf32>
    %845 = arith.maximumf %843, %844 : vector<8x512xf32>
    %c104_415 = arith.constant 104 : index
    %c0_416 = arith.constant 0 : index
    %846 = vector.load %arg4[%c104_415, %c0_416] : memref<128x1xf32, #tpu.memory_space<vmem>>, vector<8x1xf32>
    %847 = vector.broadcast %846 : vector<8x1xf32> to vector<8x512xf32>
    %848 = arith.mulf %845, %847 : vector<8x512xf32>
    %849 = arith.addf %831, %848 : vector<8x512xf32>
    %c112_417 = arith.constant 112 : index
    %c0_418 = arith.constant 0 : index
    %850 = vector.load %arg3[%c112_417, %c0_418] : memref<128x1xf32, #tpu.memory_space<vmem>>, vector<8x1xf32>
    %c112_419 = arith.constant 112 : index
    %c0_420 = arith.constant 0 : index
    %851 = vector.load %arg2[%c112_419, %c0_420] : memref<128x2xf32, #tpu.memory_space<vmem>>, vector<8x1xf32>
    %852 = vector.broadcast %851 : vector<8x1xf32> to vector<8x512xf32>
    %853 = vector.broadcast %595 : vector<1x512xf32> to vector<8x512xf32>
    %854 = arith.mulf %852, %853 : vector<8x512xf32>
    %855 = vector.broadcast %850 : vector<8x1xf32> to vector<8x512xf32>
    %856 = arith.addf %855, %854 : vector<8x512xf32>
    %c112_421 = arith.constant 112 : index
    %c1_422 = arith.constant 1 : index
    %857 = vector.load %arg2[%c112_421, %c1_422] : memref<128x2xf32, #tpu.memory_space<vmem>>, vector<8x1xf32>
    %858 = vector.broadcast %857 : vector<8x1xf32> to vector<8x512xf32>
    %859 = vector.broadcast %596 : vector<1x512xf32> to vector<8x512xf32>
    %860 = arith.mulf %858, %859 : vector<8x512xf32>
    %861 = arith.addf %856, %860 : vector<8x512xf32>
    %cst_423 = arith.constant 0.000000e+00 : f32
    %862 = vector.broadcast %cst_423 : f32 to vector<8x512xf32>
    %863 = arith.maximumf %861, %862 : vector<8x512xf32>
    %c112_424 = arith.constant 112 : index
    %c0_425 = arith.constant 0 : index
    %864 = vector.load %arg4[%c112_424, %c0_425] : memref<128x1xf32, #tpu.memory_space<vmem>>, vector<8x1xf32>
    %865 = vector.broadcast %864 : vector<8x1xf32> to vector<8x512xf32>
    %866 = arith.mulf %863, %865 : vector<8x512xf32>
    %867 = arith.addf %849, %866 : vector<8x512xf32>
    %c120_426 = arith.constant 120 : index
    %c0_427 = arith.constant 0 : index
    %868 = vector.load %arg3[%c120_426, %c0_427] : memref<128x1xf32, #tpu.memory_space<vmem>>, vector<8x1xf32>
    %c120_428 = arith.constant 120 : index
    %c0_429 = arith.constant 0 : index
    %869 = vector.load %arg2[%c120_428, %c0_429] : memref<128x2xf32, #tpu.memory_space<vmem>>, vector<8x1xf32>
    %870 = vector.broadcast %869 : vector<8x1xf32> to vector<8x512xf32>
    %871 = vector.broadcast %595 : vector<1x512xf32> to vector<8x512xf32>
    %872 = arith.mulf %870, %871 : vector<8x512xf32>
    %873 = vector.broadcast %868 : vector<8x1xf32> to vector<8x512xf32>
    %874 = arith.addf %873, %872 : vector<8x512xf32>
    %c120_430 = arith.constant 120 : index
    %c1_431 = arith.constant 1 : index
    %875 = vector.load %arg2[%c120_430, %c1_431] : memref<128x2xf32, #tpu.memory_space<vmem>>, vector<8x1xf32>
    %876 = vector.broadcast %875 : vector<8x1xf32> to vector<8x512xf32>
    %877 = vector.broadcast %596 : vector<1x512xf32> to vector<8x512xf32>
    %878 = arith.mulf %876, %877 : vector<8x512xf32>
    %879 = arith.addf %874, %878 : vector<8x512xf32>
    %cst_432 = arith.constant 0.000000e+00 : f32
    %880 = vector.broadcast %cst_432 : f32 to vector<8x512xf32>
    %881 = arith.maximumf %879, %880 : vector<8x512xf32>
    %c120_433 = arith.constant 120 : index
    %c0_434 = arith.constant 0 : index
    %882 = vector.load %arg4[%c120_433, %c0_434] : memref<128x1xf32, #tpu.memory_space<vmem>>, vector<8x1xf32>
    %883 = vector.broadcast %882 : vector<8x1xf32> to vector<8x512xf32>
    %884 = arith.mulf %881, %883 : vector<8x512xf32>
    %885 = arith.addf %867, %884 : vector<8x512xf32>
    %cst_435 = arith.constant dense<0.000000e+00> : vector<512xf32>
    %886 = vector.multi_reduction <add>, %885, %cst_435 [0] : vector<8x512xf32> to vector<512xf32>
    %887 = vector.shape_cast %886 : vector<512xf32> to vector<1x512xf32>
    %888 = vector.broadcast %0 : f32 to vector<1x512xf32>
    %889 = arith.addf %887, %888 : vector<1x512xf32>
    %890 = math.tanh %889 : vector<1x512xf32>
    %c0_436 = arith.constant 0 : index
    %c1024_437 = arith.constant 1024 : index
    %891 = vector.load %arg6[%c0_436, %c1024_437] : memref<1x2048xf32, #tpu.memory_space<vmem>>, vector<1x512xf32>
    tpu.vector_store %arg6[%c0_436, %c1024_437], %890 {strides = array<i32>} : memref<1x2048xf32, #tpu.memory_space<vmem>>, vector<1x512xf32>,
    %c0_438 = arith.constant 0 : index
    %c1536 = arith.constant 1536 : index
    %892 = vector.load %arg1[%c0_438, %c1536] : memref<2x2048xf32, #tpu.memory_space<vmem>>, vector<1x512xf32>
    %c1_439 = arith.constant 1 : index
    %c1536_440 = arith.constant 1536 : index
    %893 = vector.load %arg1[%c1_439, %c1536_440] : memref<2x2048xf32, #tpu.memory_space<vmem>>, vector<1x512xf32>
    %cst_441 = arith.constant 0.000000e+00 : f32
    %894 = vector.broadcast %cst_441 : f32 to vector<8x512xf32>
    %c0_442 = arith.constant 0 : index
    %c0_443 = arith.constant 0 : index
    %895 = vector.load %arg3[%c0_442, %c0_443] : memref<128x1xf32, #tpu.memory_space<vmem>>, vector<8x1xf32>
    %c0_444 = arith.constant 0 : index
    %c0_445 = arith.constant 0 : index
    %896 = vector.load %arg2[%c0_444, %c0_445] : memref<128x2xf32, #tpu.memory_space<vmem>>, vector<8x1xf32>
    %897 = vector.broadcast %896 : vector<8x1xf32> to vector<8x512xf32>
    %898 = vector.broadcast %892 : vector<1x512xf32> to vector<8x512xf32>
    %899 = arith.mulf %897, %898 : vector<8x512xf32>
    %900 = vector.broadcast %895 : vector<8x1xf32> to vector<8x512xf32>
    %901 = arith.addf %900, %899 : vector<8x512xf32>
    %c0_446 = arith.constant 0 : index
    %c1_447 = arith.constant 1 : index
    %902 = vector.load %arg2[%c0_446, %c1_447] : memref<128x2xf32, #tpu.memory_space<vmem>>, vector<8x1xf32>
    %903 = vector.broadcast %902 : vector<8x1xf32> to vector<8x512xf32>
    %904 = vector.broadcast %893 : vector<1x512xf32> to vector<8x512xf32>
    %905 = arith.mulf %903, %904 : vector<8x512xf32>
    %906 = arith.addf %901, %905 : vector<8x512xf32>
    %cst_448 = arith.constant 0.000000e+00 : f32
    %907 = vector.broadcast %cst_448 : f32 to vector<8x512xf32>
    %908 = arith.maximumf %906, %907 : vector<8x512xf32>
    %c0_449 = arith.constant 0 : index
    %c0_450 = arith.constant 0 : index
    %909 = vector.load %arg4[%c0_449, %c0_450] : memref<128x1xf32, #tpu.memory_space<vmem>>, vector<8x1xf32>
    %910 = vector.broadcast %909 : vector<8x1xf32> to vector<8x512xf32>
    %911 = arith.mulf %908, %910 : vector<8x512xf32>
    %912 = arith.addf %894, %911 : vector<8x512xf32>
    %c8_451 = arith.constant 8 : index
    %c0_452 = arith.constant 0 : index
    %913 = vector.load %arg3[%c8_451, %c0_452] : memref<128x1xf32, #tpu.memory_space<vmem>>, vector<8x1xf32>
    %c8_453 = arith.constant 8 : index
    %c0_454 = arith.constant 0 : index
    %914 = vector.load %arg2[%c8_453, %c0_454] : memref<128x2xf32, #tpu.memory_space<vmem>>, vector<8x1xf32>
    %915 = vector.broadcast %914 : vector<8x1xf32> to vector<8x512xf32>
    %916 = vector.broadcast %892 : vector<1x512xf32> to vector<8x512xf32>
    %917 = arith.mulf %915, %916 : vector<8x512xf32>
    %918 = vector.broadcast %913 : vector<8x1xf32> to vector<8x512xf32>
    %919 = arith.addf %918, %917 : vector<8x512xf32>
    %c8_455 = arith.constant 8 : index
    %c1_456 = arith.constant 1 : index
    %920 = vector.load %arg2[%c8_455, %c1_456] : memref<128x2xf32, #tpu.memory_space<vmem>>, vector<8x1xf32>
    %921 = vector.broadcast %920 : vector<8x1xf32> to vector<8x512xf32>
    %922 = vector.broadcast %893 : vector<1x512xf32> to vector<8x512xf32>
    %923 = arith.mulf %921, %922 : vector<8x512xf32>
    %924 = arith.addf %919, %923 : vector<8x512xf32>
    %cst_457 = arith.constant 0.000000e+00 : f32
    %925 = vector.broadcast %cst_457 : f32 to vector<8x512xf32>
    %926 = arith.maximumf %924, %925 : vector<8x512xf32>
    %c8_458 = arith.constant 8 : index
    %c0_459 = arith.constant 0 : index
    %927 = vector.load %arg4[%c8_458, %c0_459] : memref<128x1xf32, #tpu.memory_space<vmem>>, vector<8x1xf32>
    %928 = vector.broadcast %927 : vector<8x1xf32> to vector<8x512xf32>
    %929 = arith.mulf %926, %928 : vector<8x512xf32>
    %930 = arith.addf %912, %929 : vector<8x512xf32>
    %c16_460 = arith.constant 16 : index
    %c0_461 = arith.constant 0 : index
    %931 = vector.load %arg3[%c16_460, %c0_461] : memref<128x1xf32, #tpu.memory_space<vmem>>, vector<8x1xf32>
    %c16_462 = arith.constant 16 : index
    %c0_463 = arith.constant 0 : index
    %932 = vector.load %arg2[%c16_462, %c0_463] : memref<128x2xf32, #tpu.memory_space<vmem>>, vector<8x1xf32>
    %933 = vector.broadcast %932 : vector<8x1xf32> to vector<8x512xf32>
    %934 = vector.broadcast %892 : vector<1x512xf32> to vector<8x512xf32>
    %935 = arith.mulf %933, %934 : vector<8x512xf32>
    %936 = vector.broadcast %931 : vector<8x1xf32> to vector<8x512xf32>
    %937 = arith.addf %936, %935 : vector<8x512xf32>
    %c16_464 = arith.constant 16 : index
    %c1_465 = arith.constant 1 : index
    %938 = vector.load %arg2[%c16_464, %c1_465] : memref<128x2xf32, #tpu.memory_space<vmem>>, vector<8x1xf32>
    %939 = vector.broadcast %938 : vector<8x1xf32> to vector<8x512xf32>
    %940 = vector.broadcast %893 : vector<1x512xf32> to vector<8x512xf32>
    %941 = arith.mulf %939, %940 : vector<8x512xf32>
    %942 = arith.addf %937, %941 : vector<8x512xf32>
    %cst_466 = arith.constant 0.000000e+00 : f32
    %943 = vector.broadcast %cst_466 : f32 to vector<8x512xf32>
    %944 = arith.maximumf %942, %943 : vector<8x512xf32>
    %c16_467 = arith.constant 16 : index
    %c0_468 = arith.constant 0 : index
    %945 = vector.load %arg4[%c16_467, %c0_468] : memref<128x1xf32, #tpu.memory_space<vmem>>, vector<8x1xf32>
    %946 = vector.broadcast %945 : vector<8x1xf32> to vector<8x512xf32>
    %947 = arith.mulf %944, %946 : vector<8x512xf32>
    %948 = arith.addf %930, %947 : vector<8x512xf32>
    %c24_469 = arith.constant 24 : index
    %c0_470 = arith.constant 0 : index
    %949 = vector.load %arg3[%c24_469, %c0_470] : memref<128x1xf32, #tpu.memory_space<vmem>>, vector<8x1xf32>
    %c24_471 = arith.constant 24 : index
    %c0_472 = arith.constant 0 : index
    %950 = vector.load %arg2[%c24_471, %c0_472] : memref<128x2xf32, #tpu.memory_space<vmem>>, vector<8x1xf32>
    %951 = vector.broadcast %950 : vector<8x1xf32> to vector<8x512xf32>
    %952 = vector.broadcast %892 : vector<1x512xf32> to vector<8x512xf32>
    %953 = arith.mulf %951, %952 : vector<8x512xf32>
    %954 = vector.broadcast %949 : vector<8x1xf32> to vector<8x512xf32>
    %955 = arith.addf %954, %953 : vector<8x512xf32>
    %c24_473 = arith.constant 24 : index
    %c1_474 = arith.constant 1 : index
    %956 = vector.load %arg2[%c24_473, %c1_474] : memref<128x2xf32, #tpu.memory_space<vmem>>, vector<8x1xf32>
    %957 = vector.broadcast %956 : vector<8x1xf32> to vector<8x512xf32>
    %958 = vector.broadcast %893 : vector<1x512xf32> to vector<8x512xf32>
    %959 = arith.mulf %957, %958 : vector<8x512xf32>
    %960 = arith.addf %955, %959 : vector<8x512xf32>
    %cst_475 = arith.constant 0.000000e+00 : f32
    %961 = vector.broadcast %cst_475 : f32 to vector<8x512xf32>
    %962 = arith.maximumf %960, %961 : vector<8x512xf32>
    %c24_476 = arith.constant 24 : index
    %c0_477 = arith.constant 0 : index
    %963 = vector.load %arg4[%c24_476, %c0_477] : memref<128x1xf32, #tpu.memory_space<vmem>>, vector<8x1xf32>
    %964 = vector.broadcast %963 : vector<8x1xf32> to vector<8x512xf32>
    %965 = arith.mulf %962, %964 : vector<8x512xf32>
    %966 = arith.addf %948, %965 : vector<8x512xf32>
    %c32_478 = arith.constant 32 : index
    %c0_479 = arith.constant 0 : index
    %967 = vector.load %arg3[%c32_478, %c0_479] : memref<128x1xf32, #tpu.memory_space<vmem>>, vector<8x1xf32>
    %c32_480 = arith.constant 32 : index
    %c0_481 = arith.constant 0 : index
    %968 = vector.load %arg2[%c32_480, %c0_481] : memref<128x2xf32, #tpu.memory_space<vmem>>, vector<8x1xf32>
    %969 = vector.broadcast %968 : vector<8x1xf32> to vector<8x512xf32>
    %970 = vector.broadcast %892 : vector<1x512xf32> to vector<8x512xf32>
    %971 = arith.mulf %969, %970 : vector<8x512xf32>
    %972 = vector.broadcast %967 : vector<8x1xf32> to vector<8x512xf32>
    %973 = arith.addf %972, %971 : vector<8x512xf32>
    %c32_482 = arith.constant 32 : index
    %c1_483 = arith.constant 1 : index
    %974 = vector.load %arg2[%c32_482, %c1_483] : memref<128x2xf32, #tpu.memory_space<vmem>>, vector<8x1xf32>
    %975 = vector.broadcast %974 : vector<8x1xf32> to vector<8x512xf32>
    %976 = vector.broadcast %893 : vector<1x512xf32> to vector<8x512xf32>
    %977 = arith.mulf %975, %976 : vector<8x512xf32>
    %978 = arith.addf %973, %977 : vector<8x512xf32>
    %cst_484 = arith.constant 0.000000e+00 : f32
    %979 = vector.broadcast %cst_484 : f32 to vector<8x512xf32>
    %980 = arith.maximumf %978, %979 : vector<8x512xf32>
    %c32_485 = arith.constant 32 : index
    %c0_486 = arith.constant 0 : index
    %981 = vector.load %arg4[%c32_485, %c0_486] : memref<128x1xf32, #tpu.memory_space<vmem>>, vector<8x1xf32>
    %982 = vector.broadcast %981 : vector<8x1xf32> to vector<8x512xf32>
    %983 = arith.mulf %980, %982 : vector<8x512xf32>
    %984 = arith.addf %966, %983 : vector<8x512xf32>
    %c40_487 = arith.constant 40 : index
    %c0_488 = arith.constant 0 : index
    %985 = vector.load %arg3[%c40_487, %c0_488] : memref<128x1xf32, #tpu.memory_space<vmem>>, vector<8x1xf32>
    %c40_489 = arith.constant 40 : index
    %c0_490 = arith.constant 0 : index
    %986 = vector.load %arg2[%c40_489, %c0_490] : memref<128x2xf32, #tpu.memory_space<vmem>>, vector<8x1xf32>
    %987 = vector.broadcast %986 : vector<8x1xf32> to vector<8x512xf32>
    %988 = vector.broadcast %892 : vector<1x512xf32> to vector<8x512xf32>
    %989 = arith.mulf %987, %988 : vector<8x512xf32>
    %990 = vector.broadcast %985 : vector<8x1xf32> to vector<8x512xf32>
    %991 = arith.addf %990, %989 : vector<8x512xf32>
    %c40_491 = arith.constant 40 : index
    %c1_492 = arith.constant 1 : index
    %992 = vector.load %arg2[%c40_491, %c1_492] : memref<128x2xf32, #tpu.memory_space<vmem>>, vector<8x1xf32>
    %993 = vector.broadcast %992 : vector<8x1xf32> to vector<8x512xf32>
    %994 = vector.broadcast %893 : vector<1x512xf32> to vector<8x512xf32>
    %995 = arith.mulf %993, %994 : vector<8x512xf32>
    %996 = arith.addf %991, %995 : vector<8x512xf32>
    %cst_493 = arith.constant 0.000000e+00 : f32
    %997 = vector.broadcast %cst_493 : f32 to vector<8x512xf32>
    %998 = arith.maximumf %996, %997 : vector<8x512xf32>
    %c40_494 = arith.constant 40 : index
    %c0_495 = arith.constant 0 : index
    %999 = vector.load %arg4[%c40_494, %c0_495] : memref<128x1xf32, #tpu.memory_space<vmem>>, vector<8x1xf32>
    %1000 = vector.broadcast %999 : vector<8x1xf32> to vector<8x512xf32>
    %1001 = arith.mulf %998, %1000 : vector<8x512xf32>
    %1002 = arith.addf %984, %1001 : vector<8x512xf32>
    %c48_496 = arith.constant 48 : index
    %c0_497 = arith.constant 0 : index
    %1003 = vector.load %arg3[%c48_496, %c0_497] : memref<128x1xf32, #tpu.memory_space<vmem>>, vector<8x1xf32>
    %c48_498 = arith.constant 48 : index
    %c0_499 = arith.constant 0 : index
    %1004 = vector.load %arg2[%c48_498, %c0_499] : memref<128x2xf32, #tpu.memory_space<vmem>>, vector<8x1xf32>
    %1005 = vector.broadcast %1004 : vector<8x1xf32> to vector<8x512xf32>
    %1006 = vector.broadcast %892 : vector<1x512xf32> to vector<8x512xf32>
    %1007 = arith.mulf %1005, %1006 : vector<8x512xf32>
    %1008 = vector.broadcast %1003 : vector<8x1xf32> to vector<8x512xf32>
    %1009 = arith.addf %1008, %1007 : vector<8x512xf32>
    %c48_500 = arith.constant 48 : index
    %c1_501 = arith.constant 1 : index
    %1010 = vector.load %arg2[%c48_500, %c1_501] : memref<128x2xf32, #tpu.memory_space<vmem>>, vector<8x1xf32>
    %1011 = vector.broadcast %1010 : vector<8x1xf32> to vector<8x512xf32>
    %1012 = vector.broadcast %893 : vector<1x512xf32> to vector<8x512xf32>
    %1013 = arith.mulf %1011, %1012 : vector<8x512xf32>
    %1014 = arith.addf %1009, %1013 : vector<8x512xf32>
    %cst_502 = arith.constant 0.000000e+00 : f32
    %1015 = vector.broadcast %cst_502 : f32 to vector<8x512xf32>
    %1016 = arith.maximumf %1014, %1015 : vector<8x512xf32>
    %c48_503 = arith.constant 48 : index
    %c0_504 = arith.constant 0 : index
    %1017 = vector.load %arg4[%c48_503, %c0_504] : memref<128x1xf32, #tpu.memory_space<vmem>>, vector<8x1xf32>
    %1018 = vector.broadcast %1017 : vector<8x1xf32> to vector<8x512xf32>
    %1019 = arith.mulf %1016, %1018 : vector<8x512xf32>
    %1020 = arith.addf %1002, %1019 : vector<8x512xf32>
    %c56_505 = arith.constant 56 : index
    %c0_506 = arith.constant 0 : index
    %1021 = vector.load %arg3[%c56_505, %c0_506] : memref<128x1xf32, #tpu.memory_space<vmem>>, vector<8x1xf32>
    %c56_507 = arith.constant 56 : index
    %c0_508 = arith.constant 0 : index
    %1022 = vector.load %arg2[%c56_507, %c0_508] : memref<128x2xf32, #tpu.memory_space<vmem>>, vector<8x1xf32>
    %1023 = vector.broadcast %1022 : vector<8x1xf32> to vector<8x512xf32>
    %1024 = vector.broadcast %892 : vector<1x512xf32> to vector<8x512xf32>
    %1025 = arith.mulf %1023, %1024 : vector<8x512xf32>
    %1026 = vector.broadcast %1021 : vector<8x1xf32> to vector<8x512xf32>
    %1027 = arith.addf %1026, %1025 : vector<8x512xf32>
    %c56_509 = arith.constant 56 : index
    %c1_510 = arith.constant 1 : index
    %1028 = vector.load %arg2[%c56_509, %c1_510] : memref<128x2xf32, #tpu.memory_space<vmem>>, vector<8x1xf32>
    %1029 = vector.broadcast %1028 : vector<8x1xf32> to vector<8x512xf32>
    %1030 = vector.broadcast %893 : vector<1x512xf32> to vector<8x512xf32>
    %1031 = arith.mulf %1029, %1030 : vector<8x512xf32>
    %1032 = arith.addf %1027, %1031 : vector<8x512xf32>
    %cst_511 = arith.constant 0.000000e+00 : f32
    %1033 = vector.broadcast %cst_511 : f32 to vector<8x512xf32>
    %1034 = arith.maximumf %1032, %1033 : vector<8x512xf32>
    %c56_512 = arith.constant 56 : index
    %c0_513 = arith.constant 0 : index
    %1035 = vector.load %arg4[%c56_512, %c0_513] : memref<128x1xf32, #tpu.memory_space<vmem>>, vector<8x1xf32>
    %1036 = vector.broadcast %1035 : vector<8x1xf32> to vector<8x512xf32>
    %1037 = arith.mulf %1034, %1036 : vector<8x512xf32>
    %1038 = arith.addf %1020, %1037 : vector<8x512xf32>
    %c64_514 = arith.constant 64 : index
    %c0_515 = arith.constant 0 : index
    %1039 = vector.load %arg3[%c64_514, %c0_515] : memref<128x1xf32, #tpu.memory_space<vmem>>, vector<8x1xf32>
    %c64_516 = arith.constant 64 : index
    %c0_517 = arith.constant 0 : index
    %1040 = vector.load %arg2[%c64_516, %c0_517] : memref<128x2xf32, #tpu.memory_space<vmem>>, vector<8x1xf32>
    %1041 = vector.broadcast %1040 : vector<8x1xf32> to vector<8x512xf32>
    %1042 = vector.broadcast %892 : vector<1x512xf32> to vector<8x512xf32>
    %1043 = arith.mulf %1041, %1042 : vector<8x512xf32>
    %1044 = vector.broadcast %1039 : vector<8x1xf32> to vector<8x512xf32>
    %1045 = arith.addf %1044, %1043 : vector<8x512xf32>
    %c64_518 = arith.constant 64 : index
    %c1_519 = arith.constant 1 : index
    %1046 = vector.load %arg2[%c64_518, %c1_519] : memref<128x2xf32, #tpu.memory_space<vmem>>, vector<8x1xf32>
    %1047 = vector.broadcast %1046 : vector<8x1xf32> to vector<8x512xf32>
    %1048 = vector.broadcast %893 : vector<1x512xf32> to vector<8x512xf32>
    %1049 = arith.mulf %1047, %1048 : vector<8x512xf32>
    %1050 = arith.addf %1045, %1049 : vector<8x512xf32>
    %cst_520 = arith.constant 0.000000e+00 : f32
    %1051 = vector.broadcast %cst_520 : f32 to vector<8x512xf32>
    %1052 = arith.maximumf %1050, %1051 : vector<8x512xf32>
    %c64_521 = arith.constant 64 : index
    %c0_522 = arith.constant 0 : index
    %1053 = vector.load %arg4[%c64_521, %c0_522] : memref<128x1xf32, #tpu.memory_space<vmem>>, vector<8x1xf32>
    %1054 = vector.broadcast %1053 : vector<8x1xf32> to vector<8x512xf32>
    %1055 = arith.mulf %1052, %1054 : vector<8x512xf32>
    %1056 = arith.addf %1038, %1055 : vector<8x512xf32>
    %c72_523 = arith.constant 72 : index
    %c0_524 = arith.constant 0 : index
    %1057 = vector.load %arg3[%c72_523, %c0_524] : memref<128x1xf32, #tpu.memory_space<vmem>>, vector<8x1xf32>
    %c72_525 = arith.constant 72 : index
    %c0_526 = arith.constant 0 : index
    %1058 = vector.load %arg2[%c72_525, %c0_526] : memref<128x2xf32, #tpu.memory_space<vmem>>, vector<8x1xf32>
    %1059 = vector.broadcast %1058 : vector<8x1xf32> to vector<8x512xf32>
    %1060 = vector.broadcast %892 : vector<1x512xf32> to vector<8x512xf32>
    %1061 = arith.mulf %1059, %1060 : vector<8x512xf32>
    %1062 = vector.broadcast %1057 : vector<8x1xf32> to vector<8x512xf32>
    %1063 = arith.addf %1062, %1061 : vector<8x512xf32>
    %c72_527 = arith.constant 72 : index
    %c1_528 = arith.constant 1 : index
    %1064 = vector.load %arg2[%c72_527, %c1_528] : memref<128x2xf32, #tpu.memory_space<vmem>>, vector<8x1xf32>
    %1065 = vector.broadcast %1064 : vector<8x1xf32> to vector<8x512xf32>
    %1066 = vector.broadcast %893 : vector<1x512xf32> to vector<8x512xf32>
    %1067 = arith.mulf %1065, %1066 : vector<8x512xf32>
    %1068 = arith.addf %1063, %1067 : vector<8x512xf32>
    %cst_529 = arith.constant 0.000000e+00 : f32
    %1069 = vector.broadcast %cst_529 : f32 to vector<8x512xf32>
    %1070 = arith.maximumf %1068, %1069 : vector<8x512xf32>
    %c72_530 = arith.constant 72 : index
    %c0_531 = arith.constant 0 : index
    %1071 = vector.load %arg4[%c72_530, %c0_531] : memref<128x1xf32, #tpu.memory_space<vmem>>, vector<8x1xf32>
    %1072 = vector.broadcast %1071 : vector<8x1xf32> to vector<8x512xf32>
    %1073 = arith.mulf %1070, %1072 : vector<8x512xf32>
    %1074 = arith.addf %1056, %1073 : vector<8x512xf32>
    %c80_532 = arith.constant 80 : index
    %c0_533 = arith.constant 0 : index
    %1075 = vector.load %arg3[%c80_532, %c0_533] : memref<128x1xf32, #tpu.memory_space<vmem>>, vector<8x1xf32>
    %c80_534 = arith.constant 80 : index
    %c0_535 = arith.constant 0 : index
    %1076 = vector.load %arg2[%c80_534, %c0_535] : memref<128x2xf32, #tpu.memory_space<vmem>>, vector<8x1xf32>
    %1077 = vector.broadcast %1076 : vector<8x1xf32> to vector<8x512xf32>
    %1078 = vector.broadcast %892 : vector<1x512xf32> to vector<8x512xf32>
    %1079 = arith.mulf %1077, %1078 : vector<8x512xf32>
    %1080 = vector.broadcast %1075 : vector<8x1xf32> to vector<8x512xf32>
    %1081 = arith.addf %1080, %1079 : vector<8x512xf32>
    %c80_536 = arith.constant 80 : index
    %c1_537 = arith.constant 1 : index
    %1082 = vector.load %arg2[%c80_536, %c1_537] : memref<128x2xf32, #tpu.memory_space<vmem>>, vector<8x1xf32>
    %1083 = vector.broadcast %1082 : vector<8x1xf32> to vector<8x512xf32>
    %1084 = vector.broadcast %893 : vector<1x512xf32> to vector<8x512xf32>
    %1085 = arith.mulf %1083, %1084 : vector<8x512xf32>
    %1086 = arith.addf %1081, %1085 : vector<8x512xf32>
    %cst_538 = arith.constant 0.000000e+00 : f32
    %1087 = vector.broadcast %cst_538 : f32 to vector<8x512xf32>
    %1088 = arith.maximumf %1086, %1087 : vector<8x512xf32>
    %c80_539 = arith.constant 80 : index
    %c0_540 = arith.constant 0 : index
    %1089 = vector.load %arg4[%c80_539, %c0_540] : memref<128x1xf32, #tpu.memory_space<vmem>>, vector<8x1xf32>
    %1090 = vector.broadcast %1089 : vector<8x1xf32> to vector<8x512xf32>
    %1091 = arith.mulf %1088, %1090 : vector<8x512xf32>
    %1092 = arith.addf %1074, %1091 : vector<8x512xf32>
    %c88_541 = arith.constant 88 : index
    %c0_542 = arith.constant 0 : index
    %1093 = vector.load %arg3[%c88_541, %c0_542] : memref<128x1xf32, #tpu.memory_space<vmem>>, vector<8x1xf32>
    %c88_543 = arith.constant 88 : index
    %c0_544 = arith.constant 0 : index
    %1094 = vector.load %arg2[%c88_543, %c0_544] : memref<128x2xf32, #tpu.memory_space<vmem>>, vector<8x1xf32>
    %1095 = vector.broadcast %1094 : vector<8x1xf32> to vector<8x512xf32>
    %1096 = vector.broadcast %892 : vector<1x512xf32> to vector<8x512xf32>
    %1097 = arith.mulf %1095, %1096 : vector<8x512xf32>
    %1098 = vector.broadcast %1093 : vector<8x1xf32> to vector<8x512xf32>
    %1099 = arith.addf %1098, %1097 : vector<8x512xf32>
    %c88_545 = arith.constant 88 : index
    %c1_546 = arith.constant 1 : index
    %1100 = vector.load %arg2[%c88_545, %c1_546] : memref<128x2xf32, #tpu.memory_space<vmem>>, vector<8x1xf32>
    %1101 = vector.broadcast %1100 : vector<8x1xf32> to vector<8x512xf32>
    %1102 = vector.broadcast %893 : vector<1x512xf32> to vector<8x512xf32>
    %1103 = arith.mulf %1101, %1102 : vector<8x512xf32>
    %1104 = arith.addf %1099, %1103 : vector<8x512xf32>
    %cst_547 = arith.constant 0.000000e+00 : f32
    %1105 = vector.broadcast %cst_547 : f32 to vector<8x512xf32>
    %1106 = arith.maximumf %1104, %1105 : vector<8x512xf32>
    %c88_548 = arith.constant 88 : index
    %c0_549 = arith.constant 0 : index
    %1107 = vector.load %arg4[%c88_548, %c0_549] : memref<128x1xf32, #tpu.memory_space<vmem>>, vector<8x1xf32>
    %1108 = vector.broadcast %1107 : vector<8x1xf32> to vector<8x512xf32>
    %1109 = arith.mulf %1106, %1108 : vector<8x512xf32>
    %1110 = arith.addf %1092, %1109 : vector<8x512xf32>
    %c96_550 = arith.constant 96 : index
    %c0_551 = arith.constant 0 : index
    %1111 = vector.load %arg3[%c96_550, %c0_551] : memref<128x1xf32, #tpu.memory_space<vmem>>, vector<8x1xf32>
    %c96_552 = arith.constant 96 : index
    %c0_553 = arith.constant 0 : index
    %1112 = vector.load %arg2[%c96_552, %c0_553] : memref<128x2xf32, #tpu.memory_space<vmem>>, vector<8x1xf32>
    %1113 = vector.broadcast %1112 : vector<8x1xf32> to vector<8x512xf32>
    %1114 = vector.broadcast %892 : vector<1x512xf32> to vector<8x512xf32>
    %1115 = arith.mulf %1113, %1114 : vector<8x512xf32>
    %1116 = vector.broadcast %1111 : vector<8x1xf32> to vector<8x512xf32>
    %1117 = arith.addf %1116, %1115 : vector<8x512xf32>
    %c96_554 = arith.constant 96 : index
    %c1_555 = arith.constant 1 : index
    %1118 = vector.load %arg2[%c96_554, %c1_555] : memref<128x2xf32, #tpu.memory_space<vmem>>, vector<8x1xf32>
    %1119 = vector.broadcast %1118 : vector<8x1xf32> to vector<8x512xf32>
    %1120 = vector.broadcast %893 : vector<1x512xf32> to vector<8x512xf32>
    %1121 = arith.mulf %1119, %1120 : vector<8x512xf32>
    %1122 = arith.addf %1117, %1121 : vector<8x512xf32>
    %cst_556 = arith.constant 0.000000e+00 : f32
    %1123 = vector.broadcast %cst_556 : f32 to vector<8x512xf32>
    %1124 = arith.maximumf %1122, %1123 : vector<8x512xf32>
    %c96_557 = arith.constant 96 : index
    %c0_558 = arith.constant 0 : index
    %1125 = vector.load %arg4[%c96_557, %c0_558] : memref<128x1xf32, #tpu.memory_space<vmem>>, vector<8x1xf32>
    %1126 = vector.broadcast %1125 : vector<8x1xf32> to vector<8x512xf32>
    %1127 = arith.mulf %1124, %1126 : vector<8x512xf32>
    %1128 = arith.addf %1110, %1127 : vector<8x512xf32>
    %c104_559 = arith.constant 104 : index
    %c0_560 = arith.constant 0 : index
    %1129 = vector.load %arg3[%c104_559, %c0_560] : memref<128x1xf32, #tpu.memory_space<vmem>>, vector<8x1xf32>
    %c104_561 = arith.constant 104 : index
    %c0_562 = arith.constant 0 : index
    %1130 = vector.load %arg2[%c104_561, %c0_562] : memref<128x2xf32, #tpu.memory_space<vmem>>, vector<8x1xf32>
    %1131 = vector.broadcast %1130 : vector<8x1xf32> to vector<8x512xf32>
    %1132 = vector.broadcast %892 : vector<1x512xf32> to vector<8x512xf32>
    %1133 = arith.mulf %1131, %1132 : vector<8x512xf32>
    %1134 = vector.broadcast %1129 : vector<8x1xf32> to vector<8x512xf32>
    %1135 = arith.addf %1134, %1133 : vector<8x512xf32>
    %c104_563 = arith.constant 104 : index
    %c1_564 = arith.constant 1 : index
    %1136 = vector.load %arg2[%c104_563, %c1_564] : memref<128x2xf32, #tpu.memory_space<vmem>>, vector<8x1xf32>
    %1137 = vector.broadcast %1136 : vector<8x1xf32> to vector<8x512xf32>
    %1138 = vector.broadcast %893 : vector<1x512xf32> to vector<8x512xf32>
    %1139 = arith.mulf %1137, %1138 : vector<8x512xf32>
    %1140 = arith.addf %1135, %1139 : vector<8x512xf32>
    %cst_565 = arith.constant 0.000000e+00 : f32
    %1141 = vector.broadcast %cst_565 : f32 to vector<8x512xf32>
    %1142 = arith.maximumf %1140, %1141 : vector<8x512xf32>
    %c104_566 = arith.constant 104 : index
    %c0_567 = arith.constant 0 : index
    %1143 = vector.load %arg4[%c104_566, %c0_567] : memref<128x1xf32, #tpu.memory_space<vmem>>, vector<8x1xf32>
    %1144 = vector.broadcast %1143 : vector<8x1xf32> to vector<8x512xf32>
    %1145 = arith.mulf %1142, %1144 : vector<8x512xf32>
    %1146 = arith.addf %1128, %1145 : vector<8x512xf32>
    %c112_568 = arith.constant 112 : index
    %c0_569 = arith.constant 0 : index
    %1147 = vector.load %arg3[%c112_568, %c0_569] : memref<128x1xf32, #tpu.memory_space<vmem>>, vector<8x1xf32>
    %c112_570 = arith.constant 112 : index
    %c0_571 = arith.constant 0 : index
    %1148 = vector.load %arg2[%c112_570, %c0_571] : memref<128x2xf32, #tpu.memory_space<vmem>>, vector<8x1xf32>
    %1149 = vector.broadcast %1148 : vector<8x1xf32> to vector<8x512xf32>
    %1150 = vector.broadcast %892 : vector<1x512xf32> to vector<8x512xf32>
    %1151 = arith.mulf %1149, %1150 : vector<8x512xf32>
    %1152 = vector.broadcast %1147 : vector<8x1xf32> to vector<8x512xf32>
    %1153 = arith.addf %1152, %1151 : vector<8x512xf32>
    %c112_572 = arith.constant 112 : index
    %c1_573 = arith.constant 1 : index
    %1154 = vector.load %arg2[%c112_572, %c1_573] : memref<128x2xf32, #tpu.memory_space<vmem>>, vector<8x1xf32>
    %1155 = vector.broadcast %1154 : vector<8x1xf32> to vector<8x512xf32>
    %1156 = vector.broadcast %893 : vector<1x512xf32> to vector<8x512xf32>
    %1157 = arith.mulf %1155, %1156 : vector<8x512xf32>
    %1158 = arith.addf %1153, %1157 : vector<8x512xf32>
    %cst_574 = arith.constant 0.000000e+00 : f32
    %1159 = vector.broadcast %cst_574 : f32 to vector<8x512xf32>
    %1160 = arith.maximumf %1158, %1159 : vector<8x512xf32>
    %c112_575 = arith.constant 112 : index
    %c0_576 = arith.constant 0 : index
    %1161 = vector.load %arg4[%c112_575, %c0_576] : memref<128x1xf32, #tpu.memory_space<vmem>>, vector<8x1xf32>
    %1162 = vector.broadcast %1161 : vector<8x1xf32> to vector<8x512xf32>
    %1163 = arith.mulf %1160, %1162 : vector<8x512xf32>
    %1164 = arith.addf %1146, %1163 : vector<8x512xf32>
    %c120_577 = arith.constant 120 : index
    %c0_578 = arith.constant 0 : index
    %1165 = vector.load %arg3[%c120_577, %c0_578] : memref<128x1xf32, #tpu.memory_space<vmem>>, vector<8x1xf32>
    %c120_579 = arith.constant 120 : index
    %c0_580 = arith.constant 0 : index
    %1166 = vector.load %arg2[%c120_579, %c0_580] : memref<128x2xf32, #tpu.memory_space<vmem>>, vector<8x1xf32>
    %1167 = vector.broadcast %1166 : vector<8x1xf32> to vector<8x512xf32>
    %1168 = vector.broadcast %892 : vector<1x512xf32> to vector<8x512xf32>
    %1169 = arith.mulf %1167, %1168 : vector<8x512xf32>
    %1170 = vector.broadcast %1165 : vector<8x1xf32> to vector<8x512xf32>
    %1171 = arith.addf %1170, %1169 : vector<8x512xf32>
    %c120_581 = arith.constant 120 : index
    %c1_582 = arith.constant 1 : index
    %1172 = vector.load %arg2[%c120_581, %c1_582] : memref<128x2xf32, #tpu.memory_space<vmem>>, vector<8x1xf32>
    %1173 = vector.broadcast %1172 : vector<8x1xf32> to vector<8x512xf32>
    %1174 = vector.broadcast %893 : vector<1x512xf32> to vector<8x512xf32>
    %1175 = arith.mulf %1173, %1174 : vector<8x512xf32>
    %1176 = arith.addf %1171, %1175 : vector<8x512xf32>
    %cst_583 = arith.constant 0.000000e+00 : f32
    %1177 = vector.broadcast %cst_583 : f32 to vector<8x512xf32>
    %1178 = arith.maximumf %1176, %1177 : vector<8x512xf32>
    %c120_584 = arith.constant 120 : index
    %c0_585 = arith.constant 0 : index
    %1179 = vector.load %arg4[%c120_584, %c0_585] : memref<128x1xf32, #tpu.memory_space<vmem>>, vector<8x1xf32>
    %1180 = vector.broadcast %1179 : vector<8x1xf32> to vector<8x512xf32>
    %1181 = arith.mulf %1178, %1180 : vector<8x512xf32>
    %1182 = arith.addf %1164, %1181 : vector<8x512xf32>
    %cst_586 = arith.constant dense<0.000000e+00> : vector<512xf32>
    %1183 = vector.multi_reduction <add>, %1182, %cst_586 [0] : vector<8x512xf32> to vector<512xf32>
    %1184 = vector.shape_cast %1183 : vector<512xf32> to vector<1x512xf32>
    %1185 = vector.broadcast %0 : f32 to vector<1x512xf32>
    %1186 = arith.addf %1184, %1185 : vector<1x512xf32>
    %1187 = math.tanh %1186 : vector<1x512xf32>
    %c0_587 = arith.constant 0 : index
    %c1536_588 = arith.constant 1536 : index
    %1188 = vector.load %arg6[%c0_587, %c1536_588] : memref<1x2048xf32, #tpu.memory_space<vmem>>, vector<1x512xf32>
    tpu.vector_store %arg6[%c0_587, %c1536_588], %1187 {strides = array<i32>} : memref<1x2048xf32, #tpu.memory_space<vmem>>, vector<1x512xf32>,
    return
  }
  func.func @transform_0(%arg0: i32) -> (i32, i32) {
    %c0_i32 = arith.constant 0 : i32
    %c0_i32_0 = arith.constant 0 : i32
    return %c0_i32, %arg0 : i32, i32
  }
  func.func @transform_1(%arg0: i32) -> (i32, i32) {
    %c0_i32 = arith.constant 0 : i32
    %c0_i32_0 = arith.constant 0 : i32
    %c0_i32_1 = arith.constant 0 : i32
    return %c0_i32, %c0_i32_0 : i32, i32
  }
  func.func @transform_2(%arg0: i32) -> (i32, i32) {
    %c0_i32 = arith.constant 0 : i32
    %c0_i32_0 = arith.constant 0 : i32
    %c0_i32_1 = arith.constant 0 : i32
    return %c0_i32, %c0_i32_0 : i32, i32
  }
  func.func @transform_3(%arg0: i32) -> (i32, i32) {
    %c0_i32 = arith.constant 0 : i32
    %c0_i32_0 = arith.constant 0 : i32
    %c0_i32_1 = arith.constant 0 : i32
    return %c0_i32, %c0_i32_0 : i32, i32
  }
  func.func @transform_4(%arg0: i32) -> (i32, i32) {
    %c0_i32 = arith.constant 0 : i32
    %c0_i32_0 = arith.constant 0 : i32
    %c0_i32_1 = arith.constant 0 : i32
    return %c0_i32, %c0_i32_0 : i32, i32
  }
  func.func @transform_5(%arg0: i32) -> (i32, i32) {
    %c0_i32 = arith.constant 0 : i32
    %c0_i32_0 = arith.constant 0 : i32
    return %c0_i32, %arg0 : i32, i32
  }
}

</mosaic_0001>

<llo_original>
// kernel: sequential_forward.1
$region0: #{sequential_forward.1}
  #allocation0 [shape = 'u32[]', space=smem, size = 0x4, offset = 0x4, fixed_abs, tag = 'smem constant byte address 0x4 - core index']
  #allocation1 [shape = 'u32[144,128]{1,0:T(1,128)}', space=vmem, size = 0x12000, scoped, tag = 'internal scratch']
  #allocation2 [shape = 'f32[1,1]{1,0:T(1,128)S(6)}', space=smem, size = 0x200, scoped, tag = 'scoped memory for sequential_forward.1']
  %s0 = inlined_call_operand.vmem [shape: f32[2,2048], index: 0, kind: input, shape index: {}]
  %s1 = inlined_call_operand.vmem [shape: f32[128,2], index: 1, kind: input, shape index: {}]
  %s2 = inlined_call_operand.vmem [shape: f32[128,1], index: 2, kind: input, shape index: {}]
  %s3 = inlined_call_operand.vmem [shape: f32[128,1], index: 3, kind: input, shape index: {}]
  %s4 = inlined_call_operand.<no memory space> [shape: f32[1,1], index: 4, kind: input, shape index: {}]
  %s5 = inlined_call_operand.hbm [shape: f32[1,2048], index: 5, kind: output, shape index: {}]
  %s6 = sld [smem:[#allocation0]]
  $region30: #{sequential_forward.1} parent=0
    _
  %s8 = ssub.s32 1, %s6
  %s9 = scalar_select 0, %s8, %s6
  %10 = sst [smem:[#allocation2]] %s4
  $region1: #{sequential_forward.1} parent=0
    #allocation3 [shape = 'u8[8192]{0}', space=vmem, size = 0x2000, scoped, tag = 'output window, operand 0, single buffered']
    #allocation4 [shape = 's32[1]{0}', space=sflag, size = 0x4, scoped, tag = 'scoped memory for sequential_forward.1']
    %11 = vsyncpa [#allocation4], 0
    // Predicated region
    $region2: #{sequential_forward.1} parent=1 // pred_check
      _
    $region3: #{sequential_forward.1} parent=1 // pred_check_branch
      %13 = sbr.rel (0) target = $region5
    $region4: #{sequential_forward.1} parent=1 // pred_region
      _
    $region5: #{sequential_forward.1} parent=1 // pred_fallthru
      _
    // Predicated region
    $region6: #{sequential_forward.1} parent=1 // pred_check
      _
    $region7: #{sequential_forward.1} parent=1 // pred_check_branch
      %15 = sbr.rel (0) target = $region9
    $region8: #{sequential_forward.1} parent=1 // pred_region
      _
    $region9: #{sequential_forward.1} parent=1 // pred_fallthru
      _
    // Predicated region
    $region10: #{sequential_forward.1} parent=1 // pred_check
      _
    $region11: #{sequential_forward.1} parent=1 // pred_check_branch
      %17 = sbr.rel (0) target = $region13
    $region12: #{sequential_forward.1} parent=1 // pred_region
      _
    $region13: #{sequential_forward.1} parent=1 // pred_fallthru
      _
    // Predicated region
    $region14: #{sequential_forward.1} parent=1 // pred_check
      _
    $region15: #{sequential_forward.1} parent=1 // pred_check_branch
      %19 = sbr.rel (0) target = $region17
    $region16: #{sequential_forward.1} parent=1 // pred_region
      _
    $region17: #{sequential_forward.1} parent=1 // pred_fallthru
      _
    // Predicated region
    $region18: #{sequential_forward.1} parent=1 // pred_check
      _
    $region19: #{sequential_forward.1} parent=1 // pred_check_branch
      %21 = sbr.rel (0) target = $region21
    $region20: #{sequential_forward.1} parent=1 // pred_region
      _
    $region21: #{sequential_forward.1} parent=1 // pred_fallthru
      _
    %s22 = sld [smem:[#allocation2]]
    %v23 = vld [vmem:[%s0] ss:$2 sm:$0xf]
    %s24 = scalar_lea.vmem %s0, 1
    %v25 = vld [vmem:[%s24] ss:$2 sm:$0xf]
    %v26 = vld [vmem:[%s2] sm:$0xff]
    %v27 = vld [vmem:[%s1] sm:$0xff]
    %29 = vset.pattern.permute.xlu0 0
    %30 = vperm.xlu0 %29, %v27
    %v31 = vpop.permute.xlu0 %30
    %v34 = vlaneseq
    %v35 = vshrl.u32 %v34, 7
    %v36 = vsub.s32 0, %v35
    %v37 = vrot.slane %v23, %v36
    %v38 = vlaneseq
    %v39 = vshrl.u32 %v38, 7
    %v40 = vsub.s32 1, %v39
    %v41 = vrot.slane %v23, %v40
    %v42 = vlaneseq
    %v43 = vshrl.u32 %v42, 7
    %v44 = vsub.s32 2, %v43
    %v45 = vrot.slane %v23, %v44
    %v46 = vlaneseq
    %v47 = vshrl.u32 %v46, 7
    %v48 = vsub.s32 3, %v47
    %v49 = vrot.slane %v23, %v48
    %v54 = vmul.f32 %v31, %v37
    %v55 = vmul.f32 %v31, %v41
    %v56 = vmul.f32 %v31, %v45
    %v57 = vmul.f32 %v31, %v49
    %59 = vset.pattern.permute.xlu0 0
    %60 = vperm.xlu0 %59, %v26
    %v61 = vpop.permute.xlu0 %60
    %v63 = vadd.f32 %v61, %v54
    %v64 = vadd.f32 %v61, %v55
    %v65 = vadd.f32 %v61, %v56
    %v66 = vadd.f32 %v61, %v57
    %67 = vset.pattern.permute.xlu0 1
    %68 = vperm.xlu0 %67, %v27
    %v69 = vpop.permute.xlu0 %68
    %v72 = vlaneseq
    %v73 = vshrl.u32 %v72, 7
    %v74 = vsub.s32 0, %v73
    %v75 = vrot.slane %v25, %v74
    %v76 = vlaneseq
    %v77 = vshrl.u32 %v76, 7
    %v78 = vsub.s32 1, %v77
    %v79 = vrot.slane %v25, %v78
    %v80 = vlaneseq
    %v81 = vshrl.u32 %v80, 7
    %v82 = vsub.s32 2, %v81
    %v83 = vrot.slane %v25, %v82
    %v84 = vlaneseq
    %v85 = vshrl.u32 %v84, 7
    %v86 = vsub.s32 3, %v85
    %v87 = vrot.slane %v25, %v86
    %v92 = vmul.f32 %v69, %v75
    %v93 = vmul.f32 %v69, %v79
    %v94 = vmul.f32 %v69, %v83
    %v95 = vmul.f32 %v69, %v87
    %v96 = vadd.f32 %v63, %v92
    %v97 = vadd.f32 %v64, %v93
    %v98 = vadd.f32 %v65, %v94
    %v99 = vadd.f32 %v66, %v95
    %v100 = vmax.f32 %v96, 0.0
    %v101 = vmax.f32 %v97, 0.0
    %v102 = vmax.f32 %v98, 0.0
    %v103 = vmax.f32 %v99, 0.0
    %v104 = vld [vmem:[%s3] sm:$0xff]
    %106 = vset.pattern.permute.xlu0 0
    %107 = vperm.xlu0 %106, %v104
    %v108 = vpop.permute.xlu0 %107
    %v110 = vmul.f32 %v100, %v108
    %v111 = vmul.f32 %v101, %v108
    %v112 = vmul.f32 %v102, %v108
    %v113 = vmul.f32 %v103, %v108
    %v114 = vadd.f32 %v110, 0.0
    %v115 = vadd.f32 %v111, 0.0
    %v116 = vadd.f32 %v112, 0.0
    %v117 = vadd.f32 %v113, 0.0
    %v118 = vld [vmem:[%s2 + $0x8] sm:$0xff]
    %v119 = vld [vmem:[%s1 + $0x8] sm:$0xff]
    %121 = vset.pattern.permute.xlu0 0
    %122 = vperm.xlu0 %121, %v119
    %v123 = vpop.permute.xlu0 %122
    %v125 = vmul.f32 %v123, %v37
    %v126 = vmul.f32 %v123, %v41
    %v127 = vmul.f32 %v123, %v45
    %v128 = vmul.f32 %v123, %v49
    %130 = vset.pattern.permute.xlu0 0
    %131 = vperm.xlu0 %130, %v118
    %v132 = vpop.permute.xlu0 %131
    %v134 = vadd.f32 %v132, %v125
    %v135 = vadd.f32 %v132, %v126
    %v136 = vadd.f32 %v132, %v127
    %v137 = vadd.f32 %v132, %v128
    %138 = vset.pattern.permute.xlu0 1
    %139 = vperm.xlu0 %138, %v119
    %v140 = vpop.permute.xlu0 %139
    %v142 = vmul.f32 %v140, %v75
    %v143 = vmul.f32 %v140, %v79
    %v144 = vmul.f32 %v140, %v83
    %v145 = vmul.f32 %v140, %v87
    %v146 = vadd.f32 %v134, %v142
    %v147 = vadd.f32 %v135, %v143
    %v148 = vadd.f32 %v136, %v144
    %v149 = vadd.f32 %v137, %v145
    %v150 = vmax.f32 %v146, 0.0
    %v151 = vmax.f32 %v147, 0.0
    %v152 = vmax.f32 %v148, 0.0
    %v153 = vmax.f32 %v149, 0.0
    %v154 = vld [vmem:[%s3 + $0x8] sm:$0xff]
    %156 = vset.pattern.permute.xlu0 0
    %157 = vperm.xlu0 %156, %v154
    %v158 = vpop.permute.xlu0 %157
    %v160 = vmul.f32 %v150, %v158
    %v161 = vmul.f32 %v151, %v158
    %v162 = vmul.f32 %v152, %v158
    %v163 = vmul.f32 %v153, %v158
    %v164 = vadd.f32 %v114, %v160
    %v165 = vadd.f32 %v115, %v161
    %v166 = vadd.f32 %v116, %v162
    %v167 = vadd.f32 %v117, %v163
    %v168 = vld [vmem:[%s2 + $0x10] sm:$0xff]
    %v169 = vld [vmem:[%s1 + $0x10] sm:$0xff]
    %171 = vset.pattern.permute.xlu0 0
    %172 = vperm.xlu0 %171, %v169
    %v173 = vpop.permute.xlu0 %172
    %v175 = vmul.f32 %v173, %v37
    %v176 = vmul.f32 %v173, %v41
    %v177 = vmul.f32 %v173, %v45
    %v178 = vmul.f32 %v173, %v49
    %180 = vset.pattern.permute.xlu0 0
    %181 = vperm.xlu0 %180, %v168
    %v182 = vpop.permute.xlu0 %181
    %v184 = vadd.f32 %v182, %v175
    %v185 = vadd.f32 %v182, %v176
    %v186 = vadd.f32 %v182, %v177
    %v187 = vadd.f32 %v182, %v178
    %188 = vset.pattern.permute.xlu0 1
    %189 = vperm.xlu0 %188, %v169
    %v190 = vpop.permute.xlu0 %189
    %v192 = vmul.f32 %v190, %v75
    %v193 = vmul.f32 %v190, %v79
    %v194 = vmul.f32 %v190, %v83
    %v195 = vmul.f32 %v190, %v87
    %v196 = vadd.f32 %v184, %v192
    %v197 = vadd.f32 %v185, %v193
    %v198 = vadd.f32 %v186, %v194
    %v199 = vadd.f32 %v187, %v195
    %v200 = vmax.f32 %v196, 0.0
    %v201 = vmax.f32 %v197, 0.0
    %v202 = vmax.f32 %v198, 0.0
    %v203 = vmax.f32 %v199, 0.0
    %v204 = vld [vmem:[%s3 + $0x10] sm:$0xff]
    %206 = vset.pattern.permute.xlu0 0
    %207 = vperm.xlu0 %206, %v204
    %v208 = vpop.permute.xlu0 %207
    %v210 = vmul.f32 %v200, %v208
    %v211 = vmul.f32 %v201, %v208
    %v212 = vmul.f32 %v202, %v208
    %v213 = vmul.f32 %v203, %v208
    %v214 = vadd.f32 %v164, %v210
    %v215 = vadd.f32 %v165, %v211
    %v216 = vadd.f32 %v166, %v212
    %v217 = vadd.f32 %v167, %v213
    %v218 = vld [vmem:[%s2 + $0x18] sm:$0xff]
    %v219 = vld [vmem:[%s1 + $0x18] sm:$0xff]
    %221 = vset.pattern.permute.xlu0 0
    %222 = vperm.xlu0 %221, %v219
    %v223 = vpop.permute.xlu0 %222
    %v225 = vmul.f32 %v223, %v37
    %v226 = vmul.f32 %v223, %v41
    %v227 = vmul.f32 %v223, %v45
    %v228 = vmul.f32 %v223, %v49
    %230 = vset.pattern.permute.xlu0 0
    %231 = vperm.xlu0 %230, %v218
    %v232 = vpop.permute.xlu0 %231
    %v234 = vadd.f32 %v232, %v225
    %v235 = vadd.f32 %v232, %v226
    %v236 = vadd.f32 %v232, %v227
    %v237 = vadd.f32 %v232, %v228
    %238 = vset.pattern.permute.xlu0 1
    %239 = vperm.xlu0 %238, %v219
    %v240 = vpop.permute.xlu0 %239
    %v242 = vmul.f32 %v240, %v75
    %v243 = vmul.f32 %v240, %v79
    %v244 = vmul.f32 %v240, %v83
    %v245 = vmul.f32 %v240, %v87
    %v246 = vadd.f32 %v234, %v242
    %v247 = vadd.f32 %v235, %v243
    %v248 = vadd.f32 %v236, %v244
    %v249 = vadd.f32 %v237, %v245
    %v250 = vmax.f32 %v246, 0.0
    %v251 = vmax.f32 %v247, 0.0
    %v252 = vmax.f32 %v248, 0.0
    %v253 = vmax.f32 %v249, 0.0
    %v254 = vld [vmem:[%s3 + $0x18] sm:$0xff]
    %256 = vset.pattern.permute.xlu0 0
    %257 = vperm.xlu0 %256, %v254
    %v258 = vpop.permute.xlu0 %257
    %v260 = vmul.f32 %v250, %v258
    %v261 = vmul.f32 %v251, %v258
    %v262 = vmul.f32 %v252, %v258
    %v263 = vmul.f32 %v253, %v258
    %v264 = vadd.f32 %v214, %v260
    %v265 = vadd.f32 %v215, %v261
    %v266 = vadd.f32 %v216, %v262
    %v267 = vadd.f32 %v217, %v263
    %v268 = vld [vmem:[%s2 + $0x20] sm:$0xff]
    %v269 = vld [vmem:[%s1 + $0x20] sm:$0xff]
    %271 = vset.pattern.permute.xlu0 0
    %272 = vperm.xlu0 %271, %v269
    %v273 = vpop.permute.xlu0 %272
    %v275 = vmul.f32 %v273, %v37
    %v276 = vmul.f32 %v273, %v41
    %v277 = vmul.f32 %v273, %v45
    %v278 = vmul.f32 %v273, %v49
    %280 = vset.pattern.permute.xlu0 0
    %281 = vperm.xlu0 %280, %v268
    %v282 = vpop.permute.xlu0 %281
    %v284 = vadd.f32 %v282, %v275
    %v285 = vadd.f32 %v282, %v276
    %v286 = vadd.f32 %v282, %v277
    %v287 = vadd.f32 %v282, %v278
    %288 = vset.pattern.permute.xlu0 1
    %289 = vperm.xlu0 %288, %v269
    %v290 = vpop.permute.xlu0 %289
    %v292 = vmul.f32 %v290, %v75
    %v293 = vmul.f32 %v290, %v79
    %v294 = vmul.f32 %v290, %v83
    %v295 = vmul.f32 %v290, %v87
    %v296 = vadd.f32 %v284, %v292
    %v297 = vadd.f32 %v285, %v293
    %v298 = vadd.f32 %v286, %v294
    %v299 = vadd.f32 %v287, %v295
    %v300 = vmax.f32 %v296, 0.0
    %v301 = vmax.f32 %v297, 0.0
    %v302 = vmax.f32 %v298, 0.0
    %v303 = vmax.f32 %v299, 0.0
    %v304 = vld [vmem:[%s3 + $0x20] sm:$0xff]
    %306 = vset.pattern.permute.xlu0 0
    %307 = vperm.xlu0 %306, %v304
    %v308 = vpop.permute.xlu0 %307
    %v310 = vmul.f32 %v300, %v308
    %v311 = vmul.f32 %v301, %v308
    %v312 = vmul.f32 %v302, %v308
    %v313 = vmul.f32 %v303, %v308
    %v314 = vadd.f32 %v264, %v310
    %v315 = vadd.f32 %v265, %v311
    %v316 = vadd.f32 %v266, %v312
    %v317 = vadd.f32 %v267, %v313
    %v318 = vld [vmem:[%s2 + $0x28] sm:$0xff]
    %v319 = vld [vmem:[%s1 + $0x28] sm:$0xff]
    %321 = vset.pattern.permute.xlu0 0
    %322 = vperm.xlu0 %321, %v319
    %v323 = vpop.permute.xlu0 %322
    %v325 = vmul.f32 %v323, %v37
    %v326 = vmul.f32 %v323, %v41
    %v327 = vmul.f32 %v323, %v45
    %v328 = vmul.f32 %v323, %v49
    %330 = vset.pattern.permute.xlu0 0
    %331 = vperm.xlu0 %330, %v318
    %v332 = vpop.permute.xlu0 %331
    %v334 = vadd.f32 %v332, %v325
    %v335 = vadd.f32 %v332, %v326
    %v336 = vadd.f32 %v332, %v327
    %v337 = vadd.f32 %v332, %v328
    %338 = vset.pattern.permute.xlu0 1
    %339 = vperm.xlu0 %338, %v319
    %v340 = vpop.permute.xlu0 %339
    %v342 = vmul.f32 %v340, %v75
    %v343 = vmul.f32 %v340, %v79
    %v344 = vmul.f32 %v340, %v83
    %v345 = vmul.f32 %v340, %v87
    %v346 = vadd.f32 %v334, %v342
    %v347 = vadd.f32 %v335, %v343
    %v348 = vadd.f32 %v336, %v344
    %v349 = vadd.f32 %v337, %v345
    %v350 = vmax.f32 %v346, 0.0
    %v351 = vmax.f32 %v347, 0.0
    %v352 = vmax.f32 %v348, 0.0
    %v353 = vmax.f32 %v349, 0.0
    %v354 = vld [vmem:[%s3 + $0x28] sm:$0xff]
    %356 = vset.pattern.permute.xlu0 0
    %357 = vperm.xlu0 %356, %v354
    %v358 = vpop.permute.xlu0 %357
    %v360 = vmul.f32 %v350, %v358
    %v361 = vmul.f32 %v351, %v358
    %v362 = vmul.f32 %v352, %v358
    %v363 = vmul.f32 %v353, %v358
    %v364 = vadd.f32 %v314, %v360
    %v365 = vadd.f32 %v315, %v361
    %v366 = vadd.f32 %v316, %v362
    %v367 = vadd.f32 %v317, %v363
    %v368 = vld [vmem:[%s2 + $0x30] sm:$0xff]
    %v369 = vld [vmem:[%s1 + $0x30] sm:$0xff]
    %371 = vset.pattern.permute.xlu0 0
    %372 = vperm.xlu0 %371, %v369
    %v373 = vpop.permute.xlu0 %372
    %v375 = vmul.f32 %v373, %v37
    %v376 = vmul.f32 %v373, %v41
    %v377 = vmul.f32 %v373, %v45
    %v378 = vmul.f32 %v373, %v49
    %380 = vset.pattern.permute.xlu0 0
    %381 = vperm.xlu0 %380, %v368
    %v382 = vpop.permute.xlu0 %381
    %v384 = vadd.f32 %v382, %v375
    %v385 = vadd.f32 %v382, %v376
    %v386 = vadd.f32 %v382, %v377
    %v387 = vadd.f32 %v382, %v378
    %388 = vset.pattern.permute.xlu0 1
    %389 = vperm.xlu0 %388, %v369
    %v390 = vpop.permute.xlu0 %389
    %v392 = vmul.f32 %v390, %v75
    %v393 = vmul.f32 %v390, %v79
    %v394 = vmul.f32 %v390, %v83
    %v395 = vmul.f32 %v390, %v87
    %v396 = vadd.f32 %v384, %v392
    %v397 = vadd.f32 %v385, %v393
    %v398 = vadd.f32 %v386, %v394
    %v399 = vadd.f32 %v387, %v395
    %v400 = vmax.f32 %v396, 0.0
    %v401 = vmax.f32 %v397, 0.0
    %v402 = vmax.f32 %v398, 0.0
    %v403 = vmax.f32 %v399, 0.0
    %v404 = vld [vmem:[%s3 + $0x30] sm:$0xff]
    %406 = vset.pattern.permute.xlu0 0
    %407 = vperm.xlu0 %406, %v404
    %v408 = vpop.permute.xlu0 %407
    %v410 = vmul.f32 %v400, %v408
    %v411 = vmul.f32 %v401, %v408
    %v412 = vmul.f32 %v402, %v408
    %v413 = vmul.f32 %v403, %v408
    %v414 = vadd.f32 %v364, %v410
    %v415 = vadd.f32 %v365, %v411
    %v416 = vadd.f32 %v366, %v412
    %v417 = vadd.f32 %v367, %v413
    %v418 = vld [vmem:[%s2 + $0x38] sm:$0xff]
    %v419 = vld [vmem:[%s1 + $0x38] sm:$0xff]
    %421 = vset.pattern.permute.xlu0 0
    %422 = vperm.xlu0 %421, %v419
    %v423 = vpop.permute.xlu0 %422
    %v425 = vmul.f32 %v423, %v37
    %v426 = vmul.f32 %v423, %v41
    %v427 = vmul.f32 %v423, %v45
    %v428 = vmul.f32 %v423, %v49
    %430 = vset.pattern.permute.xlu0 0
    %431 = vperm.xlu0 %430, %v418
    %v432 = vpop.permute.xlu0 %431
    %v434 = vadd.f32 %v432, %v425
    %v435 = vadd.f32 %v432, %v426
    %v436 = vadd.f32 %v432, %v427
    %v437 = vadd.f32 %v432, %v428
    %438 = vset.pattern.permute.xlu0 1
    %439 = vperm.xlu0 %438, %v419
    %v440 = vpop.permute.xlu0 %439
    %v442 = vmul.f32 %v440, %v75
    %v443 = vmul.f32 %v440, %v79
    %v444 = vmul.f32 %v440, %v83
    %v445 = vmul.f32 %v440, %v87
    %v446 = vadd.f32 %v434, %v442
    %v447 = vadd.f32 %v435, %v443
    %v448 = vadd.f32 %v436, %v444
    %v449 = vadd.f32 %v437, %v445
    %v450 = vmax.f32 %v446, 0.0
    %v451 = vmax.f32 %v447, 0.0
    %v452 = vmax.f32 %v448, 0.0
    %v453 = vmax.f32 %v449, 0.0
    %v454 = vld [vmem:[%s3 + $0x38] sm:$0xff]
    %456 = vset.pattern.permute.xlu0 0
    %457 = vperm.xlu0 %456, %v454
    %v458 = vpop.permute.xlu0 %457
    %v460 = vmul.f32 %v450, %v458
    %v461 = vmul.f32 %v451, %v458
    %v462 = vmul.f32 %v452, %v458
    %v463 = vmul.f32 %v453, %v458
    %v464 = vadd.f32 %v414, %v460
    %v465 = vadd.f32 %v415, %v461
    %v466 = vadd.f32 %v416, %v462
    %v467 = vadd.f32 %v417, %v463
    %v468 = vld [vmem:[%s2 + $0x40] sm:$0xff]
    %v469 = vld [vmem:[%s1 + $0x40] sm:$0xff]
    %471 = vset.pattern.permute.xlu0 0
    %472 = vperm.xlu0 %471, %v469
    %v473 = vpop.permute.xlu0 %472
    %v475 = vmul.f32 %v473, %v37
    %v476 = vmul.f32 %v473, %v41
    %v477 = vmul.f32 %v473, %v45
    %v478 = vmul.f32 %v473, %v49
    %480 = vset.pattern.permute.xlu0 0
    %481 = vperm.xlu0 %480, %v468
    %v482 = vpop.permute.xlu0 %481
    %v484 = vadd.f32 %v482, %v475
    %v485 = vadd.f32 %v482, %v476
    %v486 = vadd.f32 %v482, %v477
    %v487 = vadd.f32 %v482, %v478
    %488 = vset.pattern.permute.xlu0 1
    %489 = vperm.xlu0 %488, %v469
    %v490 = vpop.permute.xlu0 %489
    %v492 = vmul.f32 %v490, %v75
    %v493 = vmul.f32 %v490, %v79
    %v494 = vmul.f32 %v490, %v83
    %v495 = vmul.f32 %v490, %v87
    %v496 = vadd.f32 %v484, %v492
    %v497 = vadd.f32 %v485, %v493
    %v498 = vadd.f32 %v486, %v494
    %v499 = vadd.f32 %v487, %v495
    %v500 = vmax.f32 %v496, 0.0
    %v501 = vmax.f32 %v497, 0.0
    %v502 = vmax.f32 %v498, 0.0
    %v503 = vmax.f32 %v499, 0.0
    %v504 = vld [vmem:[%s3 + $0x40] sm:$0xff]
    %506 = vset.pattern.permute.xlu0 0
    %507 = vperm.xlu0 %506, %v504
    %v508 = vpop.permute.xlu0 %507
    %v510 = vmul.f32 %v500, %v508
    %v511 = vmul.f32 %v501, %v508
    %v512 = vmul.f32 %v502, %v508
    %v513 = vmul.f32 %v503, %v508
    %v514 = vadd.f32 %v464, %v510
    %v515 = vadd.f32 %v465, %v511
    %v516 = vadd.f32 %v466, %v512
    %v517 = vadd.f32 %v467, %v513
    %v518 = vld [vmem:[%s2 + $0x48] sm:$0xff]
    %v519 = vld [vmem:[%s1 + $0x48] sm:$0xff]
    %521 = vset.pattern.permute.xlu0 0
    %522 = vperm.xlu0 %521, %v519
    %v523 = vpop.permute.xlu0 %522
    %v525 = vmul.f32 %v523, %v37
    %v526 = vmul.f32 %v523, %v41
    %v527 = vmul.f32 %v523, %v45
    %v528 = vmul.f32 %v523, %v49
    %530 = vset.pattern.permute.xlu0 0
    %531 = vperm.xlu0 %530, %v518
    %v532 = vpop.permute.xlu0 %531
    %v534 = vadd.f32 %v532, %v525
    %v535 = vadd.f32 %v532, %v526
    %v536 = vadd.f32 %v532, %v527
    %v537 = vadd.f32 %v532, %v528
    %538 = vset.pattern.permute.xlu0 1
    %539 = vperm.xlu0 %538, %v519
    %v540 = vpop.permute.xlu0 %539
    %v542 = vmul.f32 %v540, %v75
    %v543 = vmul.f32 %v540, %v79
    %v544 = vmul.f32 %v540, %v83
    %v545 = vmul.f32 %v540, %v87
    %v546 = vadd.f32 %v534, %v542
    %v547 = vadd.f32 %v535, %v543
    %v548 = vadd.f32 %v536, %v544
    %v549 = vadd.f32 %v537, %v545
    %v550 = vmax.f32 %v546, 0.0
    %v551 = vmax.f32 %v547, 0.0
    %v552 = vmax.f32 %v548, 0.0
    %v553 = vmax.f32 %v549, 0.0
    %v554 = vld [vmem:[%s3 + $0x48] sm:$0xff]
    %556 = vset.pattern.permute.xlu0 0
    %557 = vperm.xlu0 %556, %v554
    %v558 = vpop.permute.xlu0 %557
    %v560 = vmul.f32 %v550, %v558
    %v561 = vmul.f32 %v551, %v558
    %v562 = vmul.f32 %v552, %v558
    %v563 = vmul.f32 %v553, %v558
    %v564 = vadd.f32 %v514, %v560
    %v565 = vadd.f32 %v515, %v561
    %v566 = vadd.f32 %v516, %v562
    %v567 = vadd.f32 %v517, %v563
    %v568 = vld [vmem:[%s2 + $0x50] sm:$0xff]
    %v569 = vld [vmem:[%s1 + $0x50] sm:$0xff]
    %571 = vset.pattern.permute.xlu0 0
    %572 = vperm.xlu0 %571, %v569
    %v573 = vpop.permute.xlu0 %572
    %v575 = vmul.f32 %v573, %v37
    %v576 = vmul.f32 %v573, %v41
    %v577 = vmul.f32 %v573, %v45
    %v578 = vmul.f32 %v573, %v49
    %580 = vset.pattern.permute.xlu0 0
    %581 = vperm.xlu0 %580, %v568
    %v582 = vpop.permute.xlu0 %581
    %v584 = vadd.f32 %v582, %v575
    %v585 = vadd.f32 %v582, %v576
    %v586 = vadd.f32 %v582, %v577
    %v587 = vadd.f32 %v582, %v578
    %588 = vset.pattern.permute.xlu0 1
    %589 = vperm.xlu0 %588, %v569
    %v590 = vpop.permute.xlu0 %589
    %v592 = vmul.f32 %v590, %v75
    %v593 = vmul.f32 %v590, %v79
    %v594 = vmul.f32 %v590, %v83
    %v595 = vmul.f32 %v590, %v87
    %v596 = vadd.f32 %v584, %v592
    %v597 = vadd.f32 %v585, %v593
    %v598 = vadd.f32 %v586, %v594
    %v599 = vadd.f32 %v587, %v595
    %v600 = vmax.f32 %v596, 0.0
    %v601 = vmax.f32 %v597, 0.0
    %v602 = vmax.f32 %v598, 0.0
    %v603 = vmax.f32 %v599, 0.0
    %v604 = vld [vmem:[%s3 + $0x50] sm:$0xff]
    %606 = vset.pattern.permute.xlu0 0
    %607 = vperm.xlu0 %606, %v604
    %v608 = vpop.permute.xlu0 %607
    %v610 = vmul.f32 %v600, %v608
    %v611 = vmul.f32 %v601, %v608
    %v612 = vmul.f32 %v602, %v608
    %v613 = vmul.f32 %v603, %v608
    %v614 = vadd.f32 %v564, %v610
    %v615 = vadd.f32 %v565, %v611
    %v616 = vadd.f32 %v566, %v612
    %v617 = vadd.f32 %v567, %v613
    %v618 = vld [vmem:[%s2 + $0x58] sm:$0xff]
    %v619 = vld [vmem:[%s1 + $0x58] sm:$0xff]
    %621 = vset.pattern.permute.xlu0 0
    %622 = vperm.xlu0 %621, %v619
    %v623 = vpop.permute.xlu0 %622
    %v625 = vmul.f32 %v623, %v37
    %v626 = vmul.f32 %v623, %v41
    %v627 = vmul.f32 %v623, %v45
    %v628 = vmul.f32 %v623, %v49
    %630 = vset.pattern.permute.xlu0 0
    %631 = vperm.xlu0 %630, %v618
    %v632 = vpop.permute.xlu0 %631
    %v634 = vadd.f32 %v632, %v625
    %v635 = vadd.f32 %v632, %v626
    %v636 = vadd.f32 %v632, %v627
    %v637 = vadd.f32 %v632, %v628
    %638 = vset.pattern.permute.xlu0 1
    %639 = vperm.xlu0 %638, %v619
    %v640 = vpop.permute.xlu0 %639
    %v642 = vmul.f32 %v640, %v75
    %v643 = vmul.f32 %v640, %v79
    %v644 = vmul.f32 %v640, %v83
    %v645 = vmul.f32 %v640, %v87
    %v646 = vadd.f32 %v634, %v642
    %v647 = vadd.f32 %v635, %v643
    %v648 = vadd.f32 %v636, %v644
    %v649 = vadd.f32 %v637, %v645
    %v650 = vmax.f32 %v646, 0.0
    %v651 = vmax.f32 %v647, 0.0
    %v652 = vmax.f32 %v648, 0.0
    %v653 = vmax.f32 %v649, 0.0
    %v654 = vld [vmem:[%s3 + $0x58] sm:$0xff]
    %656 = vset.pattern.permute.xlu0 0
    %657 = vperm.xlu0 %656, %v654
    %v658 = vpop.permute.xlu0 %657
    %v660 = vmul.f32 %v650, %v658
    %v661 = vmul.f32 %v651, %v658
    %v662 = vmul.f32 %v652, %v658
    %v663 = vmul.f32 %v653, %v658
    %v664 = vadd.f32 %v614, %v660
    %v665 = vadd.f32 %v615, %v661
    %v666 = vadd.f32 %v616, %v662
    %v667 = vadd.f32 %v617, %v663
    %v668 = vld [vmem:[%s2 + $0x60] sm:$0xff]
    %v669 = vld [vmem:[%s1 + $0x60] sm:$0xff]
    %671 = vset.pattern.permute.xlu0 0
    %672 = vperm.xlu0 %671, %v669
    %v673 = vpop.permute.xlu0 %672
    %v675 = vmul.f32 %v673, %v37
    %v676 = vmul.f32 %v673, %v41
    %v677 = vmul.f32 %v673, %v45
    %v678 = vmul.f32 %v673, %v49
    %680 = vset.pattern.permute.xlu0 0
    %681 = vperm.xlu0 %680, %v668
    %v682 = vpop.permute.xlu0 %681
    %v684 = vadd.f32 %v682, %v675
    %v685 = vadd.f32 %v682, %v676
    %v686 = vadd.f32 %v682, %v677
    %v687 = vadd.f32 %v682, %v678
    %688 = vset.pattern.permute.xlu0 1
    %689 = vperm.xlu0 %688, %v669
    %v690 = vpop.permute.xlu0 %689
    %v692 = vmul.f32 %v690, %v75
    %v693 = vmul.f32 %v690, %v79
    %v694 = vmul.f32 %v690, %v83
    %v695 = vmul.f32 %v690, %v87
    %v696 = vadd.f32 %v684, %v692
    %v697 = vadd.f32 %v685, %v693
    %v698 = vadd.f32 %v686, %v694
    %v699 = vadd.f32 %v687, %v695
    %v700 = vmax.f32 %v696, 0.0
    %v701 = vmax.f32 %v697, 0.0
    %v702 = vmax.f32 %v698, 0.0
    %v703 = vmax.f32 %v699, 0.0
    %v704 = vld [vmem:[%s3 + $0x60] sm:$0xff]
    %706 = vset.pattern.permute.xlu0 0
    %707 = vperm.xlu0 %706, %v704
    %v708 = vpop.permute.xlu0 %707
    %v710 = vmul.f32 %v700, %v708
    %v711 = vmul.f32 %v701, %v708
    %v712 = vmul.f32 %v702, %v708
    %v713 = vmul.f32 %v703, %v708
    %v714 = vadd.f32 %v664, %v710
    %v715 = vadd.f32 %v665, %v711
    %v716 = vadd.f32 %v666, %v712
    %v717 = vadd.f32 %v667, %v713
    %v718 = vld [vmem:[%s2 + $0x68] sm:$0xff]
    %v719 = vld [vmem:[%s1 + $0x68] sm:$0xff]
    %721 = vset.pattern.permute.xlu0 0
    %722 = vperm.xlu0 %721, %v719
    %v723 = vpop.permute.xlu0 %722
    %v725 = vmul.f32 %v723, %v37
    %v726 = vmul.f32 %v723, %v41
    %v727 = vmul.f32 %v723, %v45
    %v728 = vmul.f32 %v723, %v49
    %730 = vset.pattern.permute.xlu0 0
    %731 = vperm.xlu0 %730, %v718
    %v732 = vpop.permute.xlu0 %731
    %v734 = vadd.f32 %v732, %v725
    %v735 = vadd.f32 %v732, %v726
    %v736 = vadd.f32 %v732, %v727
    %v737 = vadd.f32 %v732, %v728
    %738 = vset.pattern.permute.xlu0 1
    %739 = vperm.xlu0 %738, %v719
    %v740 = vpop.permute.xlu0 %739
    %v742 = vmul.f32 %v740, %v75
    %v743 = vmul.f32 %v740, %v79
    %v744 = vmul.f32 %v740, %v83
    %v745 = vmul.f32 %v740, %v87
    %v746 = vadd.f32 %v734, %v742
    %v747 = vadd.f32 %v735, %v743
    %v748 = vadd.f32 %v736, %v744
    %v749 = vadd.f32 %v737, %v745
    %v750 = vmax.f32 %v746, 0.0
    %v751 = vmax.f32 %v747, 0.0
    %v752 = vmax.f32 %v748, 0.0
    %v753 = vmax.f32 %v749, 0.0
    %v754 = vld [vmem:[%s3 + $0x68] sm:$0xff]
    %756 = vset.pattern.permute.xlu0 0
    %757 = vperm.xlu0 %756, %v754
    %v758 = vpop.permute.xlu0 %757
    %v760 = vmul.f32 %v750, %v758
    %v761 = vmul.f32 %v751, %v758
    %v762 = vmul.f32 %v752, %v758
    %v763 = vmul.f32 %v753, %v758
    %v764 = vadd.f32 %v714, %v760
    %v765 = vadd.f32 %v715, %v761
    %v766 = vadd.f32 %v716, %v762
    %v767 = vadd.f32 %v717, %v763
    %v768 = vld [vmem:[%s2 + $0x70] sm:$0xff]
    %v769 = vld [vmem:[%s1 + $0x70] sm:$0xff]
    %771 = vset.pattern.permute.xlu0 0
    %772 = vperm.xlu0 %771, %v769
    %v773 = vpop.permute.xlu0 %772
    %v775 = vmul.f32 %v773, %v37
    %v776 = vmul.f32 %v773, %v41
    %v777 = vmul.f32 %v773, %v45
    %v778 = vmul.f32 %v773, %v49
    %780 = vset.pattern.permute.xlu0 0
    %781 = vperm.xlu0 %780, %v768
    %v782 = vpop.permute.xlu0 %781
    %v784 = vadd.f32 %v782, %v775
    %v785 = vadd.f32 %v782, %v776
    %v786 = vadd.f32 %v782, %v777
    %v787 = vadd.f32 %v782, %v778
    %788 = vset.pattern.permute.xlu0 1
    %789 = vperm.xlu0 %788, %v769
    %v790 = vpop.permute.xlu0 %789
    %v792 = vmul.f32 %v790, %v75
    %v793 = vmul.f32 %v790, %v79
    %v794 = vmul.f32 %v790, %v83
    %v795 = vmul.f32 %v790, %v87
    %v796 = vadd.f32 %v784, %v792
    %v797 = vadd.f32 %v785, %v793
    %v798 = vadd.f32 %v786, %v794
    %v799 = vadd.f32 %v787, %v795
    %v800 = vmax.f32 %v796, 0.0
    %v801 = vmax.f32 %v797, 0.0
    %v802 = vmax.f32 %v798, 0.0
    %v803 = vmax.f32 %v799, 0.0
    %v804 = vld [vmem:[%s3 + $0x70] sm:$0xff]
    %806 = vset.pattern.permute.xlu0 0
    %807 = vperm.xlu0 %806, %v804
    %v808 = vpop.permute.xlu0 %807
    %v810 = vmul.f32 %v800, %v808
    %v811 = vmul.f32 %v801, %v808
    %v812 = vmul.f32 %v802, %v808
    %v813 = vmul.f32 %v803, %v808
    %v814 = vadd.f32 %v764, %v810
    %v815 = vadd.f32 %v765, %v811
    %v816 = vadd.f32 %v766, %v812
    %v817 = vadd.f32 %v767, %v813
    %v818 = vld [vmem:[%s2 + $0x78] sm:$0xff]
    %v819 = vld [vmem:[%s1 + $0x78] sm:$0xff]
    %821 = vset.pattern.permute.xlu0 0
    %822 = vperm.xlu0 %821, %v819
    %v823 = vpop.permute.xlu0 %822
    %v825 = vmul.f32 %v823, %v37
    %v826 = vmul.f32 %v823, %v41
    %v827 = vmul.f32 %v823, %v45
    %v828 = vmul.f32 %v823, %v49
    %830 = vset.pattern.permute.xlu0 0
    %831 = vperm.xlu0 %830, %v818
    %v832 = vpop.permute.xlu0 %831
    %v834 = vadd.f32 %v832, %v825
    %v835 = vadd.f32 %v832, %v826
    %v836 = vadd.f32 %v832, %v827
    %v837 = vadd.f32 %v832, %v828
    %838 = vset.pattern.permute.xlu0 1
    %839 = vperm.xlu0 %838, %v819
    %v840 = vpop.permute.xlu0 %839
    %v842 = vmul.f32 %v840, %v75
    %v843 = vmul.f32 %v840, %v79
    %v844 = vmul.f32 %v840, %v83
    %v845 = vmul.f32 %v840, %v87
    %v846 = vadd.f32 %v834, %v842
    %v847 = vadd.f32 %v835, %v843
    %v848 = vadd.f32 %v836, %v844
    %v849 = vadd.f32 %v837, %v845
    %v850 = vmax.f32 %v846, 0.0
    %v851 = vmax.f32 %v847, 0.0
    %v852 = vmax.f32 %v848, 0.0
    %v853 = vmax.f32 %v849, 0.0
    %v854 = vld [vmem:[%s3 + $0x78] sm:$0xff]
    %856 = vset.pattern.permute.xlu0 0
    %857 = vperm.xlu0 %856, %v854
    %v858 = vpop.permute.xlu0 %857
    %v860 = vmul.f32 %v850, %v858
    %v861 = vmul.f32 %v851, %v858
    %v862 = vmul.f32 %v852, %v858
    %v863 = vmul.f32 %v853, %v858
    %v864 = vadd.f32 %v814, %v860
    %v865 = vadd.f32 %v815, %v861
    %v866 = vadd.f32 %v816, %v862
    %v867 = vadd.f32 %v817, %v863
    %v868 = vrot.slane %v864, 4
    %v869 = vadd.f32 %v864, %v868
    %v870 = vrot.slane %v869, 2
    %v871 = vadd.f32 %v869, %v870
    %v872 = vrot.slane %v871, 1
    %v873 = vadd.f32 %v871, %v872
    %v874 = vrot.slane %v865, 4
    %v875 = vadd.f32 %v865, %v874
    %v876 = vrot.slane %v875, 2
    %v877 = vadd.f32 %v875, %v876
    %v878 = vrot.slane %v877, 1
    %v879 = vadd.f32 %v877, %v878
    %v880 = vrot.slane %v866, 4
    %v881 = vadd.f32 %v866, %v880
    %v882 = vrot.slane %v881, 2
    %v883 = vadd.f32 %v881, %v882
    %v884 = vrot.slane %v883, 1
    %v885 = vadd.f32 %v883, %v884
    %v886 = vrot.slane %v867, 4
    %v887 = vadd.f32 %v867, %v886
    %v888 = vrot.slane %v887, 2
    %v889 = vadd.f32 %v887, %v888
    %v890 = vrot.slane %v889, 1
    %v891 = vadd.f32 %v889, %v890
    %v892 = vstv %s22
    %v893 = vadd.f32 %v873, %v892
    %v894 = vadd.f32 %v879, %v892
    %v895 = vadd.f32 %v885, %v892
    %v896 = vadd.f32 %v891, %v892
    %v897 = vtanh.pop %v893
    %v898 = vtanh.pop %v894
    %v899 = vtanh.pop %v895
    %v900 = vtanh.pop %v896
    %v905 = vcombine.low %v897, %v898
    %v906 = vcombine.low %v899, %v900
    %v908 = vunpack.c.l.s4 1966171168
    %v909 = vunpack.c.0.s8 %v908
    %v910 = vlaneseq
    %v911 = vshrl.u32 %v910, 7
    %v912 = vsub.s32 %v909, %v911
    %v913 = vrot.slane %v905, %v912
    %v915 = vunpack.c.l.s4 1966171168
    %v916 = vunpack.c.0.s8 %v915
    %v917 = vlaneseq
    %v918 = vshrl.u32 %v917, 7
    %v919 = vsub.s32 %v916, %v918
    %v920 = vrot.slane %v906, %v919
    %v921 = vcombine.low %v913, %v920
    %v923 = vunpack.c.l.s4 1966171168
    %v924 = vunpack.c.0.s8 %v923
    %v925 = vlaneseq
    %v926 = vshrl.u32 %v925, 7
    %v927 = vsub.s32 %v924, %v926
    %v928 = vrot.slane %v921, %v927
    %v930 = vlaneseq
    %vm931 = vcmp.ge.s32.totalorder %v930, 0
    %vm932 = vcmp.lt.s32.totalorder %v930, 512
    %vm933 = vmand %vm931, %vm932
    %934 = vst.msk [vmem:[#allocation3] sm:$0xf] %vm933, %v928
    %s935 = scalar_lea.vmem %s0, 8
    %v936 = vld [vmem:[%s935] ss:$2 sm:$0xf]
    %s937 = scalar_lea.vmem %s0, 9
    %v938 = vld [vmem:[%s937] ss:$2 sm:$0xf]
    %v939 = vld [vmem:[%s2] sm:$0xff]
    %v940 = vld [vmem:[%s1] sm:$0xff]
    %942 = vset.pattern.permute.xlu0 0
    %943 = vperm.xlu0 %942, %v940
    %v944 = vpop.permute.xlu0 %943
    %v947 = vlaneseq
    %v948 = vshrl.u32 %v947, 7
    %v949 = vsub.s32 0, %v948
    %v950 = vrot.slane %v936, %v949
    %v951 = vlaneseq
    %v952 = vshrl.u32 %v951, 7
    %v953 = vsub.s32 1, %v952
    %v954 = vrot.slane %v936, %v953
    %v955 = vlaneseq
    %v956 = vshrl.u32 %v955, 7
    %v957 = vsub.s32 2, %v956
    %v958 = vrot.slane %v936, %v957
    %v959 = vlaneseq
    %v960 = vshrl.u32 %v959, 7
    %v961 = vsub.s32 3, %v960
    %v962 = vrot.slane %v936, %v961
    %v967 = vmul.f32 %v944, %v950
    %v968 = vmul.f32 %v944, %v954
    %v969 = vmul.f32 %v944, %v958
    %v970 = vmul.f32 %v944, %v962
    %972 = vset.pattern.permute.xlu0 0
    %973 = vperm.xlu0 %972, %v939
    %v974 = vpop.permute.xlu0 %973
    %v976 = vadd.f32 %v974, %v967
    %v977 = vadd.f32 %v974, %v968
    %v978 = vadd.f32 %v974, %v969
    %v979 = vadd.f32 %v974, %v970
    %980 = vset.pattern.permute.xlu0 1
    %981 = vperm.xlu0 %980, %v940
    %v982 = vpop.permute.xlu0 %981
    %v985 = vlaneseq
    %v986 = vshrl.u32 %v985, 7
    %v987 = vsub.s32 0, %v986
    %v988 = vrot.slane %v938, %v987
    %v989 = vlaneseq
    %v990 = vshrl.u32 %v989, 7
    %v991 = vsub.s32 1, %v990
    %v992 = vrot.slane %v938, %v991
    %v993 = vlaneseq
    %v994 = vshrl.u32 %v993, 7
    %v995 = vsub.s32 2, %v994
    %v996 = vrot.slane %v938, %v995
    %v997 = vlaneseq
    %v998 = vshrl.u32 %v997, 7
    %v999 = vsub.s32 3, %v998
    %v1000 = vrot.slane %v938, %v999
    %v1005 = vmul.f32 %v982, %v988
    %v1006 = vmul.f32 %v982, %v992
    %v1007 = vmul.f32 %v982, %v996
    %v1008 = vmul.f32 %v982, %v1000
    %v1009 = vadd.f32 %v976, %v1005
    %v1010 = vadd.f32 %v977, %v1006
    %v1011 = vadd.f32 %v978, %v1007
    %v1012 = vadd.f32 %v979, %v1008
    %v1013 = vmax.f32 %v1009, 0.0
    %v1014 = vmax.f32 %v1010, 0.0
    %v1015 = vmax.f32 %v1011, 0.0
    %v1016 = vmax.f32 %v1012, 0.0
    %v1017 = vld [vmem:[%s3] sm:$0xff]
    %1019 = vset.pattern.permute.xlu0 0
    %1020 = vperm.xlu0 %1019, %v1017
    %v1021 = vpop.permute.xlu0 %1020
    %v1023 = vmul.f32 %v1013, %v1021
    %v1024 = vmul.f32 %v1014, %v1021
    %v1025 = vmul.f32 %v1015, %v1021
    %v1026 = vmul.f32 %v1016, %v1021
    %v1027 = vadd.f32 %v1023, 0.0
    %v1028 = vadd.f32 %v1024, 0.0
    %v1029 = vadd.f32 %v1025, 0.0
    %v1030 = vadd.f32 %v1026, 0.0
    %v1031 = vld [vmem:[%s2 + $0x8] sm:$0xff]
    %v1032 = vld [vmem:[%s1 + $0x8] sm:$0xff]
    %1034 = vset.pattern.permute.xlu0 0
    %1035 = vperm.xlu0 %1034, %v1032
    %v1036 = vpop.permute.xlu0 %1035
    %v1038 = vmul.f32 %v1036, %v950
    %v1039 = vmul.f32 %v1036, %v954
    %v1040 = vmul.f32 %v1036, %v958
    %v1041 = vmul.f32 %v1036, %v962
    %1043 = vset.pattern.permute.xlu0 0
    %1044 = vperm.xlu0 %1043, %v1031
    %v1045 = vpop.permute.xlu0 %1044
    %v1047 = vadd.f32 %v1045, %v1038
    %v1048 = vadd.f32 %v1045, %v1039
    %v1049 = vadd.f32 %v1045, %v1040
    %v1050 = vadd.f32 %v1045, %v1041
    %1051 = vset.pattern.permute.xlu0 1
    %1052 = vperm.xlu0 %1051, %v1032
    %v1053 = vpop.permute.xlu0 %1052
    %v1055 = vmul.f32 %v1053, %v988
    %v1056 = vmul.f32 %v1053, %v992
    %v1057 = vmul.f32 %v1053, %v996
    %v1058 = vmul.f32 %v1053, %v1000
    %v1059 = vadd.f32 %v1047, %v1055
    %v1060 = vadd.f32 %v1048, %v1056
    %v1061 = vadd.f32 %v1049, %v1057
    %v1062 = vadd.f32 %v1050, %v1058
    %v1063 = vmax.f32 %v1059, 0.0
    %v1064 = vmax.f32 %v1060, 0.0
    %v1065 = vmax.f32 %v1061, 0.0
    %v1066 = vmax.f32 %v1062, 0.0
    %v1067 = vld [vmem:[%s3 + $0x8] sm:$0xff]
    %1069 = vset.pattern.permute.xlu0 0
    %1070 = vperm.xlu0 %1069, %v1067
    %v1071 = vpop.permute.xlu0 %1070
    %v1073 = vmul.f32 %v1063, %v1071
    %v1074 = vmul.f32 %v1064, %v1071
    %v1075 = vmul.f32 %v1065, %v1071
    %v1076 = vmul.f32 %v1066, %v1071
    %v1077 = vadd.f32 %v1027, %v1073
    %v1078 = vadd.f32 %v1028, %v1074
    %v1079 = vadd.f32 %v1029, %v1075
    %v1080 = vadd.f32 %v1030, %v1076
    %v1081 = vld [vmem:[%s2 + $0x10] sm:$0xff]
    %v1082 = vld [vmem:[%s1 + $0x10] sm:$0xff]
    %1084 = vset.pattern.permute.xlu0 0
    %1085 = vperm.xlu0 %1084, %v1082
    %v1086 = vpop.permute.xlu0 %1085
    %v1088 = vmul.f32 %v1086, %v950
    %v1089 = vmul.f32 %v1086, %v954
    %v1090 = vmul.f32 %v1086, %v958
    %v1091 = vmul.f32 %v1086, %v962
    %1093 = vset.pattern.permute.xlu0 0
    %1094 = vperm.xlu0 %1093, %v1081
    %v1095 = vpop.permute.xlu0 %1094
    %v1097 = vadd.f32 %v1095, %v1088
    %v1098 = vadd.f32 %v1095, %v1089
    %v1099 = vadd.f32 %v1095, %v1090
    %v1100 = vadd.f32 %v1095, %v1091
    %1101 = vset.pattern.permute.xlu0 1
    %1102 = vperm.xlu0 %1101, %v1082
    %v1103 = vpop.permute.xlu0 %1102
    %v1105 = vmul.f32 %v1103, %v988
    %v1106 = vmul.f32 %v1103, %v992
    %v1107 = vmul.f32 %v1103, %v996
    %v1108 = vmul.f32 %v1103, %v1000
    %v1109 = vadd.f32 %v1097, %v1105
    %v1110 = vadd.f32 %v1098, %v1106
    %v1111 = vadd.f32 %v1099, %v1107
    %v1112 = vadd.f32 %v1100, %v1108
    %v1113 = vmax.f32 %v1109, 0.0
    %v1114 = vmax.f32 %v1110, 0.0
    %v1115 = vmax.f32 %v1111, 0.0
    %v1116 = vmax.f32 %v1112, 0.0
    %v1117 = vld [vmem:[%s3 + $0x10] sm:$0xff]
    %1119 = vset.pattern.permute.xlu0 0
    %1120 = vperm.xlu0 %1119, %v1117
    %v1121 = vpop.permute.xlu0 %1120
    %v1123 = vmul.f32 %v1113, %v1121
    %v1124 = vmul.f32 %v1114, %v1121
    %v1125 = vmul.f32 %v1115, %v1121
    %v1126 = vmul.f32 %v1116, %v1121
    %v1127 = vadd.f32 %v1077, %v1123
    %v1128 = vadd.f32 %v1078, %v1124
    %v1129 = vadd.f32 %v1079, %v1125
    %v1130 = vadd.f32 %v1080, %v1126
    %v1131 = vld [vmem:[%s2 + $0x18] sm:$0xff]
    %v1132 = vld [vmem:[%s1 + $0x18] sm:$0xff]
    %1134 = vset.pattern.permute.xlu0 0
    %1135 = vperm.xlu0 %1134, %v1132
    %v1136 = vpop.permute.xlu0 %1135
    %v1138 = vmul.f32 %v1136, %v950
    %v1139 = vmul.f32 %v1136, %v954
    %v1140 = vmul.f32 %v1136, %v958
    %v1141 = vmul.f32 %v1136, %v962
    %1143 = vset.pattern.permute.xlu0 0
    %1144 = vperm.xlu0 %1143, %v1131
    %v1145 = vpop.permute.xlu0 %1144
    %v1147 = vadd.f32 %v1145, %v1138
    %v1148 = vadd.f32 %v1145, %v1139
    %v1149 = vadd.f32 %v1145, %v1140
    %v1150 = vadd.f32 %v1145, %v1141
    %1151 = vset.pattern.permute.xlu0 1
    %1152 = vperm.xlu0 %1151, %v1132
    %v1153 = vpop.permute.xlu0 %1152
    %v1155 = vmul.f32 %v1153, %v988
    %v1156 = vmul.f32 %v1153, %v992
    %v1157 = vmul.f32 %v1153, %v996
    %v1158 = vmul.f32 %v1153, %v1000
    %v1159 = vadd.f32 %v1147, %v1155
    %v1160 = vadd.f32 %v1148, %v1156
    %v1161 = vadd.f32 %v1149, %v1157
    %v1162 = vadd.f32 %v1150, %v1158
    %v1163 = vmax.f32 %v1159, 0.0
    %v1164 = vmax.f32 %v1160, 0.0
    %v1165 = vmax.f32 %v1161, 0.0
    %v1166 = vmax.f32 %v1162, 0.0
    %v1167 = vld [vmem:[%s3 + $0x18] sm:$0xff]
    %1169 = vset.pattern.permute.xlu0 0
    %1170 = vperm.xlu0 %1169, %v1167
    %v1171 = vpop.permute.xlu0 %1170
    %v1173 = vmul.f32 %v1163, %v1171
    %v1174 = vmul.f32 %v1164, %v1171
    %v1175 = vmul.f32 %v1165, %v1171
    %v1176 = vmul.f32 %v1166, %v1171
    %v1177 = vadd.f32 %v1127, %v1173
    %v1178 = vadd.f32 %v1128, %v1174
    %v1179 = vadd.f32 %v1129, %v1175
    %v1180 = vadd.f32 %v1130, %v1176
    %v1181 = vld [vmem:[%s2 + $0x20] sm:$0xff]
    %v1182 = vld [vmem:[%s1 + $0x20] sm:$0xff]
    %1184 = vset.pattern.permute.xlu0 0
    %1185 = vperm.xlu0 %1184, %v1182
    %v1186 = vpop.permute.xlu0 %1185
    %v1188 = vmul.f32 %v1186, %v950
    %v1189 = vmul.f32 %v1186, %v954
    %v1190 = vmul.f32 %v1186, %v958
    %v1191 = vmul.f32 %v1186, %v962
    %1193 = vset.pattern.permute.xlu0 0
    %1194 = vperm.xlu0 %1193, %v1181
    %v1195 = vpop.permute.xlu0 %1194
    %v1197 = vadd.f32 %v1195, %v1188
    %v1198 = vadd.f32 %v1195, %v1189
    %v1199 = vadd.f32 %v1195, %v1190
    %v1200 = vadd.f32 %v1195, %v1191
    %1201 = vset.pattern.permute.xlu0 1
    %1202 = vperm.xlu0 %1201, %v1182
    %v1203 = vpop.permute.xlu0 %1202
    %v1205 = vmul.f32 %v1203, %v988
    %v1206 = vmul.f32 %v1203, %v992
    %v1207 = vmul.f32 %v1203, %v996
    %v1208 = vmul.f32 %v1203, %v1000
    %v1209 = vadd.f32 %v1197, %v1205
    %v1210 = vadd.f32 %v1198, %v1206
    %v1211 = vadd.f32 %v1199, %v1207
    %v1212 = vadd.f32 %v1200, %v1208
    %v1213 = vmax.f32 %v1209, 0.0
    %v1214 = vmax.f32 %v1210, 0.0
    %v1215 = vmax.f32 %v1211, 0.0
    %v1216 = vmax.f32 %v1212, 0.0
    %v1217 = vld [vmem:[%s3 + $0x20] sm:$0xff]
    %1219 = vset.pattern.permute.xlu0 0
    %1220 = vperm.xlu0 %1219, %v1217
    %v1221 = vpop.permute.xlu0 %1220
    %v1223 = vmul.f32 %v1213, %v1221
    %v1224 = vmul.f32 %v1214, %v1221
    %v1225 = vmul.f32 %v1215, %v1221
    %v1226 = vmul.f32 %v1216, %v1221
    %v1227 = vadd.f32 %v1177, %v1223
    %v1228 = vadd.f32 %v1178, %v1224
    %v1229 = vadd.f32 %v1179, %v1225
    %v1230 = vadd.f32 %v1180, %v1226
    %v1231 = vld [vmem:[%s2 + $0x28] sm:$0xff]
    %v1232 = vld [vmem:[%s1 + $0x28] sm:$0xff]
    %1234 = vset.pattern.permute.xlu0 0
    %1235 = vperm.xlu0 %1234, %v1232
    %v1236 = vpop.permute.xlu0 %1235
    %v1238 = vmul.f32 %v1236, %v950
    %v1239 = vmul.f32 %v1236, %v954
    %v1240 = vmul.f32 %v1236, %v958
    %v1241 = vmul.f32 %v1236, %v962
    %1243 = vset.pattern.permute.xlu0 0
    %1244 = vperm.xlu0 %1243, %v1231
    %v1245 = vpop.permute.xlu0 %1244
    %v1247 = vadd.f32 %v1245, %v1238
    %v1248 = vadd.f32 %v1245, %v1239
    %v1249 = vadd.f32 %v1245, %v1240
    %v1250 = vadd.f32 %v1245, %v1241
    %1251 = vset.pattern.permute.xlu0 1
    %1252 = vperm.xlu0 %1251, %v1232
    %v1253 = vpop.permute.xlu0 %1252
    %v1255 = vmul.f32 %v1253, %v988
    %v1256 = vmul.f32 %v1253, %v992
    %v1257 = vmul.f32 %v1253, %v996
    %v1258 = vmul.f32 %v1253, %v1000
    %v1259 = vadd.f32 %v1247, %v1255
    %v1260 = vadd.f32 %v1248, %v1256
    %v1261 = vadd.f32 %v1249, %v1257
    %v1262 = vadd.f32 %v1250, %v1258
    %v1263 = vmax.f32 %v1259, 0.0
    %v1264 = vmax.f32 %v1260, 0.0
    %v1265 = vmax.f32 %v1261, 0.0
    %v1266 = vmax.f32 %v1262, 0.0
    %v1267 = vld [vmem:[%s3 + $0x28] sm:$0xff]
    %1269 = vset.pattern.permute.xlu0 0
    %1270 = vperm.xlu0 %1269, %v1267
    %v1271 = vpop.permute.xlu0 %1270
    %v1273 = vmul.f32 %v1263, %v1271
    %v1274 = vmul.f32 %v1264, %v1271
    %v1275 = vmul.f32 %v1265, %v1271
    %v1276 = vmul.f32 %v1266, %v1271
    %v1277 = vadd.f32 %v1227, %v1273
    %v1278 = vadd.f32 %v1228, %v1274
    %v1279 = vadd.f32 %v1229, %v1275
    %v1280 = vadd.f32 %v1230, %v1276
    %v1281 = vld [vmem:[%s2 + $0x30] sm:$0xff]
    %v1282 = vld [vmem:[%s1 + $0x30] sm:$0xff]
    %1284 = vset.pattern.permute.xlu0 0
    %1285 = vperm.xlu0 %1284, %v1282
    %v1286 = vpop.permute.xlu0 %1285
    %v1288 = vmul.f32 %v1286, %v950
    %v1289 = vmul.f32 %v1286, %v954
    %v1290 = vmul.f32 %v1286, %v958
    %v1291 = vmul.f32 %v1286, %v962
    %1293 = vset.pattern.permute.xlu0 0
    %1294 = vperm.xlu0 %1293, %v1281
    %v1295 = vpop.permute.xlu0 %1294
    %v1297 = vadd.f32 %v1295, %v1288
    %v1298 = vadd.f32 %v1295, %v1289
    %v1299 = vadd.f32 %v1295, %v1290
    %v1300 = vadd.f32 %v1295, %v1291
    %1301 = vset.pattern.permute.xlu0 1
    %1302 = vperm.xlu0 %1301, %v1282
    %v1303 = vpop.permute.xlu0 %1302
    %v1305 = vmul.f32 %v1303, %v988
    %v1306 = vmul.f32 %v1303, %v992
    %v1307 = vmul.f32 %v1303, %v996
    %v1308 = vmul.f32 %v1303, %v1000
    %v1309 = vadd.f32 %v1297, %v1305
    %v1310 = vadd.f32 %v1298, %v1306
    %v1311 = vadd.f32 %v1299, %v1307
    %v1312 = vadd.f32 %v1300, %v1308
    %v1313 = vmax.f32 %v1309, 0.0
    %v1314 = vmax.f32 %v1310, 0.0
    %v1315 = vmax.f32 %v1311, 0.0
    %v1316 = vmax.f32 %v1312, 0.0
    %v1317 = vld [vmem:[%s3 + $0x30] sm:$0xff]
    %1319 = vset.pattern.permute.xlu0 0
    %1320 = vperm.xlu0 %1319, %v1317
    %v1321 = vpop.permute.xlu0 %1320
    %v1323 = vmul.f32 %v1313, %v1321
    %v1324 = vmul.f32 %v1314, %v1321
    %v1325 = vmul.f32 %v1315, %v1321
    %v1326 = vmul.f32 %v1316, %v1321
    %v1327 = vadd.f32 %v1277, %v1323
    %v1328 = vadd.f32 %v1278, %v1324
    %v1329 = vadd.f32 %v1279, %v1325
    %v1330 = vadd.f32 %v1280, %v1326
    %v1331 = vld [vmem:[%s2 + $0x38] sm:$0xff]
    %v1332 = vld [vmem:[%s1 + $0x38] sm:$0xff]
    %1334 = vset.pattern.permute.xlu0 0
    %1335 = vperm.xlu0 %1334, %v1332
    %v1336 = vpop.permute.xlu0 %1335
    %v1338 = vmul.f32 %v1336, %v950
    %v1339 = vmul.f32 %v1336, %v954
    %v1340 = vmul.f32 %v1336, %v958
    %v1341 = vmul.f32 %v1336, %v962
    %1343 = vset.pattern.permute.xlu0 0
    %1344 = vperm.xlu0 %1343, %v1331
    %v1345 = vpop.permute.xlu0 %1344
    %v1347 = vadd.f32 %v1345, %v1338
    %v1348 = vadd.f32 %v1345, %v1339
    %v1349 = vadd.f32 %v1345, %v1340
    %v1350 = vadd.f32 %v1345, %v1341
    %1351 = vset.pattern.permute.xlu0 1
    %1352 = vperm.xlu0 %1351, %v1332
    %v1353 = vpop.permute.xlu0 %1352
    %v1355 = vmul.f32 %v1353, %v988
    %v1356 = vmul.f32 %v1353, %v992
    %v1357 = vmul.f32 %v1353, %v996
    %v1358 = vmul.f32 %v1353, %v1000
    %v1359 = vadd.f32 %v1347, %v1355
    %v1360 = vadd.f32 %v1348, %v1356
    %v1361 = vadd.f32 %v1349, %v1357
    %v1362 = vadd.f32 %v1350, %v1358
    %v1363 = vmax.f32 %v1359, 0.0
    %v1364 = vmax.f32 %v1360, 0.0
    %v1365 = vmax.f32 %v1361, 0.0
    %v1366 = vmax.f32 %v1362, 0.0
    %v1367 = vld [vmem:[%s3 + $0x38] sm:$0xff]
    %1369 = vset.pattern.permute.xlu0 0
    %1370 = vperm.xlu0 %1369, %v1367
    %v1371 = vpop.permute.xlu0 %1370
    %v1373 = vmul.f32 %v1363, %v1371
    %v1374 = vmul.f32 %v1364, %v1371
    %v1375 = vmul.f32 %v1365, %v1371
    %v1376 = vmul.f32 %v1366, %v1371
    %v1377 = vadd.f32 %v1327, %v1373
    %v1378 = vadd.f32 %v1328, %v1374
    %v1379 = vadd.f32 %v1329, %v1375
    %v1380 = vadd.f32 %v1330, %v1376
    %v1381 = vld [vmem:[%s2 + $0x40] sm:$0xff]
    %v1382 = vld [vmem:[%s1 + $0x40] sm:$0xff]
    %1384 = vset.pattern.permute.xlu0 0
    %1385 = vperm.xlu0 %1384, %v1382
    %v1386 = vpop.permute.xlu0 %1385
    %v1388 = vmul.f32 %v1386, %v950
    %v1389 = vmul.f32 %v1386, %v954
    %v1390 = vmul.f32 %v1386, %v958
    %v1391 = vmul.f32 %v1386, %v962
    %1393 = vset.pattern.permute.xlu0 0
    %1394 = vperm.xlu0 %1393, %v1381
    %v1395 = vpop.permute.xlu0 %1394
    %v1397 = vadd.f32 %v1395, %v1388
    %v1398 = vadd.f32 %v1395, %v1389
    %v1399 = vadd.f32 %v1395, %v1390
    %v1400 = vadd.f32 %v1395, %v1391
    %1401 = vset.pattern.permute.xlu0 1
    %1402 = vperm.xlu0 %1401, %v1382
    %v1403 = vpop.permute.xlu0 %1402
    %v1405 = vmul.f32 %v1403, %v988
    %v1406 = vmul.f32 %v1403, %v992
    %v1407 = vmul.f32 %v1403, %v996
    %v1408 = vmul.f32 %v1403, %v1000
    %v1409 = vadd.f32 %v1397, %v1405
    %v1410 = vadd.f32 %v1398, %v1406
    %v1411 = vadd.f32 %v1399, %v1407
    %v1412 = vadd.f32 %v1400, %v1408
    %v1413 = vmax.f32 %v1409, 0.0
    %v1414 = vmax.f32 %v1410, 0.0
    %v1415 = vmax.f32 %v1411, 0.0
    %v1416 = vmax.f32 %v1412, 0.0
    %v1417 = vld [vmem:[%s3 + $0x40] sm:$0xff]
    %1419 = vset.pattern.permute.xlu0 0
    %1420 = vperm.xlu0 %1419, %v1417
    %v1421 = vpop.permute.xlu0 %1420
    %v1423 = vmul.f32 %v1413, %v1421
    %v1424 = vmul.f32 %v1414, %v1421
    %v1425 = vmul.f32 %v1415, %v1421
    %v1426 = vmul.f32 %v1416, %v1421
    %v1427 = vadd.f32 %v1377, %v1423
    %v1428 = vadd.f32 %v1378, %v1424
    %v1429 = vadd.f32 %v1379, %v1425
    %v1430 = vadd.f32 %v1380, %v1426
    %v1431 = vld [vmem:[%s2 + $0x48] sm:$0xff]
    %v1432 = vld [vmem:[%s1 + $0x48] sm:$0xff]
    %1434 = vset.pattern.permute.xlu0 0
    %1435 = vperm.xlu0 %1434, %v1432
    %v1436 = vpop.permute.xlu0 %1435
    %v1438 = vmul.f32 %v1436, %v950
    %v1439 = vmul.f32 %v1436, %v954
    %v1440 = vmul.f32 %v1436, %v958
    %v1441 = vmul.f32 %v1436, %v962
    %1443 = vset.pattern.permute.xlu0 0
    %1444 = vperm.xlu0 %1443, %v1431
    %v1445 = vpop.permute.xlu0 %1444
    %v1447 = vadd.f32 %v1445, %v1438
    %v1448 = vadd.f32 %v1445, %v1439
    %v1449 = vadd.f32 %v1445, %v1440
    %v1450 = vadd.f32 %v1445, %v1441
    %1451 = vset.pattern.permute.xlu0 1
    %1452 = vperm.xlu0 %1451, %v1432
    %v1453 = vpop.permute.xlu0 %1452
    %v1455 = vmul.f32 %v1453, %v988
    %v1456 = vmul.f32 %v1453, %v992
    %v1457 = vmul.f32 %v1453, %v996
    %v1458 = vmul.f32 %v1453, %v1000
    %v1459 = vadd.f32 %v1447, %v1455
    %v1460 = vadd.f32 %v1448, %v1456
    %v1461 = vadd.f32 %v1449, %v1457
    %v1462 = vadd.f32 %v1450, %v1458
    %v1463 = vmax.f32 %v1459, 0.0
    %v1464 = vmax.f32 %v1460, 0.0
    %v1465 = vmax.f32 %v1461, 0.0
    %v1466 = vmax.f32 %v1462, 0.0
    %v1467 = vld [vmem:[%s3 + $0x48] sm:$0xff]
    %1469 = vset.pattern.permute.xlu0 0
    %1470 = vperm.xlu0 %1469, %v1467
    %v1471 = vpop.permute.xlu0 %1470
    %v1473 = vmul.f32 %v1463, %v1471
    %v1474 = vmul.f32 %v1464, %v1471
    %v1475 = vmul.f32 %v1465, %v1471
    %v1476 = vmul.f32 %v1466, %v1471
    %v1477 = vadd.f32 %v1427, %v1473
    %v1478 = vadd.f32 %v1428, %v1474
    %v1479 = vadd.f32 %v1429, %v1475
    %v1480 = vadd.f32 %v1430, %v1476
    %v1481 = vld [vmem:[%s2 + $0x50] sm:$0xff]
    %v1482 = vld [vmem:[%s1 + $0x50] sm:$0xff]
    %1484 = vset.pattern.permute.xlu0 0
    %1485 = vperm.xlu0 %1484, %v1482
    %v1486 = vpop.permute.xlu0 %1485
    %v1488 = vmul.f32 %v1486, %v950
    %v1489 = vmul.f32 %v1486, %v954
    %v1490 = vmul.f32 %v1486, %v958
    %v1491 = vmul.f32 %v1486, %v962
    %1493 = vset.pattern.permute.xlu0 0
    %1494 = vperm.xlu0 %1493, %v1481
    %v1495 = vpop.permute.xlu0 %1494
    %v1497 = vadd.f32 %v1495, %v1488
    %v1498 = vadd.f32 %v1495, %v1489
    %v1499 = vadd.f32 %v1495, %v1490
    %v1500 = vadd.f32 %v1495, %v1491
    %1501 = vset.pattern.permute.xlu0 1
    %1502 = vperm.xlu0 %1501, %v1482
    %v1503 = vpop.permute.xlu0 %1502
    %v1505 = vmul.f32 %v1503, %v988
    %v1506 = vmul.f32 %v1503, %v992
    %v1507 = vmul.f32 %v1503, %v996
    %v1508 = vmul.f32 %v1503, %v1000
    %v1509 = vadd.f32 %v1497, %v1505
    %v1510 = vadd.f32 %v1498, %v1506
    %v1511 = vadd.f32 %v1499, %v1507
    %v1512 = vadd.f32 %v1500, %v1508
    %v1513 = vmax.f32 %v1509, 0.0
    %v1514 = vmax.f32 %v1510, 0.0
    %v1515 = vmax.f32 %v1511, 0.0
    %v1516 = vmax.f32 %v1512, 0.0
    %v1517 = vld [vmem:[%s3 + $0x50] sm:$0xff]
    %1519 = vset.pattern.permute.xlu0 0
    %1520 = vperm.xlu0 %1519, %v1517
    %v1521 = vpop.permute.xlu0 %1520
    %v1523 = vmul.f32 %v1513, %v1521
    %v1524 = vmul.f32 %v1514, %v1521
    %v1525 = vmul.f32 %v1515, %v1521
    %v1526 = vmul.f32 %v1516, %v1521
    %v1527 = vadd.f32 %v1477, %v1523
    %v1528 = vadd.f32 %v1478, %v1524
    %v1529 = vadd.f32 %v1479, %v1525
    %v1530 = vadd.f32 %v1480, %v1526
    %v1531 = vld [vmem:[%s2 + $0x58] sm:$0xff]
    %v1532 = vld [vmem:[%s1 + $0x58] sm:$0xff]
    %1534 = vset.pattern.permute.xlu0 0
    %1535 = vperm.xlu0 %1534, %v1532
    %v1536 = vpop.permute.xlu0 %1535
    %v1538 = vmul.f32 %v1536, %v950
    %v1539 = vmul.f32 %v1536, %v954
    %v1540 = vmul.f32 %v1536, %v958
    %v1541 = vmul.f32 %v1536, %v962
    %1543 = vset.pattern.permute.xlu0 0
    %1544 = vperm.xlu0 %1543, %v1531
    %v1545 = vpop.permute.xlu0 %1544
    %v1547 = vadd.f32 %v1545, %v1538
    %v1548 = vadd.f32 %v1545, %v1539
    %v1549 = vadd.f32 %v1545, %v1540
    %v1550 = vadd.f32 %v1545, %v1541
    %1551 = vset.pattern.permute.xlu0 1
    %1552 = vperm.xlu0 %1551, %v1532
    %v1553 = vpop.permute.xlu0 %1552
    %v1555 = vmul.f32 %v1553, %v988
    %v1556 = vmul.f32 %v1553, %v992
    %v1557 = vmul.f32 %v1553, %v996
    %v1558 = vmul.f32 %v1553, %v1000
    %v1559 = vadd.f32 %v1547, %v1555
    %v1560 = vadd.f32 %v1548, %v1556
    %v1561 = vadd.f32 %v1549, %v1557
    %v1562 = vadd.f32 %v1550, %v1558
    %v1563 = vmax.f32 %v1559, 0.0
    %v1564 = vmax.f32 %v1560, 0.0
    %v1565 = vmax.f32 %v1561, 0.0
    %v1566 = vmax.f32 %v1562, 0.0
    %v1567 = vld [vmem:[%s3 + $0x58] sm:$0xff]
    %1569 = vset.pattern.permute.xlu0 0
    %1570 = vperm.xlu0 %1569, %v1567
    %v1571 = vpop.permute.xlu0 %1570
    %v1573 = vmul.f32 %v1563, %v1571
    %v1574 = vmul.f32 %v1564, %v1571
    %v1575 = vmul.f32 %v1565, %v1571
    %v1576 = vmul.f32 %v1566, %v1571
    %v1577 = vadd.f32 %v1527, %v1573
    %v1578 = vadd.f32 %v1528, %v1574
    %v1579 = vadd.f32 %v1529, %v1575
    %v1580 = vadd.f32 %v1530, %v1576
    %v1581 = vld [vmem:[%s2 + $0x60] sm:$0xff]
    %v1582 = vld [vmem:[%s1 + $0x60] sm:$0xff]
    %1584 = vset.pattern.permute.xlu0 0
    %1585 = vperm.xlu0 %1584, %v1582
    %v1586 = vpop.permute.xlu0 %1585
    %v1588 = vmul.f32 %v1586, %v950
    %v1589 = vmul.f32 %v1586, %v954
    %v1590 = vmul.f32 %v1586, %v958
    %v1591 = vmul.f32 %v1586, %v962
    %1593 = vset.pattern.permute.xlu0 0
    %1594 = vperm.xlu0 %1593, %v1581
    %v1595 = vpop.permute.xlu0 %1594
    %v1597 = vadd.f32 %v1595, %v1588
    %v1598 = vadd.f32 %v1595, %v1589
    %v1599 = vadd.f32 %v1595, %v1590
    %v1600 = vadd.f32 %v1595, %v1591
    %1601 = vset.pattern.permute.xlu0 1
    %1602 = vperm.xlu0 %1601, %v1582
    %v1603 = vpop.permute.xlu0 %1602
    %v1605 = vmul.f32 %v1603, %v988
    %v1606 = vmul.f32 %v1603, %v992
    %v1607 = vmul.f32 %v1603, %v996
    %v1608 = vmul.f32 %v1603, %v1000
    %v1609 = vadd.f32 %v1597, %v1605
    %v1610 = vadd.f32 %v1598, %v1606
    %v1611 = vadd.f32 %v1599, %v1607
    %v1612 = vadd.f32 %v1600, %v1608
    %v1613 = vmax.f32 %v1609, 0.0
    %v1614 = vmax.f32 %v1610, 0.0
    %v1615 = vmax.f32 %v1611, 0.0
    %v1616 = vmax.f32 %v1612, 0.0
    %v1617 = vld [vmem:[%s3 + $0x60] sm:$0xff]
    %1619 = vset.pattern.permute.xlu0 0
    %1620 = vperm.xlu0 %1619, %v1617
    %v1621 = vpop.permute.xlu0 %1620
    %v1623 = vmul.f32 %v1613, %v1621
    %v1624 = vmul.f32 %v1614, %v1621
    %v1625 = vmul.f32 %v1615, %v1621
    %v1626 = vmul.f32 %v1616, %v1621
    %v1627 = vadd.f32 %v1577, %v1623
    %v1628 = vadd.f32 %v1578, %v1624
    %v1629 = vadd.f32 %v1579, %v1625
    %v1630 = vadd.f32 %v1580, %v1626
    %v1631 = vld [vmem:[%s2 + $0x68] sm:$0xff]
    %v1632 = vld [vmem:[%s1 + $0x68] sm:$0xff]
    %1634 = vset.pattern.permute.xlu0 0
    %1635 = vperm.xlu0 %1634, %v1632
    %v1636 = vpop.permute.xlu0 %1635
    %v1638 = vmul.f32 %v1636, %v950
    %v1639 = vmul.f32 %v1636, %v954
    %v1640 = vmul.f32 %v1636, %v958
    %v1641 = vmul.f32 %v1636, %v962
    %1643 = vset.pattern.permute.xlu0 0
    %1644 = vperm.xlu0 %1643, %v1631
    %v1645 = vpop.permute.xlu0 %1644
    %v1647 = vadd.f32 %v1645, %v1638
    %v1648 = vadd.f32 %v1645, %v1639
    %v1649 = vadd.f32 %v1645, %v1640
    %v1650 = vadd.f32 %v1645, %v1641
    %1651 = vset.pattern.permute.xlu0 1
    %1652 = vperm.xlu0 %1651, %v1632
    %v1653 = vpop.permute.xlu0 %1652
    %v1655 = vmul.f32 %v1653, %v988
    %v1656 = vmul.f32 %v1653, %v992
    %v1657 = vmul.f32 %v1653, %v996
    %v1658 = vmul.f32 %v1653, %v1000
    %v1659 = vadd.f32 %v1647, %v1655
    %v1660 = vadd.f32 %v1648, %v1656
    %v1661 = vadd.f32 %v1649, %v1657
    %v1662 = vadd.f32 %v1650, %v1658
    %v1663 = vmax.f32 %v1659, 0.0
    %v1664 = vmax.f32 %v1660, 0.0
    %v1665 = vmax.f32 %v1661, 0.0
    %v1666 = vmax.f32 %v1662, 0.0
    %v1667 = vld [vmem:[%s3 + $0x68] sm:$0xff]
    %1669 = vset.pattern.permute.xlu0 0
    %1670 = vperm.xlu0 %1669, %v1667
    %v1671 = vpop.permute.xlu0 %1670
    %v1673 = vmul.f32 %v1663, %v1671
    %v1674 = vmul.f32 %v1664, %v1671
    %v1675 = vmul.f32 %v1665, %v1671
    %v1676 = vmul.f32 %v1666, %v1671
    %v1677 = vadd.f32 %v1627, %v1673
    %v1678 = vadd.f32 %v1628, %v1674
    %v1679 = vadd.f32 %v1629, %v1675
    %v1680 = vadd.f32 %v1630, %v1676
    %v1681 = vld [vmem:[%s2 + $0x70] sm:$0xff]
    %v1682 = vld [vmem:[%s1 + $0x70] sm:$0xff]
    %1684 = vset.pattern.permute.xlu0 0
    %1685 = vperm.xlu0 %1684, %v1682
    %v1686 = vpop.permute.xlu0 %1685
    %v1688 = vmul.f32 %v1686, %v950
    %v1689 = vmul.f32 %v1686, %v954
    %v1690 = vmul.f32 %v1686, %v958
    %v1691 = vmul.f32 %v1686, %v962
    %1693 = vset.pattern.permute.xlu0 0
    %1694 = vperm.xlu0 %1693, %v1681
    %v1695 = vpop.permute.xlu0 %1694
    %v1697 = vadd.f32 %v1695, %v1688
    %v1698 = vadd.f32 %v1695, %v1689
    %v1699 = vadd.f32 %v1695, %v1690
    %v1700 = vadd.f32 %v1695, %v1691
    %1701 = vset.pattern.permute.xlu0 1
    %1702 = vperm.xlu0 %1701, %v1682
    %v1703 = vpop.permute.xlu0 %1702
    %v1705 = vmul.f32 %v1703, %v988
    %v1706 = vmul.f32 %v1703, %v992
    %v1707 = vmul.f32 %v1703, %v996
    %v1708 = vmul.f32 %v1703, %v1000
    %v1709 = vadd.f32 %v1697, %v1705
    %v1710 = vadd.f32 %v1698, %v1706
    %v1711 = vadd.f32 %v1699, %v1707
    %v1712 = vadd.f32 %v1700, %v1708
    %v1713 = vmax.f32 %v1709, 0.0
    %v1714 = vmax.f32 %v1710, 0.0
    %v1715 = vmax.f32 %v1711, 0.0
    %v1716 = vmax.f32 %v1712, 0.0
    %v1717 = vld [vmem:[%s3 + $0x70] sm:$0xff]
    %1719 = vset.pattern.permute.xlu0 0
    %1720 = vperm.xlu0 %1719, %v1717
    %v1721 = vpop.permute.xlu0 %1720
    %v1723 = vmul.f32 %v1713, %v1721
    %v1724 = vmul.f32 %v1714, %v1721
    %v1725 = vmul.f32 %v1715, %v1721
    %v1726 = vmul.f32 %v1716, %v1721
    %v1727 = vadd.f32 %v1677, %v1723
    %v1728 = vadd.f32 %v1678, %v1724
    %v1729 = vadd.f32 %v1679, %v1725
    %v1730 = vadd.f32 %v1680, %v1726
    %v1731 = vld [vmem:[%s2 + $0x78] sm:$0xff]
    %v1732 = vld [vmem:[%s1 + $0x78] sm:$0xff]
    %1734 = vset.pattern.permute.xlu0 0
    %1735 = vperm.xlu0 %1734, %v1732
    %v1736 = vpop.permute.xlu0 %1735
    %v1738 = vmul.f32 %v1736, %v950
    %v1739 = vmul.f32 %v1736, %v954
    %v1740 = vmul.f32 %v1736, %v958
    %v1741 = vmul.f32 %v1736, %v962
    %1743 = vset.pattern.permute.xlu0 0
    %1744 = vperm.xlu0 %1743, %v1731
    %v1745 = vpop.permute.xlu0 %1744
    %v1747 = vadd.f32 %v1745, %v1738
    %v1748 = vadd.f32 %v1745, %v1739
    %v1749 = vadd.f32 %v1745, %v1740
    %v1750 = vadd.f32 %v1745, %v1741
    %1751 = vset.pattern.permute.xlu0 1
    %1752 = vperm.xlu0 %1751, %v1732
    %v1753 = vpop.permute.xlu0 %1752
    %v1755 = vmul.f32 %v1753, %v988
    %v1756 = vmul.f32 %v1753, %v992
    %v1757 = vmul.f32 %v1753, %v996
    %v1758 = vmul.f32 %v1753, %v1000
    %v1759 = vadd.f32 %v1747, %v1755
    %v1760 = vadd.f32 %v1748, %v1756
    %v1761 = vadd.f32 %v1749, %v1757
    %v1762 = vadd.f32 %v1750, %v1758
    %v1763 = vmax.f32 %v1759, 0.0
    %v1764 = vmax.f32 %v1760, 0.0
    %v1765 = vmax.f32 %v1761, 0.0
    %v1766 = vmax.f32 %v1762, 0.0
    %v1767 = vld [vmem:[%s3 + $0x78] sm:$0xff]
    %1769 = vset.pattern.permute.xlu0 0
    %1770 = vperm.xlu0 %1769, %v1767
    %v1771 = vpop.permute.xlu0 %1770
    %v1773 = vmul.f32 %v1763, %v1771
    %v1774 = vmul.f32 %v1764, %v1771
    %v1775 = vmul.f32 %v1765, %v1771
    %v1776 = vmul.f32 %v1766, %v1771
    %v1777 = vadd.f32 %v1727, %v1773
    %v1778 = vadd.f32 %v1728, %v1774
    %v1779 = vadd.f32 %v1729, %v1775
    %v1780 = vadd.f32 %v1730, %v1776
    %v1781 = vrot.slane %v1777, 4
    %v1782 = vadd.f32 %v1777, %v1781
    %v1783 = vrot.slane %v1782, 2
    %v1784 = vadd.f32 %v1782, %v1783
    %v1785 = vrot.slane %v1784, 1
    %v1786 = vadd.f32 %v1784, %v1785
    %v1787 = vrot.slane %v1778, 4
    %v1788 = vadd.f32 %v1778, %v1787
    %v1789 = vrot.slane %v1788, 2
    %v1790 = vadd.f32 %v1788, %v1789
    %v1791 = vrot.slane %v1790, 1
    %v1792 = vadd.f32 %v1790, %v1791
    %v1793 = vrot.slane %v1779, 4
    %v1794 = vadd.f32 %v1779, %v1793
    %v1795 = vrot.slane %v1794, 2
    %v1796 = vadd.f32 %v1794, %v1795
    %v1797 = vrot.slane %v1796, 1
    %v1798 = vadd.f32 %v1796, %v1797
    %v1799 = vrot.slane %v1780, 4
    %v1800 = vadd.f32 %v1780, %v1799
    %v1801 = vrot.slane %v1800, 2
    %v1802 = vadd.f32 %v1800, %v1801
    %v1803 = vrot.slane %v1802, 1
    %v1804 = vadd.f32 %v1802, %v1803
    %v1805 = vadd.f32 %v1786, %v892
    %v1806 = vadd.f32 %v1792, %v892
    %v1807 = vadd.f32 %v1798, %v892
    %v1808 = vadd.f32 %v1804, %v892
    %v1809 = vtanh.pop %v1805
    %v1810 = vtanh.pop %v1806
    %v1811 = vtanh.pop %v1807
    %v1812 = vtanh.pop %v1808
    %v1817 = vcombine.low %v1809, %v1810
    %v1818 = vcombine.low %v1811, %v1812
    %v1820 = vunpack.c.l.s4 1966171168
    %v1821 = vunpack.c.0.s8 %v1820
    %v1822 = vlaneseq
    %v1823 = vshrl.u32 %v1822, 7
    %v1824 = vsub.s32 %v1821, %v1823
    %v1825 = vrot.slane %v1817, %v1824
    %v1827 = vunpack.c.l.s4 1966171168
    %v1828 = vunpack.c.0.s8 %v1827
    %v1829 = vlaneseq
    %v1830 = vshrl.u32 %v1829, 7
    %v1831 = vsub.s32 %v1828, %v1830
    %v1832 = vrot.slane %v1818, %v1831
    %v1833 = vcombine.low %v1825, %v1832
    %v1835 = vunpack.c.l.s4 1966171168
    %v1836 = vunpack.c.0.s8 %v1835
    %v1837 = vlaneseq
    %v1838 = vshrl.u32 %v1837, 7
    %v1839 = vsub.s32 %v1836, %v1838
    %v1840 = vrot.slane %v1833, %v1839
    %1842 = vst.msk [vmem:[#allocation3 + $0x4] sm:$0xf] %vm933, %v1840
    %s1843 = scalar_lea.vmem %s0, 16
    %v1844 = vld [vmem:[%s1843] ss:$2 sm:$0xf]
    %s1845 = scalar_lea.vmem %s0, 17
    %v1846 = vld [vmem:[%s1845] ss:$2 sm:$0xf]
    %v1847 = vld [vmem:[%s2] sm:$0xff]
    %v1848 = vld [vmem:[%s1] sm:$0xff]
    %1850 = vset.pattern.permute.xlu0 0
    %1851 = vperm.xlu0 %1850, %v1848
    %v1852 = vpop.permute.xlu0 %1851
    %v1855 = vlaneseq
    %v1856 = vshrl.u32 %v1855, 7
    %v1857 = vsub.s32 0, %v1856
    %v1858 = vrot.slane %v1844, %v1857
    %v1859 = vlaneseq
    %v1860 = vshrl.u32 %v1859, 7
    %v1861 = vsub.s32 1, %v1860
    %v1862 = vrot.slane %v1844, %v1861
    %v1863 = vlaneseq
    %v1864 = vshrl.u32 %v1863, 7
    %v1865 = vsub.s32 2, %v1864
    %v1866 = vrot.slane %v1844, %v1865
    %v1867 = vlaneseq
    %v1868 = vshrl.u32 %v1867, 7
    %v1869 = vsub.s32 3, %v1868
    %v1870 = vrot.slane %v1844, %v1869
    %v1875 = vmul.f32 %v1852, %v1858
    %v1876 = vmul.f32 %v1852, %v1862
    %v1877 = vmul.f32 %v1852, %v1866
    %v1878 = vmul.f32 %v1852, %v1870
    %1880 = vset.pattern.permute.xlu0 0
    %1881 = vperm.xlu0 %1880, %v1847
    %v1882 = vpop.permute.xlu0 %1881
    %v1884 = vadd.f32 %v1882, %v1875
    %v1885 = vadd.f32 %v1882, %v1876
    %v1886 = vadd.f32 %v1882, %v1877
    %v1887 = vadd.f32 %v1882, %v1878
    %1888 = vset.pattern.permute.xlu0 1
    %1889 = vperm.xlu0 %1888, %v1848
    %v1890 = vpop.permute.xlu0 %1889
    %v1893 = vlaneseq
    %v1894 = vshrl.u32 %v1893, 7
    %v1895 = vsub.s32 0, %v1894
    %v1896 = vrot.slane %v1846, %v1895
    %v1897 = vlaneseq
    %v1898 = vshrl.u32 %v1897, 7
    %v1899 = vsub.s32 1, %v1898
    %v1900 = vrot.slane %v1846, %v1899
    %v1901 = vlaneseq
    %v1902 = vshrl.u32 %v1901, 7
    %v1903 = vsub.s32 2, %v1902
    %v1904 = vrot.slane %v1846, %v1903
    %v1905 = vlaneseq
    %v1906 = vshrl.u32 %v1905, 7
    %v1907 = vsub.s32 3, %v1906
    %v1908 = vrot.slane %v1846, %v1907
    %v1913 = vmul.f32 %v1890, %v1896
    %v1914 = vmul.f32 %v1890, %v1900
    %v1915 = vmul.f32 %v1890, %v1904
    %v1916 = vmul.f32 %v1890, %v1908
    %v1917 = vadd.f32 %v1884, %v1913
    %v1918 = vadd.f32 %v1885, %v1914
    %v1919 = vadd.f32 %v1886, %v1915
    %v1920 = vadd.f32 %v1887, %v1916
    %v1921 = vmax.f32 %v1917, 0.0
    %v1922 = vmax.f32 %v1918, 0.0
    %v1923 = vmax.f32 %v1919, 0.0
    %v1924 = vmax.f32 %v1920, 0.0
    %v1925 = vld [vmem:[%s3] sm:$0xff]
    %1927 = vset.pattern.permute.xlu0 0
    %1928 = vperm.xlu0 %1927, %v1925
    %v1929 = vpop.permute.xlu0 %1928
    %v1931 = vmul.f32 %v1921, %v1929
    %v1932 = vmul.f32 %v1922, %v1929
    %v1933 = vmul.f32 %v1923, %v1929
    %v1934 = vmul.f32 %v1924, %v1929
    %v1935 = vadd.f32 %v1931, 0.0
    %v1936 = vadd.f32 %v1932, 0.0
    %v1937 = vadd.f32 %v1933, 0.0
    %v1938 = vadd.f32 %v1934, 0.0
    %v1939 = vld [vmem:[%s2 + $0x8] sm:$0xff]
    %v1940 = vld [vmem:[%s1 + $0x8] sm:$0xff]
    %1942 = vset.pattern.permute.xlu0 0
    %1943 = vperm.xlu0 %1942, %v1940
    %v1944 = vpop.permute.xlu0 %1943
    %v1946 = vmul.f32 %v1944, %v1858
    %v1947 = vmul.f32 %v1944, %v1862
    %v1948 = vmul.f32 %v1944, %v1866
    %v1949 = vmul.f32 %v1944, %v1870
    %1951 = vset.pattern.permute.xlu0 0
    %1952 = vperm.xlu0 %1951, %v1939
    %v1953 = vpop.permute.xlu0 %1952
    %v1955 = vadd.f32 %v1953, %v1946
    %v1956 = vadd.f32 %v1953, %v1947
    %v1957 = vadd.f32 %v1953, %v1948
    %v1958 = vadd.f32 %v1953, %v1949
    %1959 = vset.pattern.permute.xlu0 1
    %1960 = vperm.xlu0 %1959, %v1940
    %v1961 = vpop.permute.xlu0 %1960
    %v1963 = vmul.f32 %v1961, %v1896
    %v1964 = vmul.f32 %v1961, %v1900
    %v1965 = vmul.f32 %v1961, %v1904
    %v1966 = vmul.f32 %v1961, %v1908
    %v1967 = vadd.f32 %v1955, %v1963
    %v1968 = vadd.f32 %v1956, %v1964
    %v1969 = vadd.f32 %v1957, %v1965
    %v1970 = vadd.f32 %v1958, %v1966
    %v1971 = vmax.f32 %v1967, 0.0
    %v1972 = vmax.f32 %v1968, 0.0
    %v1973 = vmax.f32 %v1969, 0.0
    %v1974 = vmax.f32 %v1970, 0.0
    %v1975 = vld [vmem:[%s3 + $0x8] sm:$0xff]
    %1977 = vset.pattern.permute.xlu0 0
    %1978 = vperm.xlu0 %1977, %v1975
    %v1979 = vpop.permute.xlu0 %1978
    %v1981 = vmul.f32 %v1971, %v1979
    %v1982 = vmul.f32 %v1972, %v1979
    %v1983 = vmul.f32 %v1973, %v1979
    %v1984 = vmul.f32 %v1974, %v1979
    %v1985 = vadd.f32 %v1935, %v1981
    %v1986 = vadd.f32 %v1936, %v1982
    %v1987 = vadd.f32 %v1937, %v1983
    %v1988 = vadd.f32 %v1938, %v1984
    %v1989 = vld [vmem:[%s2 + $0x10] sm:$0xff]
    %v1990 = vld [vmem:[%s1 + $0x10] sm:$0xff]
    %1992 = vset.pattern.permute.xlu0 0
    %1993 = vperm.xlu0 %1992, %v1990
    %v1994 = vpop.permute.xlu0 %1993
    %v1996 = vmul.f32 %v1994, %v1858
    %v1997 = vmul.f32 %v1994, %v1862
    %v1998 = vmul.f32 %v1994, %v1866
    %v1999 = vmul.f32 %v1994, %v1870
    %2001 = vset.pattern.permute.xlu0 0
    %2002 = vperm.xlu0 %2001, %v1989
    %v2003 = vpop.permute.xlu0 %2002
    %v2005 = vadd.f32 %v2003, %v1996
    %v2006 = vadd.f32 %v2003, %v1997
    %v2007 = vadd.f32 %v2003, %v1998
    %v2008 = vadd.f32 %v2003, %v1999
    %2009 = vset.pattern.permute.xlu0 1
    %2010 = vperm.xlu0 %2009, %v1990
    %v2011 = vpop.permute.xlu0 %2010
    %v2013 = vmul.f32 %v2011, %v1896
    %v2014 = vmul.f32 %v2011, %v1900
    %v2015 = vmul.f32 %v2011, %v1904
    %v2016 = vmul.f32 %v2011, %v1908
    %v2017 = vadd.f32 %v2005, %v2013
    %v2018 = vadd.f32 %v2006, %v2014
    %v2019 = vadd.f32 %v2007, %v2015
    %v2020 = vadd.f32 %v2008, %v2016
    %v2021 = vmax.f32 %v2017, 0.0
    %v2022 = vmax.f32 %v2018, 0.0
    %v2023 = vmax.f32 %v2019, 0.0
    %v2024 = vmax.f32 %v2020, 0.0
    %v2025 = vld [vmem:[%s3 + $0x10] sm:$0xff]
    %2027 = vset.pattern.permute.xlu0 0
    %2028 = vperm.xlu0 %2027, %v2025
    %v2029 = vpop.permute.xlu0 %2028
    %v2031 = vmul.f32 %v2021, %v2029
    %v2032 = vmul.f32 %v2022, %v2029
    %v2033 = vmul.f32 %v2023, %v2029
    %v2034 = vmul.f32 %v2024, %v2029
    %v2035 = vadd.f32 %v1985, %v2031
    %v2036 = vadd.f32 %v1986, %v2032
    %v2037 = vadd.f32 %v1987, %v2033
    %v2038 = vadd.f32 %v1988, %v2034
    %v2039 = vld [vmem:[%s2 + $0x18] sm:$0xff]
    %v2040 = vld [vmem:[%s1 + $0x18] sm:$0xff]
    %2042 = vset.pattern.permute.xlu0 0
    %2043 = vperm.xlu0 %2042, %v2040
    %v2044 = vpop.permute.xlu0 %2043
    %v2046 = vmul.f32 %v2044, %v1858
    %v2047 = vmul.f32 %v2044, %v1862
    %v2048 = vmul.f32 %v2044, %v1866
    %v2049 = vmul.f32 %v2044, %v1870
    %2051 = vset.pattern.permute.xlu0 0
    %2052 = vperm.xlu0 %2051, %v2039
    %v2053 = vpop.permute.xlu0 %2052
    %v2055 = vadd.f32 %v2053, %v2046
    %v2056 = vadd.f32 %v2053, %v2047
    %v2057 = vadd.f32 %v2053, %v2048
    %v2058 = vadd.f32 %v2053, %v2049
    %2059 = vset.pattern.permute.xlu0 1
    %2060 = vperm.xlu0 %2059, %v2040
    %v2061 = vpop.permute.xlu0 %2060
    %v2063 = vmul.f32 %v2061, %v1896
    %v2064 = vmul.f32 %v2061, %v1900
    %v2065 = vmul.f32 %v2061, %v1904
    %v2066 = vmul.f32 %v2061, %v1908
    %v2067 = vadd.f32 %v2055, %v2063
    %v2068 = vadd.f32 %v2056, %v2064
    %v2069 = vadd.f32 %v2057, %v2065
    %v2070 = vadd.f32 %v2058, %v2066
    %v2071 = vmax.f32 %v2067, 0.0
    %v2072 = vmax.f32 %v2068, 0.0
    %v2073 = vmax.f32 %v2069, 0.0
    %v2074 = vmax.f32 %v2070, 0.0
    %v2075 = vld [vmem:[%s3 + $0x18] sm:$0xff]
    %2077 = vset.pattern.permute.xlu0 0
    %2078 = vperm.xlu0 %2077, %v2075
    %v2079 = vpop.permute.xlu0 %2078
    %v2081 = vmul.f32 %v2071, %v2079
    %v2082 = vmul.f32 %v2072, %v2079
    %v2083 = vmul.f32 %v2073, %v2079
    %v2084 = vmul.f32 %v2074, %v2079
    %v2085 = vadd.f32 %v2035, %v2081
    %v2086 = vadd.f32 %v2036, %v2082
    %v2087 = vadd.f32 %v2037, %v2083
    %v2088 = vadd.f32 %v2038, %v2084
    %v2089 = vld [vmem:[%s2 + $0x20] sm:$0xff]
    %v2090 = vld [vmem:[%s1 + $0x20] sm:$0xff]
    %2092 = vset.pattern.permute.xlu0 0
    %2093 = vperm.xlu0 %2092, %v2090
    %v2094 = vpop.permute.xlu0 %2093
    %v2096 = vmul.f32 %v2094, %v1858
    %v2097 = vmul.f32 %v2094, %v1862
    %v2098 = vmul.f32 %v2094, %v1866
    %v2099 = vmul.f32 %v2094, %v1870
    %2101 = vset.pattern.permute.xlu0 0
    %2102 = vperm.xlu0 %2101, %v2089
    %v2103 = vpop.permute.xlu0 %2102
    %v2105 = vadd.f32 %v2103, %v2096
    %v2106 = vadd.f32 %v2103, %v2097
    %v2107 = vadd.f32 %v2103, %v2098
    %v2108 = vadd.f32 %v2103, %v2099
    %2109 = vset.pattern.permute.xlu0 1
    %2110 = vperm.xlu0 %2109, %v2090
    %v2111 = vpop.permute.xlu0 %2110
    %v2113 = vmul.f32 %v2111, %v1896
    %v2114 = vmul.f32 %v2111, %v1900
    %v2115 = vmul.f32 %v2111, %v1904
    %v2116 = vmul.f32 %v2111, %v1908
    %v2117 = vadd.f32 %v2105, %v2113
    %v2118 = vadd.f32 %v2106, %v2114
    %v2119 = vadd.f32 %v2107, %v2115
    %v2120 = vadd.f32 %v2108, %v2116
    %v2121 = vmax.f32 %v2117, 0.0
    %v2122 = vmax.f32 %v2118, 0.0
    %v2123 = vmax.f32 %v2119, 0.0
    %v2124 = vmax.f32 %v2120, 0.0
    %v2125 = vld [vmem:[%s3 + $0x20] sm:$0xff]
    %2127 = vset.pattern.permute.xlu0 0
    %2128 = vperm.xlu0 %2127, %v2125
    %v2129 = vpop.permute.xlu0 %2128
    %v2131 = vmul.f32 %v2121, %v2129
    %v2132 = vmul.f32 %v2122, %v2129
    %v2133 = vmul.f32 %v2123, %v2129
    %v2134 = vmul.f32 %v2124, %v2129
    %v2135 = vadd.f32 %v2085, %v2131
    %v2136 = vadd.f32 %v2086, %v2132
    %v2137 = vadd.f32 %v2087, %v2133
    %v2138 = vadd.f32 %v2088, %v2134
    %v2139 = vld [vmem:[%s2 + $0x28] sm:$0xff]
    %v2140 = vld [vmem:[%s1 + $0x28] sm:$0xff]
    %2142 = vset.pattern.permute.xlu0 0
    %2143 = vperm.xlu0 %2142, %v2140
    %v2144 = vpop.permute.xlu0 %2143
    %v2146 = vmul.f32 %v2144, %v1858
    %v2147 = vmul.f32 %v2144, %v1862
    %v2148 = vmul.f32 %v2144, %v1866
    %v2149 = vmul.f32 %v2144, %v1870
    %2151 = vset.pattern.permute.xlu0 0
    %2152 = vperm.xlu0 %2151, %v2139
    %v2153 = vpop.permute.xlu0 %2152
    %v2155 = vadd.f32 %v2153, %v2146
    %v2156 = vadd.f32 %v2153, %v2147
    %v2157 = vadd.f32 %v2153, %v2148
    %v2158 = vadd.f32 %v2153, %v2149
    %2159 = vset.pattern.permute.xlu0 1
    %2160 = vperm.xlu0 %2159, %v2140
    %v2161 = vpop.permute.xlu0 %2160
    %v2163 = vmul.f32 %v2161, %v1896
    %v2164 = vmul.f32 %v2161, %v1900
    %v2165 = vmul.f32 %v2161, %v1904
    %v2166 = vmul.f32 %v2161, %v1908
    %v2167 = vadd.f32 %v2155, %v2163
    %v2168 = vadd.f32 %v2156, %v2164
    %v2169 = vadd.f32 %v2157, %v2165
    %v2170 = vadd.f32 %v2158, %v2166
    %v2171 = vmax.f32 %v2167, 0.0
    %v2172 = vmax.f32 %v2168, 0.0
    %v2173 = vmax.f32 %v2169, 0.0
    %v2174 = vmax.f32 %v2170, 0.0
    %v2175 = vld [vmem:[%s3 + $0x28] sm:$0xff]
    %2177 = vset.pattern.permute.xlu0 0
    %2178 = vperm.xlu0 %2177, %v2175
    %v2179 = vpop.permute.xlu0 %2178
    %v2181 = vmul.f32 %v2171, %v2179
    %v2182 = vmul.f32 %v2172, %v2179
    %v2183 = vmul.f32 %v2173, %v2179
    %v2184 = vmul.f32 %v2174, %v2179
    %v2185 = vadd.f32 %v2135, %v2181
    %v2186 = vadd.f32 %v2136, %v2182
    %v2187 = vadd.f32 %v2137, %v2183
    %v2188 = vadd.f32 %v2138, %v2184
    %v2189 = vld [vmem:[%s2 + $0x30] sm:$0xff]
    %v2190 = vld [vmem:[%s1 + $0x30] sm:$0xff]
    %2192 = vset.pattern.permute.xlu0 0
    %2193 = vperm.xlu0 %2192, %v2190
    %v2194 = vpop.permute.xlu0 %2193
    %v2196 = vmul.f32 %v2194, %v1858
    %v2197 = vmul.f32 %v2194, %v1862
    %v2198 = vmul.f32 %v2194, %v1866
    %v2199 = vmul.f32 %v2194, %v1870
    %2201 = vset.pattern.permute.xlu0 0
    %2202 = vperm.xlu0 %2201, %v2189
    %v2203 = vpop.permute.xlu0 %2202
    %v2205 = vadd.f32 %v2203, %v2196
    %v2206 = vadd.f32 %v2203, %v2197
    %v2207 = vadd.f32 %v2203, %v2198
    %v2208 = vadd.f32 %v2203, %v2199
    %2209 = vset.pattern.permute.xlu0 1
    %2210 = vperm.xlu0 %2209, %v2190
    %v2211 = vpop.permute.xlu0 %2210
    %v2213 = vmul.f32 %v2211, %v1896
    %v2214 = vmul.f32 %v2211, %v1900
    %v2215 = vmul.f32 %v2211, %v1904
    %v2216 = vmul.f32 %v2211, %v1908
    %v2217 = vadd.f32 %v2205, %v2213
    %v2218 = vadd.f32 %v2206, %v2214
    %v2219 = vadd.f32 %v2207, %v2215
    %v2220 = vadd.f32 %v2208, %v2216
    %v2221 = vmax.f32 %v2217, 0.0
    %v2222 = vmax.f32 %v2218, 0.0
    %v2223 = vmax.f32 %v2219, 0.0
    %v2224 = vmax.f32 %v2220, 0.0
    %v2225 = vld [vmem:[%s3 + $0x30] sm:$0xff]
    %2227 = vset.pattern.permute.xlu0 0
    %2228 = vperm.xlu0 %2227, %v2225
    %v2229 = vpop.permute.xlu0 %2228
    %v2231 = vmul.f32 %v2221, %v2229
    %v2232 = vmul.f32 %v2222, %v2229
    %v2233 = vmul.f32 %v2223, %v2229
    %v2234 = vmul.f32 %v2224, %v2229
    %v2235 = vadd.f32 %v2185, %v2231
    %v2236 = vadd.f32 %v2186, %v2232
    %v2237 = vadd.f32 %v2187, %v2233
    %v2238 = vadd.f32 %v2188, %v2234
    %v2239 = vld [vmem:[%s2 + $0x38] sm:$0xff]
    %v2240 = vld [vmem:[%s1 + $0x38] sm:$0xff]
    %2242 = vset.pattern.permute.xlu0 0
    %2243 = vperm.xlu0 %2242, %v2240
    %v2244 = vpop.permute.xlu0 %2243
    %v2246 = vmul.f32 %v2244, %v1858
    %v2247 = vmul.f32 %v2244, %v1862
    %v2248 = vmul.f32 %v2244, %v1866
    %v2249 = vmul.f32 %v2244, %v1870
    %2251 = vset.pattern.permute.xlu0 0
    %2252 = vperm.xlu0 %2251, %v2239
    %v2253 = vpop.permute.xlu0 %2252
    %v2255 = vadd.f32 %v2253, %v2246
    %v2256 = vadd.f32 %v2253, %v2247
    %v2257 = vadd.f32 %v2253, %v2248
    %v2258 = vadd.f32 %v2253, %v2249
    %2259 = vset.pattern.permute.xlu0 1
    %2260 = vperm.xlu0 %2259, %v2240
    %v2261 = vpop.permute.xlu0 %2260
    %v2263 = vmul.f32 %v2261, %v1896
    %v2264 = vmul.f32 %v2261, %v1900
    %v2265 = vmul.f32 %v2261, %v1904
    %v2266 = vmul.f32 %v2261, %v1908
    %v2267 = vadd.f32 %v2255, %v2263
    %v2268 = vadd.f32 %v2256, %v2264
    %v2269 = vadd.f32 %v2257, %v2265
    %v2270 = vadd.f32 %v2258, %v2266
    %v2271 = vmax.f32 %v2267, 0.0
    %v2272 = vmax.f32 %v2268, 0.0
    %v2273 = vmax.f32 %v2269, 0.0
    %v2274 = vmax.f32 %v2270, 0.0
    %v2275 = vld [vmem:[%s3 + $0x38] sm:$0xff]
    %2277 = vset.pattern.permute.xlu0 0
    %2278 = vperm.xlu0 %2277, %v2275
    %v2279 = vpop.permute.xlu0 %2278
    %v2281 = vmul.f32 %v2271, %v2279
    %v2282 = vmul.f32 %v2272, %v2279
    %v2283 = vmul.f32 %v2273, %v2279
    %v2284 = vmul.f32 %v2274, %v2279
    %v2285 = vadd.f32 %v2235, %v2281
    %v2286 = vadd.f32 %v2236, %v2282
    %v2287 = vadd.f32 %v2237, %v2283
    %v2288 = vadd.f32 %v2238, %v2284
    %v2289 = vld [vmem:[%s2 + $0x40] sm:$0xff]
    %v2290 = vld [vmem:[%s1 + $0x40] sm:$0xff]
    %2292 = vset.pattern.permute.xlu0 0
    %2293 = vperm.xlu0 %2292, %v2290
    %v2294 = vpop.permute.xlu0 %2293
    %v2296 = vmul.f32 %v2294, %v1858
    %v2297 = vmul.f32 %v2294, %v1862
    %v2298 = vmul.f32 %v2294, %v1866
    %v2299 = vmul.f32 %v2294, %v1870
    %2301 = vset.pattern.permute.xlu0 0
    %2302 = vperm.xlu0 %2301, %v2289
    %v2303 = vpop.permute.xlu0 %2302
    %v2305 = vadd.f32 %v2303, %v2296
    %v2306 = vadd.f32 %v2303, %v2297
    %v2307 = vadd.f32 %v2303, %v2298
    %v2308 = vadd.f32 %v2303, %v2299
    %2309 = vset.pattern.permute.xlu0 1
    %2310 = vperm.xlu0 %2309, %v2290
    %v2311 = vpop.permute.xlu0 %2310
    %v2313 = vmul.f32 %v2311, %v1896
    %v2314 = vmul.f32 %v2311, %v1900
    %v2315 = vmul.f32 %v2311, %v1904
    %v2316 = vmul.f32 %v2311, %v1908
    %v2317 = vadd.f32 %v2305, %v2313
    %v2318 = vadd.f32 %v2306, %v2314
    %v2319 = vadd.f32 %v2307, %v2315
    %v2320 = vadd.f32 %v2308, %v2316
    %v2321 = vmax.f32 %v2317, 0.0
    %v2322 = vmax.f32 %v2318, 0.0
    %v2323 = vmax.f32 %v2319, 0.0
    %v2324 = vmax.f32 %v2320, 0.0
    %v2325 = vld [vmem:[%s3 + $0x40] sm:$0xff]
    %2327 = vset.pattern.permute.xlu0 0
    %2328 = vperm.xlu0 %2327, %v2325
    %v2329 = vpop.permute.xlu0 %2328
    %v2331 = vmul.f32 %v2321, %v2329
    %v2332 = vmul.f32 %v2322, %v2329
    %v2333 = vmul.f32 %v2323, %v2329
    %v2334 = vmul.f32 %v2324, %v2329
    %v2335 = vadd.f32 %v2285, %v2331
    %v2336 = vadd.f32 %v2286, %v2332
    %v2337 = vadd.f32 %v2287, %v2333
    %v2338 = vadd.f32 %v2288, %v2334
    %v2339 = vld [vmem:[%s2 + $0x48] sm:$0xff]
    %v2340 = vld [vmem:[%s1 + $0x48] sm:$0xff]
    %2342 = vset.pattern.permute.xlu0 0
    %2343 = vperm.xlu0 %2342, %v2340
    %v2344 = vpop.permute.xlu0 %2343
    %v2346 = vmul.f32 %v2344, %v1858
    %v2347 = vmul.f32 %v2344, %v1862
    %v2348 = vmul.f32 %v2344, %v1866
    %v2349 = vmul.f32 %v2344, %v1870
    %2351 = vset.pattern.permute.xlu0 0
    %2352 = vperm.xlu0 %2351, %v2339
    %v2353 = vpop.permute.xlu0 %2352
    %v2355 = vadd.f32 %v2353, %v2346
    %v2356 = vadd.f32 %v2353, %v2347
    %v2357 = vadd.f32 %v2353, %v2348
    %v2358 = vadd.f32 %v2353, %v2349
    %2359 = vset.pattern.permute.xlu0 1
    %2360 = vperm.xlu0 %2359, %v2340
    %v2361 = vpop.permute.xlu0 %2360
    %v2363 = vmul.f32 %v2361, %v1896
    %v2364 = vmul.f32 %v2361, %v1900
    %v2365 = vmul.f32 %v2361, %v1904
    %v2366 = vmul.f32 %v2361, %v1908
    %v2367 = vadd.f32 %v2355, %v2363
    %v2368 = vadd.f32 %v2356, %v2364
    %v2369 = vadd.f32 %v2357, %v2365
    %v2370 = vadd.f32 %v2358, %v2366
    %v2371 = vmax.f32 %v2367, 0.0
    %v2372 = vmax.f32 %v2368, 0.0
    %v2373 = vmax.f32 %v2369, 0.0
    %v2374 = vmax.f32 %v2370, 0.0
    %v2375 = vld [vmem:[%s3 + $0x48] sm:$0xff]
    %2377 = vset.pattern.permute.xlu0 0
    %2378 = vperm.xlu0 %2377, %v2375
    %v2379 = vpop.permute.xlu0 %2378
    %v2381 = vmul.f32 %v2371, %v2379
    %v2382 = vmul.f32 %v2372, %v2379
    %v2383 = vmul.f32 %v2373, %v2379
    %v2384 = vmul.f32 %v2374, %v2379
    %v2385 = vadd.f32 %v2335, %v2381
    %v2386 = vadd.f32 %v2336, %v2382
    %v2387 = vadd.f32 %v2337, %v2383
    %v2388 = vadd.f32 %v2338, %v2384
    %v2389 = vld [vmem:[%s2 + $0x50] sm:$0xff]
    %v2390 = vld [vmem:[%s1 + $0x50] sm:$0xff]
    %2392 = vset.pattern.permute.xlu0 0
    %2393 = vperm.xlu0 %2392, %v2390
    %v2394 = vpop.permute.xlu0 %2393
    %v2396 = vmul.f32 %v2394, %v1858
    %v2397 = vmul.f32 %v2394, %v1862
    %v2398 = vmul.f32 %v2394, %v1866
    %v2399 = vmul.f32 %v2394, %v1870
    %2401 = vset.pattern.permute.xlu0 0
    %2402 = vperm.xlu0 %2401, %v2389
    %v2403 = vpop.permute.xlu0 %2402
    %v2405 = vadd.f32 %v2403, %v2396
    %v2406 = vadd.f32 %v2403, %v2397
    %v2407 = vadd.f32 %v2403, %v2398
    %v2408 = vadd.f32 %v2403, %v2399
    %2409 = vset.pattern.permute.xlu0 1
    %2410 = vperm.xlu0 %2409, %v2390
    %v2411 = vpop.permute.xlu0 %2410
    %v2413 = vmul.f32 %v2411, %v1896
    %v2414 = vmul.f32 %v2411, %v1900
    %v2415 = vmul.f32 %v2411, %v1904
    %v2416 = vmul.f32 %v2411, %v1908
    %v2417 = vadd.f32 %v2405, %v2413
    %v2418 = vadd.f32 %v2406, %v2414
    %v2419 = vadd.f32 %v2407, %v2415
    %v2420 = vadd.f32 %v2408, %v2416
    %v2421 = vmax.f32 %v2417, 0.0
    %v2422 = vmax.f32 %v2418, 0.0
    %v2423 = vmax.f32 %v2419, 0.0
    %v2424 = vmax.f32 %v2420, 0.0
    %v2425 = vld [vmem:[%s3 + $0x50] sm:$0xff]
    %2427 = vset.pattern.permute.xlu0 0
    %2428 = vperm.xlu0 %2427, %v2425
    %v2429 = vpop.permute.xlu0 %2428
    %v2431 = vmul.f32 %v2421, %v2429
    %v2432 = vmul.f32 %v2422, %v2429
    %v2433 = vmul.f32 %v2423, %v2429
    %v2434 = vmul.f32 %v2424, %v2429
    %v2435 = vadd.f32 %v2385, %v2431
    %v2436 = vadd.f32 %v2386, %v2432
    %v2437 = vadd.f32 %v2387, %v2433
    %v2438 = vadd.f32 %v2388, %v2434
    %v2439 = vld [vmem:[%s2 + $0x58] sm:$0xff]
    %v2440 = vld [vmem:[%s1 + $0x58] sm:$0xff]
    %2442 = vset.pattern.permute.xlu0 0
    %2443 = vperm.xlu0 %2442, %v2440
    %v2444 = vpop.permute.xlu0 %2443
    %v2446 = vmul.f32 %v2444, %v1858
    %v2447 = vmul.f32 %v2444, %v1862
    %v2448 = vmul.f32 %v2444, %v1866
    %v2449 = vmul.f32 %v2444, %v1870
    %2451 = vset.pattern.permute.xlu0 0
    %2452 = vperm.xlu0 %2451, %v2439
    %v2453 = vpop.permute.xlu0 %2452
    %v2455 = vadd.f32 %v2453, %v2446
    %v2456 = vadd.f32 %v2453, %v2447
    %v2457 = vadd.f32 %v2453, %v2448
    %v2458 = vadd.f32 %v2453, %v2449
    %2459 = vset.pattern.permute.xlu0 1
    %2460 = vperm.xlu0 %2459, %v2440
    %v2461 = vpop.permute.xlu0 %2460
    %v2463 = vmul.f32 %v2461, %v1896
    %v2464 = vmul.f32 %v2461, %v1900
    %v2465 = vmul.f32 %v2461, %v1904
    %v2466 = vmul.f32 %v2461, %v1908
    %v2467 = vadd.f32 %v2455, %v2463
    %v2468 = vadd.f32 %v2456, %v2464
    %v2469 = vadd.f32 %v2457, %v2465
    %v2470 = vadd.f32 %v2458, %v2466
    %v2471 = vmax.f32 %v2467, 0.0
    %v2472 = vmax.f32 %v2468, 0.0
    %v2473 = vmax.f32 %v2469, 0.0
    %v2474 = vmax.f32 %v2470, 0.0
    %v2475 = vld [vmem:[%s3 + $0x58] sm:$0xff]
    %2477 = vset.pattern.permute.xlu0 0
    %2478 = vperm.xlu0 %2477, %v2475
    %v2479 = vpop.permute.xlu0 %2478
    %v2481 = vmul.f32 %v2471, %v2479
    %v2482 = vmul.f32 %v2472, %v2479
    %v2483 = vmul.f32 %v2473, %v2479
    %v2484 = vmul.f32 %v2474, %v2479
    %v2485 = vadd.f32 %v2435, %v2481
    %v2486 = vadd.f32 %v2436, %v2482
    %v2487 = vadd.f32 %v2437, %v2483
    %v2488 = vadd.f32 %v2438, %v2484
    %v2489 = vld [vmem:[%s2 + $0x60] sm:$0xff]
    %v2490 = vld [vmem:[%s1 + $0x60] sm:$0xff]
    %2492 = vset.pattern.permute.xlu0 0
    %2493 = vperm.xlu0 %2492, %v2490
    %v2494 = vpop.permute.xlu0 %2493
    %v2496 = vmul.f32 %v2494, %v1858
    %v2497 = vmul.f32 %v2494, %v1862
    %v2498 = vmul.f32 %v2494, %v1866
    %v2499 = vmul.f32 %v2494, %v1870
    %2501 = vset.pattern.permute.xlu0 0
    %2502 = vperm.xlu0 %2501, %v2489
    %v2503 = vpop.permute.xlu0 %2502
    %v2505 = vadd.f32 %v2503, %v2496
    %v2506 = vadd.f32 %v2503, %v2497
    %v2507 = vadd.f32 %v2503, %v2498
    %v2508 = vadd.f32 %v2503, %v2499
    %2509 = vset.pattern.permute.xlu0 1
    %2510 = vperm.xlu0 %2509, %v2490
    %v2511 = vpop.permute.xlu0 %2510
    %v2513 = vmul.f32 %v2511, %v1896
    %v2514 = vmul.f32 %v2511, %v1900
    %v2515 = vmul.f32 %v2511, %v1904
    %v2516 = vmul.f32 %v2511, %v1908
    %v2517 = vadd.f32 %v2505, %v2513
    %v2518 = vadd.f32 %v2506, %v2514
    %v2519 = vadd.f32 %v2507, %v2515
    %v2520 = vadd.f32 %v2508, %v2516
    %v2521 = vmax.f32 %v2517, 0.0
    %v2522 = vmax.f32 %v2518, 0.0
    %v2523 = vmax.f32 %v2519, 0.0
    %v2524 = vmax.f32 %v2520, 0.0
    %v2525 = vld [vmem:[%s3 + $0x60] sm:$0xff]
    %2527 = vset.pattern.permute.xlu0 0
    %2528 = vperm.xlu0 %2527, %v2525
    %v2529 = vpop.permute.xlu0 %2528
    %v2531 = vmul.f32 %v2521, %v2529
    %v2532 = vmul.f32 %v2522, %v2529
    %v2533 = vmul.f32 %v2523, %v2529
    %v2534 = vmul.f32 %v2524, %v2529
    %v2535 = vadd.f32 %v2485, %v2531
    %v2536 = vadd.f32 %v2486, %v2532
    %v2537 = vadd.f32 %v2487, %v2533
    %v2538 = vadd.f32 %v2488, %v2534
    %v2539 = vld [vmem:[%s2 + $0x68] sm:$0xff]
    %v2540 = vld [vmem:[%s1 + $0x68] sm:$0xff]
    %2542 = vset.pattern.permute.xlu0 0
    %2543 = vperm.xlu0 %2542, %v2540
    %v2544 = vpop.permute.xlu0 %2543
    %v2546 = vmul.f32 %v2544, %v1858
    %v2547 = vmul.f32 %v2544, %v1862
    %v2548 = vmul.f32 %v2544, %v1866
    %v2549 = vmul.f32 %v2544, %v1870
    %2551 = vset.pattern.permute.xlu0 0
    %2552 = vperm.xlu0 %2551, %v2539
    %v2553 = vpop.permute.xlu0 %2552
    %v2555 = vadd.f32 %v2553, %v2546
    %v2556 = vadd.f32 %v2553, %v2547
    %v2557 = vadd.f32 %v2553, %v2548
    %v2558 = vadd.f32 %v2553, %v2549
    %2559 = vset.pattern.permute.xlu0 1
    %2560 = vperm.xlu0 %2559, %v2540
    %v2561 = vpop.permute.xlu0 %2560
    %v2563 = vmul.f32 %v2561, %v1896
    %v2564 = vmul.f32 %v2561, %v1900
    %v2565 = vmul.f32 %v2561, %v1904
    %v2566 = vmul.f32 %v2561, %v1908
    %v2567 = vadd.f32 %v2555, %v2563
    %v2568 = vadd.f32 %v2556, %v2564
    %v2569 = vadd.f32 %v2557, %v2565
    %v2570 = vadd.f32 %v2558, %v2566
    %v2571 = vmax.f32 %v2567, 0.0
    %v2572 = vmax.f32 %v2568, 0.0
    %v2573 = vmax.f32 %v2569, 0.0
    %v2574 = vmax.f32 %v2570, 0.0
    %v2575 = vld [vmem:[%s3 + $0x68] sm:$0xff]
    %2577 = vset.pattern.permute.xlu0 0
    %2578 = vperm.xlu0 %2577, %v2575
    %v2579 = vpop.permute.xlu0 %2578
    %v2581 = vmul.f32 %v2571, %v2579
    %v2582 = vmul.f32 %v2572, %v2579
    %v2583 = vmul.f32 %v2573, %v2579
    %v2584 = vmul.f32 %v2574, %v2579
    %v2585 = vadd.f32 %v2535, %v2581
    %v2586 = vadd.f32 %v2536, %v2582
    %v2587 = vadd.f32 %v2537, %v2583
    %v2588 = vadd.f32 %v2538, %v2584
    %v2589 = vld [vmem:[%s2 + $0x70] sm:$0xff]
    %v2590 = vld [vmem:[%s1 + $0x70] sm:$0xff]
    %2592 = vset.pattern.permute.xlu0 0
    %2593 = vperm.xlu0 %2592, %v2590
    %v2594 = vpop.permute.xlu0 %2593
    %v2596 = vmul.f32 %v2594, %v1858
    %v2597 = vmul.f32 %v2594, %v1862
    %v2598 = vmul.f32 %v2594, %v1866
    %v2599 = vmul.f32 %v2594, %v1870
    %2601 = vset.pattern.permute.xlu0 0
    %2602 = vperm.xlu0 %2601, %v2589
    %v2603 = vpop.permute.xlu0 %2602
    %v2605 = vadd.f32 %v2603, %v2596
    %v2606 = vadd.f32 %v2603, %v2597
    %v2607 = vadd.f32 %v2603, %v2598
    %v2608 = vadd.f32 %v2603, %v2599
    %2609 = vset.pattern.permute.xlu0 1
    %2610 = vperm.xlu0 %2609, %v2590
    %v2611 = vpop.permute.xlu0 %2610
    %v2613 = vmul.f32 %v2611, %v1896
    %v2614 = vmul.f32 %v2611, %v1900
    %v2615 = vmul.f32 %v2611, %v1904
    %v2616 = vmul.f32 %v2611, %v1908
    %v2617 = vadd.f32 %v2605, %v2613
    %v2618 = vadd.f32 %v2606, %v2614
    %v2619 = vadd.f32 %v2607, %v2615
    %v2620 = vadd.f32 %v2608, %v2616
    %v2621 = vmax.f32 %v2617, 0.0
    %v2622 = vmax.f32 %v2618, 0.0
    %v2623 = vmax.f32 %v2619, 0.0
    %v2624 = vmax.f32 %v2620, 0.0
    %v2625 = vld [vmem:[%s3 + $0x70] sm:$0xff]
    %2627 = vset.pattern.permute.xlu0 0
    %2628 = vperm.xlu0 %2627, %v2625
    %v2629 = vpop.permute.xlu0 %2628
    %v2631 = vmul.f32 %v2621, %v2629
    %v2632 = vmul.f32 %v2622, %v2629
    %v2633 = vmul.f32 %v2623, %v2629
    %v2634 = vmul.f32 %v2624, %v2629
    %v2635 = vadd.f32 %v2585, %v2631
    %v2636 = vadd.f32 %v2586, %v2632
    %v2637 = vadd.f32 %v2587, %v2633
    %v2638 = vadd.f32 %v2588, %v2634
    %v2639 = vld [vmem:[%s2 + $0x78] sm:$0xff]
    %v2640 = vld [vmem:[%s1 + $0x78] sm:$0xff]
    %2642 = vset.pattern.permute.xlu0 0
    %2643 = vperm.xlu0 %2642, %v2640
    %v2644 = vpop.permute.xlu0 %2643
    %v2646 = vmul.f32 %v2644, %v1858
    %v2647 = vmul.f32 %v2644, %v1862
    %v2648 = vmul.f32 %v2644, %v1866
    %v2649 = vmul.f32 %v2644, %v1870
    %2651 = vset.pattern.permute.xlu0 0
    %2652 = vperm.xlu0 %2651, %v2639
    %v2653 = vpop.permute.xlu0 %2652
    %v2655 = vadd.f32 %v2653, %v2646
    %v2656 = vadd.f32 %v2653, %v2647
    %v2657 = vadd.f32 %v2653, %v2648
    %v2658 = vadd.f32 %v2653, %v2649
    %2659 = vset.pattern.permute.xlu0 1
    %2660 = vperm.xlu0 %2659, %v2640
    %v2661 = vpop.permute.xlu0 %2660
    %v2663 = vmul.f32 %v2661, %v1896
    %v2664 = vmul.f32 %v2661, %v1900
    %v2665 = vmul.f32 %v2661, %v1904
    %v2666 = vmul.f32 %v2661, %v1908
    %v2667 = vadd.f32 %v2655, %v2663
    %v2668 = vadd.f32 %v2656, %v2664
    %v2669 = vadd.f32 %v2657, %v2665
    %v2670 = vadd.f32 %v2658, %v2666
    %v2671 = vmax.f32 %v2667, 0.0
    %v2672 = vmax.f32 %v2668, 0.0
    %v2673 = vmax.f32 %v2669, 0.0
    %v2674 = vmax.f32 %v2670, 0.0
    %v2675 = vld [vmem:[%s3 + $0x78] sm:$0xff]
    %2677 = vset.pattern.permute.xlu0 0
    %2678 = vperm.xlu0 %2677, %v2675
    %v2679 = vpop.permute.xlu0 %2678
    %v2681 = vmul.f32 %v2671, %v2679
    %v2682 = vmul.f32 %v2672, %v2679
    %v2683 = vmul.f32 %v2673, %v2679
    %v2684 = vmul.f32 %v2674, %v2679
    %v2685 = vadd.f32 %v2635, %v2681
    %v2686 = vadd.f32 %v2636, %v2682
    %v2687 = vadd.f32 %v2637, %v2683
    %v2688 = vadd.f32 %v2638, %v2684
    %v2689 = vrot.slane %v2685, 4
    %v2690 = vadd.f32 %v2685, %v2689
    %v2691 = vrot.slane %v2690, 2
    %v2692 = vadd.f32 %v2690, %v2691
    %v2693 = vrot.slane %v2692, 1
    %v2694 = vadd.f32 %v2692, %v2693
    %v2695 = vrot.slane %v2686, 4
    %v2696 = vadd.f32 %v2686, %v2695
    %v2697 = vrot.slane %v2696, 2
    %v2698 = vadd.f32 %v2696, %v2697
    %v2699 = vrot.slane %v2698, 1
    %v2700 = vadd.f32 %v2698, %v2699
    %v2701 = vrot.slane %v2687, 4
    %v2702 = vadd.f32 %v2687, %v2701
    %v2703 = vrot.slane %v2702, 2
    %v2704 = vadd.f32 %v2702, %v2703
    %v2705 = vrot.slane %v2704, 1
    %v2706 = vadd.f32 %v2704, %v2705
    %v2707 = vrot.slane %v2688, 4
    %v2708 = vadd.f32 %v2688, %v2707
    %v2709 = vrot.slane %v2708, 2
    %v2710 = vadd.f32 %v2708, %v2709
    %v2711 = vrot.slane %v2710, 1
    %v2712 = vadd.f32 %v2710, %v2711
    %v2713 = vadd.f32 %v2694, %v892
    %v2714 = vadd.f32 %v2700, %v892
    %v2715 = vadd.f32 %v2706, %v892
    %v2716 = vadd.f32 %v2712, %v892
    %v2717 = vtanh.pop %v2713
    %v2718 = vtanh.pop %v2714
    %v2719 = vtanh.pop %v2715
    %v2720 = vtanh.pop %v2716
    %v2725 = vcombine.low %v2717, %v2718
    %v2726 = vcombine.low %v2719, %v2720
    %v2728 = vunpack.c.l.s4 1966171168
    %v2729 = vunpack.c.0.s8 %v2728
    %v2730 = vlaneseq
    %v2731 = vshrl.u32 %v2730, 7
    %v2732 = vsub.s32 %v2729, %v2731
    %v2733 = vrot.slane %v2725, %v2732
    %v2735 = vunpack.c.l.s4 1966171168
    %v2736 = vunpack.c.0.s8 %v2735
    %v2737 = vlaneseq
    %v2738 = vshrl.u32 %v2737, 7
    %v2739 = vsub.s32 %v2736, %v2738
    %v2740 = vrot.slane %v2726, %v2739
    %v2741 = vcombine.low %v2733, %v2740
    %v2743 = vunpack.c.l.s4 1966171168
    %v2744 = vunpack.c.0.s8 %v2743
    %v2745 = vlaneseq
    %v2746 = vshrl.u32 %v2745, 7
    %v2747 = vsub.s32 %v2744, %v2746
    %v2748 = vrot.slane %v2741, %v2747
    %2750 = vst.msk [vmem:[#allocation3 + $0x8] sm:$0xf] %vm933, %v2748
    %s2751 = scalar_lea.vmem %s0, 24
    %v2752 = vld [vmem:[%s2751] ss:$2 sm:$0xf]
    %s2753 = scalar_lea.vmem %s0, 25
    %v2754 = vld [vmem:[%s2753] ss:$2 sm:$0xf]
    %v2755 = vld [vmem:[%s2] sm:$0xff]
    %v2756 = vld [vmem:[%s1] sm:$0xff]
    %2758 = vset.pattern.permute.xlu0 0
    %2759 = vperm.xlu0 %2758, %v2756
    %v2760 = vpop.permute.xlu0 %2759
    %v2763 = vlaneseq
    %v2764 = vshrl.u32 %v2763, 7
    %v2765 = vsub.s32 0, %v2764
    %v2766 = vrot.slane %v2752, %v2765
    %v2767 = vlaneseq
    %v2768 = vshrl.u32 %v2767, 7
    %v2769 = vsub.s32 1, %v2768
    %v2770 = vrot.slane %v2752, %v2769
    %v2771 = vlaneseq
    %v2772 = vshrl.u32 %v2771, 7
    %v2773 = vsub.s32 2, %v2772
    %v2774 = vrot.slane %v2752, %v2773
    %v2775 = vlaneseq
    %v2776 = vshrl.u32 %v2775, 7
    %v2777 = vsub.s32 3, %v2776
    %v2778 = vrot.slane %v2752, %v2777
    %v2783 = vmul.f32 %v2760, %v2766
    %v2784 = vmul.f32 %v2760, %v2770
    %v2785 = vmul.f32 %v2760, %v2774
    %v2786 = vmul.f32 %v2760, %v2778
    %2788 = vset.pattern.permute.xlu0 0
    %2789 = vperm.xlu0 %2788, %v2755
    %v2790 = vpop.permute.xlu0 %2789
    %v2792 = vadd.f32 %v2790, %v2783
    %v2793 = vadd.f32 %v2790, %v2784
    %v2794 = vadd.f32 %v2790, %v2785
    %v2795 = vadd.f32 %v2790, %v2786
    %2796 = vset.pattern.permute.xlu0 1
    %2797 = vperm.xlu0 %2796, %v2756
    %v2798 = vpop.permute.xlu0 %2797
    %v2801 = vlaneseq
    %v2802 = vshrl.u32 %v2801, 7
    %v2803 = vsub.s32 0, %v2802
    %v2804 = vrot.slane %v2754, %v2803
    %v2805 = vlaneseq
    %v2806 = vshrl.u32 %v2805, 7
    %v2807 = vsub.s32 1, %v2806
    %v2808 = vrot.slane %v2754, %v2807
    %v2809 = vlaneseq
    %v2810 = vshrl.u32 %v2809, 7
    %v2811 = vsub.s32 2, %v2810
    %v2812 = vrot.slane %v2754, %v2811
    %v2813 = vlaneseq
    %v2814 = vshrl.u32 %v2813, 7
    %v2815 = vsub.s32 3, %v2814
    %v2816 = vrot.slane %v2754, %v2815
    %v2821 = vmul.f32 %v2798, %v2804
    %v2822 = vmul.f32 %v2798, %v2808
    %v2823 = vmul.f32 %v2798, %v2812
    %v2824 = vmul.f32 %v2798, %v2816
    %v2825 = vadd.f32 %v2792, %v2821
    %v2826 = vadd.f32 %v2793, %v2822
    %v2827 = vadd.f32 %v2794, %v2823
    %v2828 = vadd.f32 %v2795, %v2824
    %v2829 = vmax.f32 %v2825, 0.0
    %v2830 = vmax.f32 %v2826, 0.0
    %v2831 = vmax.f32 %v2827, 0.0
    %v2832 = vmax.f32 %v2828, 0.0
    %v2833 = vld [vmem:[%s3] sm:$0xff]
    %2835 = vset.pattern.permute.xlu0 0
    %2836 = vperm.xlu0 %2835, %v2833
    %v2837 = vpop.permute.xlu0 %2836
    %v2839 = vmul.f32 %v2829, %v2837
    %v2840 = vmul.f32 %v2830, %v2837
    %v2841 = vmul.f32 %v2831, %v2837
    %v2842 = vmul.f32 %v2832, %v2837
    %v2843 = vadd.f32 %v2839, 0.0
    %v2844 = vadd.f32 %v2840, 0.0
    %v2845 = vadd.f32 %v2841, 0.0
    %v2846 = vadd.f32 %v2842, 0.0
    %v2847 = vld [vmem:[%s2 + $0x8] sm:$0xff]
    %v2848 = vld [vmem:[%s1 + $0x8] sm:$0xff]
    %2850 = vset.pattern.permute.xlu0 0
    %2851 = vperm.xlu0 %2850, %v2848
    %v2852 = vpop.permute.xlu0 %2851
    %v2854 = vmul.f32 %v2852, %v2766
    %v2855 = vmul.f32 %v2852, %v2770
    %v2856 = vmul.f32 %v2852, %v2774
    %v2857 = vmul.f32 %v2852, %v2778
    %2859 = vset.pattern.permute.xlu0 0
    %2860 = vperm.xlu0 %2859, %v2847
    %v2861 = vpop.permute.xlu0 %2860
    %v2863 = vadd.f32 %v2861, %v2854
    %v2864 = vadd.f32 %v2861, %v2855
    %v2865 = vadd.f32 %v2861, %v2856
    %v2866 = vadd.f32 %v2861, %v2857
    %2867 = vset.pattern.permute.xlu0 1
    %2868 = vperm.xlu0 %2867, %v2848
    %v2869 = vpop.permute.xlu0 %2868
    %v2871 = vmul.f32 %v2869, %v2804
    %v2872 = vmul.f32 %v2869, %v2808
    %v2873 = vmul.f32 %v2869, %v2812
    %v2874 = vmul.f32 %v2869, %v2816
    %v2875 = vadd.f32 %v2863, %v2871
    %v2876 = vadd.f32 %v2864, %v2872
    %v2877 = vadd.f32 %v2865, %v2873
    %v2878 = vadd.f32 %v2866, %v2874
    %v2879 = vmax.f32 %v2875, 0.0
    %v2880 = vmax.f32 %v2876, 0.0
    %v2881 = vmax.f32 %v2877, 0.0
    %v2882 = vmax.f32 %v2878, 0.0
    %v2883 = vld [vmem:[%s3 + $0x8] sm:$0xff]
    %2885 = vset.pattern.permute.xlu0 0
    %2886 = vperm.xlu0 %2885, %v2883
    %v2887 = vpop.permute.xlu0 %2886
    %v2889 = vmul.f32 %v2879, %v2887
    %v2890 = vmul.f32 %v2880, %v2887
    %v2891 = vmul.f32 %v2881, %v2887
    %v2892 = vmul.f32 %v2882, %v2887
    %v2893 = vadd.f32 %v2843, %v2889
    %v2894 = vadd.f32 %v2844, %v2890
    %v2895 = vadd.f32 %v2845, %v2891
    %v2896 = vadd.f32 %v2846, %v2892
    %v2897 = vld [vmem:[%s2 + $0x10] sm:$0xff]
    %v2898 = vld [vmem:[%s1 + $0x10] sm:$0xff]
    %2900 = vset.pattern.permute.xlu0 0
    %2901 = vperm.xlu0 %2900, %v2898
    %v2902 = vpop.permute.xlu0 %2901
    %v2904 = vmul.f32 %v2902, %v2766
    %v2905 = vmul.f32 %v2902, %v2770
    %v2906 = vmul.f32 %v2902, %v2774
    %v2907 = vmul.f32 %v2902, %v2778
    %2909 = vset.pattern.permute.xlu0 0
    %2910 = vperm.xlu0 %2909, %v2897
    %v2911 = vpop.permute.xlu0 %2910
    %v2913 = vadd.f32 %v2911, %v2904
    %v2914 = vadd.f32 %v2911, %v2905
    %v2915 = vadd.f32 %v2911, %v2906
    %v2916 = vadd.f32 %v2911, %v2907
    %2917 = vset.pattern.permute.xlu0 1
    %2918 = vperm.xlu0 %2917, %v2898
    %v2919 = vpop.permute.xlu0 %2918
    %v2921 = vmul.f32 %v2919, %v2804
    %v2922 = vmul.f32 %v2919, %v2808
    %v2923 = vmul.f32 %v2919, %v2812
    %v2924 = vmul.f32 %v2919, %v2816
    %v2925 = vadd.f32 %v2913, %v2921
    %v2926 = vadd.f32 %v2914, %v2922
    %v2927 = vadd.f32 %v2915, %v2923
    %v2928 = vadd.f32 %v2916, %v2924
    %v2929 = vmax.f32 %v2925, 0.0
    %v2930 = vmax.f32 %v2926, 0.0
    %v2931 = vmax.f32 %v2927, 0.0
    %v2932 = vmax.f32 %v2928, 0.0
    %v2933 = vld [vmem:[%s3 + $0x10] sm:$0xff]
    %2935 = vset.pattern.permute.xlu0 0
    %2936 = vperm.xlu0 %2935, %v2933
    %v2937 = vpop.permute.xlu0 %2936
    %v2939 = vmul.f32 %v2929, %v2937
    %v2940 = vmul.f32 %v2930, %v2937
    %v2941 = vmul.f32 %v2931, %v2937
    %v2942 = vmul.f32 %v2932, %v2937
    %v2943 = vadd.f32 %v2893, %v2939
    %v2944 = vadd.f32 %v2894, %v2940
    %v2945 = vadd.f32 %v2895, %v2941
    %v2946 = vadd.f32 %v2896, %v2942
    %v2947 = vld [vmem:[%s2 + $0x18] sm:$0xff]
    %v2948 = vld [vmem:[%s1 + $0x18] sm:$0xff]
    %2950 = vset.pattern.permute.xlu0 0
    %2951 = vperm.xlu0 %2950, %v2948
    %v2952 = vpop.permute.xlu0 %2951
    %v2954 = vmul.f32 %v2952, %v2766
    %v2955 = vmul.f32 %v2952, %v2770
    %v2956 = vmul.f32 %v2952, %v2774
    %v2957 = vmul.f32 %v2952, %v2778
    %2959 = vset.pattern.permute.xlu0 0
    %2960 = vperm.xlu0 %2959, %v2947
    %v2961 = vpop.permute.xlu0 %2960
    %v2963 = vadd.f32 %v2961, %v2954
    %v2964 = vadd.f32 %v2961, %v2955
    %v2965 = vadd.f32 %v2961, %v2956
    %v2966 = vadd.f32 %v2961, %v2957
    %2967 = vset.pattern.permute.xlu0 1
    %2968 = vperm.xlu0 %2967, %v2948
    %v2969 = vpop.permute.xlu0 %2968
    %v2971 = vmul.f32 %v2969, %v2804
    %v2972 = vmul.f32 %v2969, %v2808
    %v2973 = vmul.f32 %v2969, %v2812
    %v2974 = vmul.f32 %v2969, %v2816
    %v2975 = vadd.f32 %v2963, %v2971
    %v2976 = vadd.f32 %v2964, %v2972
    %v2977 = vadd.f32 %v2965, %v2973
    %v2978 = vadd.f32 %v2966, %v2974
    %v2979 = vmax.f32 %v2975, 0.0
    %v2980 = vmax.f32 %v2976, 0.0
    %v2981 = vmax.f32 %v2977, 0.0
    %v2982 = vmax.f32 %v2978, 0.0
    %v2983 = vld [vmem:[%s3 + $0x18] sm:$0xff]
    %2985 = vset.pattern.permute.xlu0 0
    %2986 = vperm.xlu0 %2985, %v2983
    %v2987 = vpop.permute.xlu0 %2986
    %v2989 = vmul.f32 %v2979, %v2987
    %v2990 = vmul.f32 %v2980, %v2987
    %v2991 = vmul.f32 %v2981, %v2987
    %v2992 = vmul.f32 %v2982, %v2987
    %v2993 = vadd.f32 %v2943, %v2989
    %v2994 = vadd.f32 %v2944, %v2990
    %v2995 = vadd.f32 %v2945, %v2991
    %v2996 = vadd.f32 %v2946, %v2992
    %v2997 = vld [vmem:[%s2 + $0x20] sm:$0xff]
    %v2998 = vld [vmem:[%s1 + $0x20] sm:$0xff]
    %3000 = vset.pattern.permute.xlu0 0
    %3001 = vperm.xlu0 %3000, %v2998
    %v3002 = vpop.permute.xlu0 %3001
    %v3004 = vmul.f32 %v3002, %v2766
    %v3005 = vmul.f32 %v3002, %v2770
    %v3006 = vmul.f32 %v3002, %v2774
    %v3007 = vmul.f32 %v3002, %v2778
    %3009 = vset.pattern.permute.xlu0 0
    %3010 = vperm.xlu0 %3009, %v2997
    %v3011 = vpop.permute.xlu0 %3010
    %v3013 = vadd.f32 %v3011, %v3004
    %v3014 = vadd.f32 %v3011, %v3005
    %v3015 = vadd.f32 %v3011, %v3006
    %v3016 = vadd.f32 %v3011, %v3007
    %3017 = vset.pattern.permute.xlu0 1
    %3018 = vperm.xlu0 %3017, %v2998
    %v3019 = vpop.permute.xlu0 %3018
    %v3021 = vmul.f32 %v3019, %v2804
    %v3022 = vmul.f32 %v3019, %v2808
    %v3023 = vmul.f32 %v3019, %v2812
    %v3024 = vmul.f32 %v3019, %v2816
    %v3025 = vadd.f32 %v3013, %v3021
    %v3026 = vadd.f32 %v3014, %v3022
    %v3027 = vadd.f32 %v3015, %v3023
    %v3028 = vadd.f32 %v3016, %v3024
    %v3029 = vmax.f32 %v3025, 0.0
    %v3030 = vmax.f32 %v3026, 0.0
    %v3031 = vmax.f32 %v3027, 0.0
    %v3032 = vmax.f32 %v3028, 0.0
    %v3033 = vld [vmem:[%s3 + $0x20] sm:$0xff]
    %3035 = vset.pattern.permute.xlu0 0
    %3036 = vperm.xlu0 %3035, %v3033
    %v3037 = vpop.permute.xlu0 %3036
    %v3039 = vmul.f32 %v3029, %v3037
    %v3040 = vmul.f32 %v3030, %v3037
    %v3041 = vmul.f32 %v3031, %v3037
    %v3042 = vmul.f32 %v3032, %v3037
    %v3043 = vadd.f32 %v2993, %v3039
    %v3044 = vadd.f32 %v2994, %v3040
    %v3045 = vadd.f32 %v2995, %v3041
    %v3046 = vadd.f32 %v2996, %v3042
    %v3047 = vld [vmem:[%s2 + $0x28] sm:$0xff]
    %v3048 = vld [vmem:[%s1 + $0x28] sm:$0xff]
    %3050 = vset.pattern.permute.xlu0 0
    %3051 = vperm.xlu0 %3050, %v3048
    %v3052 = vpop.permute.xlu0 %3051
    %v3054 = vmul.f32 %v3052, %v2766
    %v3055 = vmul.f32 %v3052, %v2770
    %v3056 = vmul.f32 %v3052, %v2774
    %v3057 = vmul.f32 %v3052, %v2778
    %3059 = vset.pattern.permute.xlu0 0
    %3060 = vperm.xlu0 %3059, %v3047
    %v3061 = vpop.permute.xlu0 %3060
    %v3063 = vadd.f32 %v3061, %v3054
    %v3064 = vadd.f32 %v3061, %v3055
    %v3065 = vadd.f32 %v3061, %v3056
    %v3066 = vadd.f32 %v3061, %v3057
    %3067 = vset.pattern.permute.xlu0 1
    %3068 = vperm.xlu0 %3067, %v3048
    %v3069 = vpop.permute.xlu0 %3068
    %v3071 = vmul.f32 %v3069, %v2804
    %v3072 = vmul.f32 %v3069, %v2808
    %v3073 = vmul.f32 %v3069, %v2812
    %v3074 = vmul.f32 %v3069, %v2816
    %v3075 = vadd.f32 %v3063, %v3071
    %v3076 = vadd.f32 %v3064, %v3072
    %v3077 = vadd.f32 %v3065, %v3073
    %v3078 = vadd.f32 %v3066, %v3074
    %v3079 = vmax.f32 %v3075, 0.0
    %v3080 = vmax.f32 %v3076, 0.0
    %v3081 = vmax.f32 %v3077, 0.0
    %v3082 = vmax.f32 %v3078, 0.0
    %v3083 = vld [vmem:[%s3 + $0x28] sm:$0xff]
    %3085 = vset.pattern.permute.xlu0 0
    %3086 = vperm.xlu0 %3085, %v3083
    %v3087 = vpop.permute.xlu0 %3086
    %v3089 = vmul.f32 %v3079, %v3087
    %v3090 = vmul.f32 %v3080, %v3087
    %v3091 = vmul.f32 %v3081, %v3087
    %v3092 = vmul.f32 %v3082, %v3087
    %v3093 = vadd.f32 %v3043, %v3089
    %v3094 = vadd.f32 %v3044, %v3090
    %v3095 = vadd.f32 %v3045, %v3091
    %v3096 = vadd.f32 %v3046, %v3092
    %v3097 = vld [vmem:[%s2 + $0x30] sm:$0xff]
    %v3098 = vld [vmem:[%s1 + $0x30] sm:$0xff]
    %3100 = vset.pattern.permute.xlu0 0
    %3101 = vperm.xlu0 %3100, %v3098
    %v3102 = vpop.permute.xlu0 %3101
    %v3104 = vmul.f32 %v3102, %v2766
    %v3105 = vmul.f32 %v3102, %v2770
    %v3106 = vmul.f32 %v3102, %v2774
    %v3107 = vmul.f32 %v3102, %v2778
    %3109 = vset.pattern.permute.xlu0 0
    %3110 = vperm.xlu0 %3109, %v3097
    %v3111 = vpop.permute.xlu0 %3110
    %v3113 = vadd.f32 %v3111, %v3104
    %v3114 = vadd.f32 %v3111, %v3105
    %v3115 = vadd.f32 %v3111, %v3106
    %v3116 = vadd.f32 %v3111, %v3107
    %3117 = vset.pattern.permute.xlu0 1
    %3118 = vperm.xlu0 %3117, %v3098
    %v3119 = vpop.permute.xlu0 %3118
    %v3121 = vmul.f32 %v3119, %v2804
    %v3122 = vmul.f32 %v3119, %v2808
    %v3123 = vmul.f32 %v3119, %v2812
    %v3124 = vmul.f32 %v3119, %v2816
    %v3125 = vadd.f32 %v3113, %v3121
    %v3126 = vadd.f32 %v3114, %v3122
    %v3127 = vadd.f32 %v3115, %v3123
    %v3128 = vadd.f32 %v3116, %v3124
    %v3129 = vmax.f32 %v3125, 0.0
    %v3130 = vmax.f32 %v3126, 0.0
    %v3131 = vmax.f32 %v3127, 0.0
    %v3132 = vmax.f32 %v3128, 0.0
    %v3133 = vld [vmem:[%s3 + $0x30] sm:$0xff]
    %3135 = vset.pattern.permute.xlu0 0
    %3136 = vperm.xlu0 %3135, %v3133
    %v3137 = vpop.permute.xlu0 %3136
    %v3139 = vmul.f32 %v3129, %v3137
    %v3140 = vmul.f32 %v3130, %v3137
    %v3141 = vmul.f32 %v3131, %v3137
    %v3142 = vmul.f32 %v3132, %v3137
    %v3143 = vadd.f32 %v3093, %v3139
    %v3144 = vadd.f32 %v3094, %v3140
    %v3145 = vadd.f32 %v3095, %v3141
    %v3146 = vadd.f32 %v3096, %v3142
    %v3147 = vld [vmem:[%s2 + $0x38] sm:$0xff]
    %v3148 = vld [vmem:[%s1 + $0x38] sm:$0xff]
    %3150 = vset.pattern.permute.xlu0 0
    %3151 = vperm.xlu0 %3150, %v3148
    %v3152 = vpop.permute.xlu0 %3151
    %v3154 = vmul.f32 %v3152, %v2766
    %v3155 = vmul.f32 %v3152, %v2770
    %v3156 = vmul.f32 %v3152, %v2774
    %v3157 = vmul.f32 %v3152, %v2778
    %3159 = vset.pattern.permute.xlu0 0
    %3160 = vperm.xlu0 %3159, %v3147
    %v3161 = vpop.permute.xlu0 %3160
    %v3163 = vadd.f32 %v3161, %v3154
    %v3164 = vadd.f32 %v3161, %v3155
    %v3165 = vadd.f32 %v3161, %v3156
    %v3166 = vadd.f32 %v3161, %v3157
    %3167 = vset.pattern.permute.xlu0 1
    %3168 = vperm.xlu0 %3167, %v3148
    %v3169 = vpop.permute.xlu0 %3168
    %v3171 = vmul.f32 %v3169, %v2804
    %v3172 = vmul.f32 %v3169, %v2808
    %v3173 = vmul.f32 %v3169, %v2812
    %v3174 = vmul.f32 %v3169, %v2816
    %v3175 = vadd.f32 %v3163, %v3171
    %v3176 = vadd.f32 %v3164, %v3172
    %v3177 = vadd.f32 %v3165, %v3173
    %v3178 = vadd.f32 %v3166, %v3174
    %v3179 = vmax.f32 %v3175, 0.0
    %v3180 = vmax.f32 %v3176, 0.0
    %v3181 = vmax.f32 %v3177, 0.0
    %v3182 = vmax.f32 %v3178, 0.0
    %v3183 = vld [vmem:[%s3 + $0x38] sm:$0xff]
    %3185 = vset.pattern.permute.xlu0 0
    %3186 = vperm.xlu0 %3185, %v3183
    %v3187 = vpop.permute.xlu0 %3186
    %v3189 = vmul.f32 %v3179, %v3187
    %v3190 = vmul.f32 %v3180, %v3187
    %v3191 = vmul.f32 %v3181, %v3187
    %v3192 = vmul.f32 %v3182, %v3187
    %v3193 = vadd.f32 %v3143, %v3189
    %v3194 = vadd.f32 %v3144, %v3190
    %v3195 = vadd.f32 %v3145, %v3191
    %v3196 = vadd.f32 %v3146, %v3192
    %v3197 = vld [vmem:[%s2 + $0x40] sm:$0xff]
    %v3198 = vld [vmem:[%s1 + $0x40] sm:$0xff]
    %3200 = vset.pattern.permute.xlu0 0
    %3201 = vperm.xlu0 %3200, %v3198
    %v3202 = vpop.permute.xlu0 %3201
    %v3204 = vmul.f32 %v3202, %v2766
    %v3205 = vmul.f32 %v3202, %v2770
    %v3206 = vmul.f32 %v3202, %v2774
    %v3207 = vmul.f32 %v3202, %v2778
    %3209 = vset.pattern.permute.xlu0 0
    %3210 = vperm.xlu0 %3209, %v3197
    %v3211 = vpop.permute.xlu0 %3210
    %v3213 = vadd.f32 %v3211, %v3204
    %v3214 = vadd.f32 %v3211, %v3205
    %v3215 = vadd.f32 %v3211, %v3206
    %v3216 = vadd.f32 %v3211, %v3207
    %3217 = vset.pattern.permute.xlu0 1
    %3218 = vperm.xlu0 %3217, %v3198
    %v3219 = vpop.permute.xlu0 %3218
    %v3221 = vmul.f32 %v3219, %v2804
    %v3222 = vmul.f32 %v3219, %v2808
    %v3223 = vmul.f32 %v3219, %v2812
    %v3224 = vmul.f32 %v3219, %v2816
    %v3225 = vadd.f32 %v3213, %v3221
    %v3226 = vadd.f32 %v3214, %v3222
    %v3227 = vadd.f32 %v3215, %v3223
    %v3228 = vadd.f32 %v3216, %v3224
    %v3229 = vmax.f32 %v3225, 0.0
    %v3230 = vmax.f32 %v3226, 0.0
    %v3231 = vmax.f32 %v3227, 0.0
    %v3232 = vmax.f32 %v3228, 0.0
    %v3233 = vld [vmem:[%s3 + $0x40] sm:$0xff]
    %3235 = vset.pattern.permute.xlu0 0
    %3236 = vperm.xlu0 %3235, %v3233
    %v3237 = vpop.permute.xlu0 %3236
    %v3239 = vmul.f32 %v3229, %v3237
    %v3240 = vmul.f32 %v3230, %v3237
    %v3241 = vmul.f32 %v3231, %v3237
    %v3242 = vmul.f32 %v3232, %v3237
    %v3243 = vadd.f32 %v3193, %v3239
    %v3244 = vadd.f32 %v3194, %v3240
    %v3245 = vadd.f32 %v3195, %v3241
    %v3246 = vadd.f32 %v3196, %v3242
    %v3247 = vld [vmem:[%s2 + $0x48] sm:$0xff]
    %v3248 = vld [vmem:[%s1 + $0x48] sm:$0xff]
    %3250 = vset.pattern.permute.xlu0 0
    %3251 = vperm.xlu0 %3250, %v3248
    %v3252 = vpop.permute.xlu0 %3251
    %v3254 = vmul.f32 %v3252, %v2766
    %v3255 = vmul.f32 %v3252, %v2770
    %v3256 = vmul.f32 %v3252, %v2774
    %v3257 = vmul.f32 %v3252, %v2778
    %3259 = vset.pattern.permute.xlu0 0
    %3260 = vperm.xlu0 %3259, %v3247
    %v3261 = vpop.permute.xlu0 %3260
    %v3263 = vadd.f32 %v3261, %v3254
    %v3264 = vadd.f32 %v3261, %v3255
    %v3265 = vadd.f32 %v3261, %v3256
    %v3266 = vadd.f32 %v3261, %v3257
    %3267 = vset.pattern.permute.xlu0 1
    %3268 = vperm.xlu0 %3267, %v3248
    %v3269 = vpop.permute.xlu0 %3268
    %v3271 = vmul.f32 %v3269, %v2804
    %v3272 = vmul.f32 %v3269, %v2808
    %v3273 = vmul.f32 %v3269, %v2812
    %v3274 = vmul.f32 %v3269, %v2816
    %v3275 = vadd.f32 %v3263, %v3271
    %v3276 = vadd.f32 %v3264, %v3272
    %v3277 = vadd.f32 %v3265, %v3273
    %v3278 = vadd.f32 %v3266, %v3274
    %v3279 = vmax.f32 %v3275, 0.0
    %v3280 = vmax.f32 %v3276, 0.0
    %v3281 = vmax.f32 %v3277, 0.0
    %v3282 = vmax.f32 %v3278, 0.0
    %v3283 = vld [vmem:[%s3 + $0x48] sm:$0xff]
    %3285 = vset.pattern.permute.xlu0 0
    %3286 = vperm.xlu0 %3285, %v3283
    %v3287 = vpop.permute.xlu0 %3286
    %v3289 = vmul.f32 %v3279, %v3287
    %v3290 = vmul.f32 %v3280, %v3287
    %v3291 = vmul.f32 %v3281, %v3287
    %v3292 = vmul.f32 %v3282, %v3287
    %v3293 = vadd.f32 %v3243, %v3289
    %v3294 = vadd.f32 %v3244, %v3290
    %v3295 = vadd.f32 %v3245, %v3291
    %v3296 = vadd.f32 %v3246, %v3292
    %v3297 = vld [vmem:[%s2 + $0x50] sm:$0xff]
    %v3298 = vld [vmem:[%s1 + $0x50] sm:$0xff]
    %3300 = vset.pattern.permute.xlu0 0
    %3301 = vperm.xlu0 %3300, %v3298
    %v3302 = vpop.permute.xlu0 %3301
    %v3304 = vmul.f32 %v3302, %v2766
    %v3305 = vmul.f32 %v3302, %v2770
    %v3306 = vmul.f32 %v3302, %v2774
    %v3307 = vmul.f32 %v3302, %v2778
    %3309 = vset.pattern.permute.xlu0 0
    %3310 = vperm.xlu0 %3309, %v3297
    %v3311 = vpop.permute.xlu0 %3310
    %v3313 = vadd.f32 %v3311, %v3304
    %v3314 = vadd.f32 %v3311, %v3305
    %v3315 = vadd.f32 %v3311, %v3306
    %v3316 = vadd.f32 %v3311, %v3307
    %3317 = vset.pattern.permute.xlu0 1
    %3318 = vperm.xlu0 %3317, %v3298
    %v3319 = vpop.permute.xlu0 %3318
    %v3321 = vmul.f32 %v3319, %v2804
    %v3322 = vmul.f32 %v3319, %v2808
    %v3323 = vmul.f32 %v3319, %v2812
    %v3324 = vmul.f32 %v3319, %v2816
    %v3325 = vadd.f32 %v3313, %v3321
    %v3326 = vadd.f32 %v3314, %v3322
    %v3327 = vadd.f32 %v3315, %v3323
    %v3328 = vadd.f32 %v3316, %v3324
    %v3329 = vmax.f32 %v3325, 0.0
    %v3330 = vmax.f32 %v3326, 0.0
    %v3331 = vmax.f32 %v3327, 0.0
    %v3332 = vmax.f32 %v3328, 0.0
    %v3333 = vld [vmem:[%s3 + $0x50] sm:$0xff]
    %3335 = vset.pattern.permute.xlu0 0
    %3336 = vperm.xlu0 %3335, %v3333
    %v3337 = vpop.permute.xlu0 %3336
    %v3339 = vmul.f32 %v3329, %v3337
    %v3340 = vmul.f32 %v3330, %v3337
    %v3341 = vmul.f32 %v3331, %v3337
    %v3342 = vmul.f32 %v3332, %v3337
    %v3343 = vadd.f32 %v3293, %v3339
    %v3344 = vadd.f32 %v3294, %v3340
    %v3345 = vadd.f32 %v3295, %v3341
    %v3346 = vadd.f32 %v3296, %v3342
    %v3347 = vld [vmem:[%s2 + $0x58] sm:$0xff]
    %v3348 = vld [vmem:[%s1 + $0x58] sm:$0xff]
    %3350 = vset.pattern.permute.xlu0 0
    %3351 = vperm.xlu0 %3350, %v3348
    %v3352 = vpop.permute.xlu0 %3351
    %v3354 = vmul.f32 %v3352, %v2766
    %v3355 = vmul.f32 %v3352, %v2770
    %v3356 = vmul.f32 %v3352, %v2774
    %v3357 = vmul.f32 %v3352, %v2778
    %3359 = vset.pattern.permute.xlu0 0
    %3360 = vperm.xlu0 %3359, %v3347
    %v3361 = vpop.permute.xlu0 %3360
    %v3363 = vadd.f32 %v3361, %v3354
    %v3364 = vadd.f32 %v3361, %v3355
    %v3365 = vadd.f32 %v3361, %v3356
    %v3366 = vadd.f32 %v3361, %v3357
    %3367 = vset.pattern.permute.xlu0 1
    %3368 = vperm.xlu0 %3367, %v3348
    %v3369 = vpop.permute.xlu0 %3368
    %v3371 = vmul.f32 %v3369, %v2804
    %v3372 = vmul.f32 %v3369, %v2808
    %v3373 = vmul.f32 %v3369, %v2812
    %v3374 = vmul.f32 %v3369, %v2816
    %v3375 = vadd.f32 %v3363, %v3371
    %v3376 = vadd.f32 %v3364, %v3372
    %v3377 = vadd.f32 %v3365, %v3373
    %v3378 = vadd.f32 %v3366, %v3374
    %v3379 = vmax.f32 %v3375, 0.0
    %v3380 = vmax.f32 %v3376, 0.0
    %v3381 = vmax.f32 %v3377, 0.0
    %v3382 = vmax.f32 %v3378, 0.0
    %v3383 = vld [vmem:[%s3 + $0x58] sm:$0xff]
    %3385 = vset.pattern.permute.xlu0 0
    %3386 = vperm.xlu0 %3385, %v3383
    %v3387 = vpop.permute.xlu0 %3386
    %v3389 = vmul.f32 %v3379, %v3387
    %v3390 = vmul.f32 %v3380, %v3387
    %v3391 = vmul.f32 %v3381, %v3387
    %v3392 = vmul.f32 %v3382, %v3387
    %v3393 = vadd.f32 %v3343, %v3389
    %v3394 = vadd.f32 %v3344, %v3390
    %v3395 = vadd.f32 %v3345, %v3391
    %v3396 = vadd.f32 %v3346, %v3392
    %v3397 = vld [vmem:[%s2 + $0x60] sm:$0xff]
    %v3398 = vld [vmem:[%s1 + $0x60] sm:$0xff]
    %3400 = vset.pattern.permute.xlu0 0
    %3401 = vperm.xlu0 %3400, %v3398
    %v3402 = vpop.permute.xlu0 %3401
    %v3404 = vmul.f32 %v3402, %v2766
    %v3405 = vmul.f32 %v3402, %v2770
    %v3406 = vmul.f32 %v3402, %v2774
    %v3407 = vmul.f32 %v3402, %v2778
    %3409 = vset.pattern.permute.xlu0 0
    %3410 = vperm.xlu0 %3409, %v3397
    %v3411 = vpop.permute.xlu0 %3410
    %v3413 = vadd.f32 %v3411, %v3404
    %v3414 = vadd.f32 %v3411, %v3405
    %v3415 = vadd.f32 %v3411, %v3406
    %v3416 = vadd.f32 %v3411, %v3407
    %3417 = vset.pattern.permute.xlu0 1
    %3418 = vperm.xlu0 %3417, %v3398
    %v3419 = vpop.permute.xlu0 %3418
    %v3421 = vmul.f32 %v3419, %v2804
    %v3422 = vmul.f32 %v3419, %v2808
    %v3423 = vmul.f32 %v3419, %v2812
    %v3424 = vmul.f32 %v3419, %v2816
    %v3425 = vadd.f32 %v3413, %v3421
    %v3426 = vadd.f32 %v3414, %v3422
    %v3427 = vadd.f32 %v3415, %v3423
    %v3428 = vadd.f32 %v3416, %v3424
    %v3429 = vmax.f32 %v3425, 0.0
    %v3430 = vmax.f32 %v3426, 0.0
    %v3431 = vmax.f32 %v3427, 0.0
    %v3432 = vmax.f32 %v3428, 0.0
    %v3433 = vld [vmem:[%s3 + $0x60] sm:$0xff]
    %3435 = vset.pattern.permute.xlu0 0
    %3436 = vperm.xlu0 %3435, %v3433
    %v3437 = vpop.permute.xlu0 %3436
    %v3439 = vmul.f32 %v3429, %v3437
    %v3440 = vmul.f32 %v3430, %v3437
    %v3441 = vmul.f32 %v3431, %v3437
    %v3442 = vmul.f32 %v3432, %v3437
    %v3443 = vadd.f32 %v3393, %v3439
    %v3444 = vadd.f32 %v3394, %v3440
    %v3445 = vadd.f32 %v3395, %v3441
    %v3446 = vadd.f32 %v3396, %v3442
    %v3447 = vld [vmem:[%s2 + $0x68] sm:$0xff]
    %v3448 = vld [vmem:[%s1 + $0x68] sm:$0xff]
    %3450 = vset.pattern.permute.xlu0 0
    %3451 = vperm.xlu0 %3450, %v3448
    %v3452 = vpop.permute.xlu0 %3451
    %v3454 = vmul.f32 %v3452, %v2766
    %v3455 = vmul.f32 %v3452, %v2770
    %v3456 = vmul.f32 %v3452, %v2774
    %v3457 = vmul.f32 %v3452, %v2778
    %3459 = vset.pattern.permute.xlu0 0
    %3460 = vperm.xlu0 %3459, %v3447
    %v3461 = vpop.permute.xlu0 %3460
    %v3463 = vadd.f32 %v3461, %v3454
    %v3464 = vadd.f32 %v3461, %v3455
    %v3465 = vadd.f32 %v3461, %v3456
    %v3466 = vadd.f32 %v3461, %v3457
    %3467 = vset.pattern.permute.xlu0 1
    %3468 = vperm.xlu0 %3467, %v3448
    %v3469 = vpop.permute.xlu0 %3468
    %v3471 = vmul.f32 %v3469, %v2804
    %v3472 = vmul.f32 %v3469, %v2808
    %v3473 = vmul.f32 %v3469, %v2812
    %v3474 = vmul.f32 %v3469, %v2816
    %v3475 = vadd.f32 %v3463, %v3471
    %v3476 = vadd.f32 %v3464, %v3472
    %v3477 = vadd.f32 %v3465, %v3473
    %v3478 = vadd.f32 %v3466, %v3474
    %v3479 = vmax.f32 %v3475, 0.0
    %v3480 = vmax.f32 %v3476, 0.0
    %v3481 = vmax.f32 %v3477, 0.0
    %v3482 = vmax.f32 %v3478, 0.0
    %v3483 = vld [vmem:[%s3 + $0x68] sm:$0xff]
    %3485 = vset.pattern.permute.xlu0 0
    %3486 = vperm.xlu0 %3485, %v3483
    %v3487 = vpop.permute.xlu0 %3486
    %v3489 = vmul.f32 %v3479, %v3487
    %v3490 = vmul.f32 %v3480, %v3487
    %v3491 = vmul.f32 %v3481, %v3487
    %v3492 = vmul.f32 %v3482, %v3487
    %v3493 = vadd.f32 %v3443, %v3489
    %v3494 = vadd.f32 %v3444, %v3490
    %v3495 = vadd.f32 %v3445, %v3491
    %v3496 = vadd.f32 %v3446, %v3492
    %v3497 = vld [vmem:[%s2 + $0x70] sm:$0xff]
    %v3498 = vld [vmem:[%s1 + $0x70] sm:$0xff]
    %3500 = vset.pattern.permute.xlu0 0
    %3501 = vperm.xlu0 %3500, %v3498
    %v3502 = vpop.permute.xlu0 %3501
    %v3504 = vmul.f32 %v3502, %v2766
    %v3505 = vmul.f32 %v3502, %v2770
    %v3506 = vmul.f32 %v3502, %v2774
    %v3507 = vmul.f32 %v3502, %v2778
    %3509 = vset.pattern.permute.xlu0 0
    %3510 = vperm.xlu0 %3509, %v3497
    %v3511 = vpop.permute.xlu0 %3510
    %v3513 = vadd.f32 %v3511, %v3504
    %v3514 = vadd.f32 %v3511, %v3505
    %v3515 = vadd.f32 %v3511, %v3506
    %v3516 = vadd.f32 %v3511, %v3507
    %3517 = vset.pattern.permute.xlu0 1
    %3518 = vperm.xlu0 %3517, %v3498
    %v3519 = vpop.permute.xlu0 %3518
    %v3521 = vmul.f32 %v3519, %v2804
    %v3522 = vmul.f32 %v3519, %v2808
    %v3523 = vmul.f32 %v3519, %v2812
    %v3524 = vmul.f32 %v3519, %v2816
    %v3525 = vadd.f32 %v3513, %v3521
    %v3526 = vadd.f32 %v3514, %v3522
    %v3527 = vadd.f32 %v3515, %v3523
    %v3528 = vadd.f32 %v3516, %v3524
    %v3529 = vmax.f32 %v3525, 0.0
    %v3530 = vmax.f32 %v3526, 0.0
    %v3531 = vmax.f32 %v3527, 0.0
    %v3532 = vmax.f32 %v3528, 0.0
    %v3533 = vld [vmem:[%s3 + $0x70] sm:$0xff]
    %3535 = vset.pattern.permute.xlu0 0
    %3536 = vperm.xlu0 %3535, %v3533
    %v3537 = vpop.permute.xlu0 %3536
    %v3539 = vmul.f32 %v3529, %v3537
    %v3540 = vmul.f32 %v3530, %v3537
    %v3541 = vmul.f32 %v3531, %v3537
    %v3542 = vmul.f32 %v3532, %v3537
    %v3543 = vadd.f32 %v3493, %v3539
    %v3544 = vadd.f32 %v3494, %v3540
    %v3545 = vadd.f32 %v3495, %v3541
    %v3546 = vadd.f32 %v3496, %v3542
    %v3547 = vld [vmem:[%s2 + $0x78] sm:$0xff]
    %v3548 = vld [vmem:[%s1 + $0x78] sm:$0xff]
    %3550 = vset.pattern.permute.xlu0 0
    %3551 = vperm.xlu0 %3550, %v3548
    %v3552 = vpop.permute.xlu0 %3551
    %v3554 = vmul.f32 %v3552, %v2766
    %v3555 = vmul.f32 %v3552, %v2770
    %v3556 = vmul.f32 %v3552, %v2774
    %v3557 = vmul.f32 %v3552, %v2778
    %3559 = vset.pattern.permute.xlu0 0
    %3560 = vperm.xlu0 %3559, %v3547
    %v3561 = vpop.permute.xlu0 %3560
    %v3563 = vadd.f32 %v3561, %v3554
    %v3564 = vadd.f32 %v3561, %v3555
    %v3565 = vadd.f32 %v3561, %v3556
    %v3566 = vadd.f32 %v3561, %v3557
    %3567 = vset.pattern.permute.xlu0 1
    %3568 = vperm.xlu0 %3567, %v3548
    %v3569 = vpop.permute.xlu0 %3568
    %v3571 = vmul.f32 %v3569, %v2804
    %v3572 = vmul.f32 %v3569, %v2808
    %v3573 = vmul.f32 %v3569, %v2812
    %v3574 = vmul.f32 %v3569, %v2816
    %v3575 = vadd.f32 %v3563, %v3571
    %v3576 = vadd.f32 %v3564, %v3572
    %v3577 = vadd.f32 %v3565, %v3573
    %v3578 = vadd.f32 %v3566, %v3574
    %v3579 = vmax.f32 %v3575, 0.0
    %v3580 = vmax.f32 %v3576, 0.0
    %v3581 = vmax.f32 %v3577, 0.0
    %v3582 = vmax.f32 %v3578, 0.0
    %v3583 = vld [vmem:[%s3 + $0x78] sm:$0xff]
    %3585 = vset.pattern.permute.xlu0 0
    %3586 = vperm.xlu0 %3585, %v3583
    %v3587 = vpop.permute.xlu0 %3586
    %v3589 = vmul.f32 %v3579, %v3587
    %v3590 = vmul.f32 %v3580, %v3587
    %v3591 = vmul.f32 %v3581, %v3587
    %v3592 = vmul.f32 %v3582, %v3587
    %v3593 = vadd.f32 %v3543, %v3589
    %v3594 = vadd.f32 %v3544, %v3590
    %v3595 = vadd.f32 %v3545, %v3591
    %v3596 = vadd.f32 %v3546, %v3592
    %v3597 = vrot.slane %v3593, 4
    %v3598 = vadd.f32 %v3593, %v3597
    %v3599 = vrot.slane %v3598, 2
    %v3600 = vadd.f32 %v3598, %v3599
    %v3601 = vrot.slane %v3600, 1
    %v3602 = vadd.f32 %v3600, %v3601
    %v3603 = vrot.slane %v3594, 4
    %v3604 = vadd.f32 %v3594, %v3603
    %v3605 = vrot.slane %v3604, 2
    %v3606 = vadd.f32 %v3604, %v3605
    %v3607 = vrot.slane %v3606, 1
    %v3608 = vadd.f32 %v3606, %v3607
    %v3609 = vrot.slane %v3595, 4
    %v3610 = vadd.f32 %v3595, %v3609
    %v3611 = vrot.slane %v3610, 2
    %v3612 = vadd.f32 %v3610, %v3611
    %v3613 = vrot.slane %v3612, 1
    %v3614 = vadd.f32 %v3612, %v3613
    %v3615 = vrot.slane %v3596, 4
    %v3616 = vadd.f32 %v3596, %v3615
    %v3617 = vrot.slane %v3616, 2
    %v3618 = vadd.f32 %v3616, %v3617
    %v3619 = vrot.slane %v3618, 1
    %v3620 = vadd.f32 %v3618, %v3619
    %v3621 = vadd.f32 %v3602, %v892
    %v3622 = vadd.f32 %v3608, %v892
    %v3623 = vadd.f32 %v3614, %v892
    %v3624 = vadd.f32 %v3620, %v892
    %v3625 = vtanh.pop %v3621
    %v3626 = vtanh.pop %v3622
    %v3627 = vtanh.pop %v3623
    %v3628 = vtanh.pop %v3624
    %v3633 = vcombine.low %v3625, %v3626
    %v3634 = vcombine.low %v3627, %v3628
    %v3636 = vunpack.c.l.s4 1966171168
    %v3637 = vunpack.c.0.s8 %v3636
    %v3638 = vlaneseq
    %v3639 = vshrl.u32 %v3638, 7
    %v3640 = vsub.s32 %v3637, %v3639
    %v3641 = vrot.slane %v3633, %v3640
    %v3643 = vunpack.c.l.s4 1966171168
    %v3644 = vunpack.c.0.s8 %v3643
    %v3645 = vlaneseq
    %v3646 = vshrl.u32 %v3645, 7
    %v3647 = vsub.s32 %v3644, %v3646
    %v3648 = vrot.slane %v3634, %v3647
    %v3649 = vcombine.low %v3641, %v3648
    %v3651 = vunpack.c.l.s4 1966171168
    %v3652 = vunpack.c.0.s8 %v3651
    %v3653 = vlaneseq
    %v3654 = vshrl.u32 %v3653, 7
    %v3655 = vsub.s32 %v3652, %v3654
    %v3656 = vrot.slane %v3649, %v3655
    %3658 = vst.msk [vmem:[#allocation3 + $0xc] sm:$0xf] %vm933, %v3656
    // Predicated region
    $region22: #{sequential_forward.1} parent=1 // pred_check
      _
    $region23: #{sequential_forward.1} parent=1 // pred_check_branch
      %3660 = sbr.rel (0) target = $region25
    $region24: #{sequential_forward.1} parent=1 // pred_region
      %s3662 = ssub.s32 256, 256
      %3663 = vsyncadd [#allocation4], %s3662
      %s3665 = sshll.u32 [#allocation3], 4
      %s3666 = int_to_ptr.vmem [resolvable:$true] %s3665
      %3668 = dma.vmem_to_hbm [thread:$0]  %s3666, 256, %s5, [#allocation4]
    $region25: #{sequential_forward.1} parent=1 // pred_fallthru
      _
    // Predicated region
    $region26: #{sequential_forward.1} parent=1 // pred_check
      _
    $region27: #{sequential_forward.1} parent=1 // pred_check_branch
      %3670 = sbr.rel (0) target = $region29
    $region28: #{sequential_forward.1} parent=1 // pred_region
      %3671 = dma.done [#allocation4], 256
    $region29: #{sequential_forward.1} parent=1 // pred_fallthru
      _
    %3672 = vsyncpa [#allocation4], 1

</llo_original>
